<compile_context>
chip_gen: v6e
topology: v6e:2x2x1
jax: 0.10.0
libtpu: 0.0.40
codegen_flags: <defaults>
</compile_context>

<pallas_src>
import jax
import jax.numpy as jnp
from jax import lax
from jax.experimental import pallas as pl
from jax.experimental.pallas import tpu as pltpu


# ----------------------------- Encoder kernel -------------------------------


def _encoder_kernel(x_ref, w_ref, b_ref, o_ref, conv_ref):
    """Conv2d(3->1, k=3, pad=1) + MaxPool2d(4,4) + bias/ReLU + 4x lane repeat.

    x_ref:    (1, 3, H, W)  VMEM  one batch element (NCHW, native dtype)
    w_ref:    (27,)         SMEM  conv weight flattened as (in_ch, ki, kj)
    b_ref:    (1,)          SMEM  conv bias
    o_ref:    (1, H//4, W)  VMEM  z_rep[i, 4j+kj] = pooled[i, j]
    conv_ref: (H, W)        VMEM  scratch, pre-pool conv output
    """
    _, _, H, W = x_ref.shape
    h = H // 4
    f32 = jnp.float32

    # --- 3x3 conv as a separable shift-accumulate ---------------------------
    # Column partials r[di][i, j] = sum_{ch,dj} x[ch, i, j+dj-1] * w[ch,di,dj]
    r = [jnp.zeros((H, W), f32) for _ in range(3)]
    for ch in range(3):
        xc = x_ref[0, ch].astype(f32)                       # cast on load
        # x[:, j-1] / x[:, j+1] with zero padding; built once per channel and
        # shared by all three row taps (6 shifted temps total).
        xm = jnp.concatenate([jnp.zeros((H, 1), f32), xc[:, : W - 1]], axis=1)
        xp = jnp.concatenate([xc[:, 1:], jnp.zeros((H, 1), f32)], axis=1)
        for di in range(3):
            r[di] = (r[di]
                     + xm * w_ref[ch * 9 + di * 3 + 0]
                     + xc * w_ref[ch * 9 + di * 3 + 1]
                     + xp * w_ref[ch * 9 + di * 3 + 2])

    # Row taps applied once to the partials (2 shifted temps):
    #   conv[i] = r0[i-1] + r1[i] + r2[i+1]   (zero padded)
    conv = (r[1]
            + jnp.concatenate([jnp.zeros((1, W), f32), r[0][: H - 1, :]], axis=0)
            + jnp.concatenate([r[2][1:, :], jnp.zeros((1, W), f32)], axis=0))
    conv_ref[...] = conv

    # --- MaxPool2d(4,4), row direction: 4 stride-4 sublane loads + 3 maxima -
    p0 = conv_ref[pl.ds(0, h, stride=4), :]
    p1 = conv_ref[pl.ds(1, h, stride=4), :]
    p2 = conv_ref[pl.ds(2, h, stride=4), :]
    p3 = conv_ref[pl.ds(3, h, stride=4), :]
    rp = jnp.maximum(jnp.maximum(p0, p1), jnp.maximum(p2, p3))    # (h, W)

    # --- MaxPool lane direction fused with the 4x lane repeat ---------------
    # Butterfly max inside each lane group of 4: after two steps every lane of
    # a group holds the group max, which is exactly the z_rep layout the
    # decoder consumes (no standalone pool / repeat ops, no extra HBM trips).
    lane = lax.broadcasted_iota(jnp.int32, (h, W), 1)
    nxt = jnp.concatenate([rp[:, 1:], jnp.zeros((h, 1), f32)], axis=1)        # x[l+1]
    prv = jnp.concatenate([jnp.zeros((h, 1), f32), rp[:, : W - 1]], axis=1)   # x[l-1]
    pair = jnp.maximum(rp, jnp.where((lane & 1) == 0, nxt, prv))
    nxt2 = jnp.concatenate([pair[:, 2:], jnp.zeros((h, 2), f32)], axis=1)     # p[l+2]
    prv2 = jnp.concatenate([jnp.zeros((h, 2), f32), pair[:, : W - 2]], axis=1)  # p[l-2]
    gmax = jnp.maximum(pair, jnp.where((lane & 3) < 2, nxt2, prv2))

    # Bias + ReLU commuted past the monotone max-pool (applied on (h, W) only).
    o_ref[0] = jnp.maximum(gmax + b_ref[0], 0.0)


def _encoder_forward(x, conv_w, conv_b):
    """x: (N, 3, H, W) -> z_rep: (N, H//4, W), z_rep[n,i,4j+kj] = pooled[n,i,j]."""
    N, C, H, W = x.shape
    assert C == 3 and H % 4 == 0 and W % 4 == 0
    h = H // 4

    w_flat = conv_w.reshape(27).astype(jnp.float32)          # (1,3,3,3) -> (27,)
    b_flat = conv_b.reshape(1).astype(jnp.float32)

    return pl.pallas_call(
        _encoder_kernel,
        out_shape=jax.ShapeDtypeStruct((N, h, W), jnp.float32),
        grid=(N,),
        in_specs=[
            pl.BlockSpec((1, 3, H, W), lambda n: (n, 0, 0, 0)),
            pl.BlockSpec(memory_space=pltpu.MemorySpace.SMEM),
            pl.BlockSpec(memory_space=pltpu.MemorySpace.SMEM),
        ],
        out_specs=pl.BlockSpec((1, h, W), lambda n: (n, 0, 0)),
        scratch_shapes=[pltpu.VMEM((H, W), jnp.float32)],
        compiler_params=pltpu.CompilerParams(
            dimension_semantics=("parallel",)),
    )(x, w_flat, b_flat)                                     # native-dtype input


# ----------------------------- Decoder kernel -------------------------------


def _decoder_kernel(z_ref, w_ref, b_ref, o_ref):
    """ConvTranspose2d(1->3, k=4, stride=4) + ReLU + sigmoid, stripe stores.

    z_ref: (1, ti, W)        lane-replicated pooled rows: z[i, 4j+kj] = pooled[i, j]
    w_ref: (12, W)    VMEM   w[4*co+ki, 4j+kj] = Wt[0, co, ki, kj]
    b_ref: (3,)       SMEM   bias
    o_ref: (1, 3, ti, 4W)    byte-identical to NCHW rows 4*i0 .. 4*(i0+ti)-1
    """
    z = z_ref[0]                                             # (ti, W)
    W = z.shape[-1]
    for co in range(3):
        b = b_ref[co]
        for ki in range(4):
            # No (ti, 4W) concat copy: compute and store lane-aligned stripes.
            y = jnp.maximum(z * w_ref[4 * co + ki, :] + b, 0.0)
            # sigmoid(y) with a single EUP op: 0.5 * (1 + tanh(y / 2)).
            s = 0.5 + 0.5 * jnp.tanh(0.5 * y)
            o_ref[0, co, :, ki * W:(ki + 1) * W] = s.astype(o_ref.dtype)


def _pick_row_tile(h, W, target_bytes=4 * 1024 * 1024):
    """Largest row tile (multiple of 8 dividing h) whose f32 output block
    (3, ti, 4W) stays under ~4 MB: double-buffered it fits every generation's
    scoped-VMEM default while amortizing the per-step grid overhead."""
    if h % 8 != 0:
        return h
    best = 8
    for ti in range(8, h + 1, 8):
        if h % ti == 0 and 3 * ti * 4 * W * 4 <= target_bytes:
            best = ti
    return best


def _decoder_forward(z_rep, tconv_w, tconv_b, out_dtype=jnp.float32):
    """z_rep: (N, h, W) -> (N, 3, 4h, W) NCHW.

    The decoder is HBM-store-bound on every generation; pass
    out_dtype=jnp.bfloat16 (math stays f32, cast only on store) to halve the
    dominant write stream when the consumer tolerates it (largest relative
    win on v5e, also ~2x on v6e/v7x)."""
    N, h, W = z_rep.shape
    w = W // 4
    H = 4 * h
    ti = _pick_row_tile(h, W)

    # w_flat[4*co + ki, 4j + kj] = Wt[0, co, ki, kj]
    w_flat = jnp.tile(tconv_w[0].astype(jnp.float32), (1, 1, w)).reshape(12, W)
    b = tconv_b.astype(jnp.float32).reshape(3)

    out5 = pl.pallas_call(
        _decoder_kernel,
        out_shape=jax.ShapeDtypeStruct((N, 3, h, 4 * W), out_dtype),
        grid=(N, h // ti),
        in_specs=[
            pl.BlockSpec((1, ti, W), lambda n, t: (n, t, 0)),
            pl.BlockSpec((12, W), lambda n, t: (0, 0)),
            pl.BlockSpec(memory_space=pltpu.MemorySpace.SMEM),
        ],
        out_specs=pl.BlockSpec((1, 3, ti, 4 * W), lambda n, t: (n, 0, t, 0)),
        compiler_params=pltpu.CompilerParams(
            dimension_semantics=("parallel", "parallel"),
            vmem_limit_bytes=32 * 1024 * 1024),
    )(z_rep, w_flat, b)

    # Free reshape: (N, 3, h, 4W) and (N, 3, 4h, W) share identical row-major
    # bytes, so this is a metadata-only change (no HBM restream).
    return out5.reshape(N, 3, H, W)


def cae_forward(x, conv_w, conv_b, tconv_w, tconv_b, out_dtype=jnp.float32):
    z_rep = _encoder_forward(x, conv_w, conv_b)
    return _decoder_forward(z_rep, tconv_w, tconv_b, out_dtype=out_dtype)


# ----------------------------- Pure-JAX reference ---------------------------


def _reference_cae(x, conv_w, conv_b, tconv_w, tconv_b):
    N, _, H, W = x.shape
    h, w = H // 4, W // 4
    y = lax.conv_general_dilated(
        x, conv_w, window_strides=(1, 1), padding=((1, 1), (1, 1)),
        dimension_numbers=("NCHW", "OIHW", "NCHW"),
        precision=lax.Precision.HIGHEST)
    y = jnp.maximum(y + conv_b.reshape(1, 1, 1, 1), 0.0)
    y = y.reshape(N, 1, h, 4, w, 4).max(axis=(3, 5))         # MaxPool2d(4, 4)
    z = jnp.einsum("nij,ckl->ncikjl", y[:, 0], tconv_w[0],
                   precision=lax.Precision.HIGHEST)
    z = z + tconv_b[None, :, None, None, None, None]
    z = z.reshape(N, 3, H, W)
    return jax.nn.sigmoid(jnp.maximum(z, 0.0))


if __name__ == "__main__":
    key = jax.random.PRNGKey(0)
    kx, k1, k2, k3, k4 = jax.random.split(key, 5)

    # Small, lane-friendly example: spatial dims divisible by 4 (pool/stride)
    # and a multiple of 128 so all blocks are fully lane-dense.
    N, H, W = 2, 128, 128
    x = jax.random.normal(kx, (N, 3, H, W), dtype=jnp.float32)

    # Parameters matching Conv2d(3, 1, 3, padding=1) and
    # ConvTranspose2d(1, 3, 4, stride=4).
    conv_w = 0.2 * jax.random.normal(k1, (1, 3, 3, 3), dtype=jnp.float32)
    conv_b = 0.1 * jax.random.normal(k2, (1,), dtype=jnp.float32)
    tconv_w = 0.2 * jax.random.normal(k3, (1, 3, 4, 4), dtype=jnp.float32)
    tconv_b = 0.1 * jax.random.normal(k4, (3,), dtype=jnp.float32)

    fwd = jax.jit(cae_forward)
    out = jax.block_until_ready(fwd(x, conv_w, conv_b, tconv_w, tconv_b))

    ref = _reference_cae(x, conv_w, conv_b, tconv_w, tconv_b)
    assert out.shape == (N, 3, H, W)
    assert out.dtype == jnp.float32
    max_err = float(jnp.max(jnp.abs(out - ref)))
    assert max_err < 1e-4, f"max abs err {max_err}"

    print("KERNEL_OK")
</pallas_src>

<mosaic_0001>
module attributes {stable_mosaic.version = 11 : i64} {
  func.func @_decoder_kernel(%arg0: i32, %arg1: i32, %arg2: memref<1x32x128xf32, #tpu.memory_space<vmem>>, %arg3: memref<12x128xf32, #tpu.memory_space<vmem>>, %arg4: memref<3xf32, #tpu.memory_space<smem>>, %arg5: memref<1x3x32x512xf32, #tpu.memory_space<vmem>>) attributes {dimension_semantics = [#tpu.dimension_semantics<parallel>, #tpu.dimension_semantics<parallel>], iteration_bounds = array<i64: 2, 1>, scalar_prefetch = 0 : i64, scratch_operands = 0 : i64, tpu.core_type = #tpu.core_type<tc>, window_params = [{transform_indices = @transform_0, window_bounds = array<i64: 1, 32, 128>}, {pipeline_mode = #tpu.pipeline_mode<synchronous>, transform_indices = @transform_1, window_bounds = array<i64: 12, 128>}, {transform_indices = @transform_2, window_bounds = array<i64: 3>}, {transform_indices = @transform_3, window_bounds = array<i64: 1, 3, 32, 512>}]} {
    %c0 = arith.constant 0 : index
    %c0_0 = arith.constant 0 : index
    %c0_1 = arith.constant 0 : index
    %0 = vector.load %arg2[%c0, %c0_0, %c0_1] : memref<1x32x128xf32, #tpu.memory_space<vmem>>, vector<1x32x128xf32>
    %1 = vector.shape_cast %0 : vector<1x32x128xf32> to vector<32x128xf32>
    %c0_2 = arith.constant 0 : index
    %2 = memref.load %arg4[%c0_2] : memref<3xf32, #tpu.memory_space<smem>>
    %c0_3 = arith.constant 0 : index
    %c0_4 = arith.constant 0 : index
    %3 = vector.load %arg3[%c0_3, %c0_4] : memref<12x128xf32, #tpu.memory_space<vmem>>, vector<1x128xf32>
    %4 = vector.shape_cast %3 : vector<1x128xf32> to vector<128xf32>
    %5 = vector.shape_cast %4 : vector<128xf32> to vector<1x128xf32>
    %6 = vector.broadcast %5 : vector<1x128xf32> to vector<32x128xf32>
    %7 = arith.mulf %1, %6 : vector<32x128xf32>
    %8 = vector.broadcast %2 : f32 to vector<32x128xf32>
    %9 = arith.addf %7, %8 : vector<32x128xf32>
    %cst = arith.constant 0.000000e+00 : f32
    %10 = vector.broadcast %cst : f32 to vector<32x128xf32>
    %11 = arith.maximumf %9, %10 : vector<32x128xf32>
    %cst_5 = arith.constant 5.000000e-01 : f32
    %12 = vector.broadcast %cst_5 : f32 to vector<32x128xf32>
    %13 = arith.mulf %12, %11 : vector<32x128xf32>
    %14 = math.tanh %13 : vector<32x128xf32>
    %cst_6 = arith.constant 5.000000e-01 : f32
    %15 = vector.broadcast %cst_6 : f32 to vector<32x128xf32>
    %16 = arith.mulf %15, %14 : vector<32x128xf32>
    %cst_7 = arith.constant 5.000000e-01 : f32
    %17 = vector.broadcast %cst_7 : f32 to vector<32x128xf32>
    %18 = arith.addf %17, %16 : vector<32x128xf32>
    %c0_8 = arith.constant 0 : index
    %c0_9 = arith.constant 0 : index
    %c0_10 = arith.constant 0 : index
    %c0_11 = arith.constant 0 : index
    %19 = vector.load %arg5[%c0_8, %c0_9, %c0_10, %c0_11] : memref<1x3x32x512xf32, #tpu.memory_space<vmem>>, vector<1x1x32x128xf32>
    %20 = vector.shape_cast %19 : vector<1x1x32x128xf32> to vector<32x128xf32>
    %21 = vector.shape_cast %18 : vector<32x128xf32> to vector<1x1x32x128xf32>
    tpu.vector_store %arg5[%c0_8, %c0_9, %c0_10, %c0_11], %21 {strides = array<i32>} : memref<1x3x32x512xf32, #tpu.memory_space<vmem>>, vector<1x1x32x128xf32>,
    %c1 = arith.constant 1 : index
    %c0_12 = arith.constant 0 : index
    %22 = vector.load %arg3[%c1, %c0_12] : memref<12x128xf32, #tpu.memory_space<vmem>>, vector<1x128xf32>
    %23 = vector.shape_cast %22 : vector<1x128xf32> to vector<128xf32>
    %24 = vector.shape_cast %23 : vector<128xf32> to vector<1x128xf32>
    %25 = vector.broadcast %24 : vector<1x128xf32> to vector<32x128xf32>
    %26 = arith.mulf %1, %25 : vector<32x128xf32>
    %27 = vector.broadcast %2 : f32 to vector<32x128xf32>
    %28 = arith.addf %26, %27 : vector<32x128xf32>
    %cst_13 = arith.constant 0.000000e+00 : f32
    %29 = vector.broadcast %cst_13 : f32 to vector<32x128xf32>
    %30 = arith.maximumf %28, %29 : vector<32x128xf32>
    %cst_14 = arith.constant 5.000000e-01 : f32
    %31 = vector.broadcast %cst_14 : f32 to vector<32x128xf32>
    %32 = arith.mulf %31, %30 : vector<32x128xf32>
    %33 = math.tanh %32 : vector<32x128xf32>
    %cst_15 = arith.constant 5.000000e-01 : f32
    %34 = vector.broadcast %cst_15 : f32 to vector<32x128xf32>
    %35 = arith.mulf %34, %33 : vector<32x128xf32>
    %cst_16 = arith.constant 5.000000e-01 : f32
    %36 = vector.broadcast %cst_16 : f32 to vector<32x128xf32>
    %37 = arith.addf %36, %35 : vector<32x128xf32>
    %c0_17 = arith.constant 0 : index
    %c0_18 = arith.constant 0 : index
    %c0_19 = arith.constant 0 : index
    %c128 = arith.constant 128 : index
    %38 = vector.load %arg5[%c0_17, %c0_18, %c0_19, %c128] : memref<1x3x32x512xf32, #tpu.memory_space<vmem>>, vector<1x1x32x128xf32>
    %39 = vector.shape_cast %38 : vector<1x1x32x128xf32> to vector<32x128xf32>
    %40 = vector.shape_cast %37 : vector<32x128xf32> to vector<1x1x32x128xf32>
    tpu.vector_store %arg5[%c0_17, %c0_18, %c0_19, %c128], %40 {strides = array<i32>} : memref<1x3x32x512xf32, #tpu.memory_space<vmem>>, vector<1x1x32x128xf32>,
    %c2 = arith.constant 2 : index
    %c0_20 = arith.constant 0 : index
    %41 = vector.load %arg3[%c2, %c0_20] : memref<12x128xf32, #tpu.memory_space<vmem>>, vector<1x128xf32>
    %42 = vector.shape_cast %41 : vector<1x128xf32> to vector<128xf32>
    %43 = vector.shape_cast %42 : vector<128xf32> to vector<1x128xf32>
    %44 = vector.broadcast %43 : vector<1x128xf32> to vector<32x128xf32>
    %45 = arith.mulf %1, %44 : vector<32x128xf32>
    %46 = vector.broadcast %2 : f32 to vector<32x128xf32>
    %47 = arith.addf %45, %46 : vector<32x128xf32>
    %cst_21 = arith.constant 0.000000e+00 : f32
    %48 = vector.broadcast %cst_21 : f32 to vector<32x128xf32>
    %49 = arith.maximumf %47, %48 : vector<32x128xf32>
    %cst_22 = arith.constant 5.000000e-01 : f32
    %50 = vector.broadcast %cst_22 : f32 to vector<32x128xf32>
    %51 = arith.mulf %50, %49 : vector<32x128xf32>
    %52 = math.tanh %51 : vector<32x128xf32>
    %cst_23 = arith.constant 5.000000e-01 : f32
    %53 = vector.broadcast %cst_23 : f32 to vector<32x128xf32>
    %54 = arith.mulf %53, %52 : vector<32x128xf32>
    %cst_24 = arith.constant 5.000000e-01 : f32
    %55 = vector.broadcast %cst_24 : f32 to vector<32x128xf32>
    %56 = arith.addf %55, %54 : vector<32x128xf32>
    %c0_25 = arith.constant 0 : index
    %c0_26 = arith.constant 0 : index
    %c0_27 = arith.constant 0 : index
    %c256 = arith.constant 256 : index
    %57 = vector.load %arg5[%c0_25, %c0_26, %c0_27, %c256] : memref<1x3x32x512xf32, #tpu.memory_space<vmem>>, vector<1x1x32x128xf32>
    %58 = vector.shape_cast %57 : vector<1x1x32x128xf32> to vector<32x128xf32>
    %59 = vector.shape_cast %56 : vector<32x128xf32> to vector<1x1x32x128xf32>
    tpu.vector_store %arg5[%c0_25, %c0_26, %c0_27, %c256], %59 {strides = array<i32>} : memref<1x3x32x512xf32, #tpu.memory_space<vmem>>, vector<1x1x32x128xf32>,
    %c3 = arith.constant 3 : index
    %c0_28 = arith.constant 0 : index
    %60 = vector.load %arg3[%c3, %c0_28] : memref<12x128xf32, #tpu.memory_space<vmem>>, vector<1x128xf32>
    %61 = vector.shape_cast %60 : vector<1x128xf32> to vector<128xf32>
    %62 = vector.shape_cast %61 : vector<128xf32> to vector<1x128xf32>
    %63 = vector.broadcast %62 : vector<1x128xf32> to vector<32x128xf32>
    %64 = arith.mulf %1, %63 : vector<32x128xf32>
    %65 = vector.broadcast %2 : f32 to vector<32x128xf32>
    %66 = arith.addf %64, %65 : vector<32x128xf32>
    %cst_29 = arith.constant 0.000000e+00 : f32
    %67 = vector.broadcast %cst_29 : f32 to vector<32x128xf32>
    %68 = arith.maximumf %66, %67 : vector<32x128xf32>
    %cst_30 = arith.constant 5.000000e-01 : f32
    %69 = vector.broadcast %cst_30 : f32 to vector<32x128xf32>
    %70 = arith.mulf %69, %68 : vector<32x128xf32>
    %71 = math.tanh %70 : vector<32x128xf32>
    %cst_31 = arith.constant 5.000000e-01 : f32
    %72 = vector.broadcast %cst_31 : f32 to vector<32x128xf32>
    %73 = arith.mulf %72, %71 : vector<32x128xf32>
    %cst_32 = arith.constant 5.000000e-01 : f32
    %74 = vector.broadcast %cst_32 : f32 to vector<32x128xf32>
    %75 = arith.addf %74, %73 : vector<32x128xf32>
    %c0_33 = arith.constant 0 : index
    %c0_34 = arith.constant 0 : index
    %c0_35 = arith.constant 0 : index
    %c384 = arith.constant 384 : index
    %76 = vector.load %arg5[%c0_33, %c0_34, %c0_35, %c384] : memref<1x3x32x512xf32, #tpu.memory_space<vmem>>, vector<1x1x32x128xf32>
    %77 = vector.shape_cast %76 : vector<1x1x32x128xf32> to vector<32x128xf32>
    %78 = vector.shape_cast %75 : vector<32x128xf32> to vector<1x1x32x128xf32>
    tpu.vector_store %arg5[%c0_33, %c0_34, %c0_35, %c384], %78 {strides = array<i32>} : memref<1x3x32x512xf32, #tpu.memory_space<vmem>>, vector<1x1x32x128xf32>,
    %c1_36 = arith.constant 1 : index
    %79 = memref.load %arg4[%c1_36] : memref<3xf32, #tpu.memory_space<smem>>
    %c4 = arith.constant 4 : index
    %c0_37 = arith.constant 0 : index
    %80 = vector.load %arg3[%c4, %c0_37] : memref<12x128xf32, #tpu.memory_space<vmem>>, vector<1x128xf32>
    %81 = vector.shape_cast %80 : vector<1x128xf32> to vector<128xf32>
    %82 = vector.shape_cast %81 : vector<128xf32> to vector<1x128xf32>
    %83 = vector.broadcast %82 : vector<1x128xf32> to vector<32x128xf32>
    %84 = arith.mulf %1, %83 : vector<32x128xf32>
    %85 = vector.broadcast %79 : f32 to vector<32x128xf32>
    %86 = arith.addf %84, %85 : vector<32x128xf32>
    %cst_38 = arith.constant 0.000000e+00 : f32
    %87 = vector.broadcast %cst_38 : f32 to vector<32x128xf32>
    %88 = arith.maximumf %86, %87 : vector<32x128xf32>
    %cst_39 = arith.constant 5.000000e-01 : f32
    %89 = vector.broadcast %cst_39 : f32 to vector<32x128xf32>
    %90 = arith.mulf %89, %88 : vector<32x128xf32>
    %91 = math.tanh %90 : vector<32x128xf32>
    %cst_40 = arith.constant 5.000000e-01 : f32
    %92 = vector.broadcast %cst_40 : f32 to vector<32x128xf32>
    %93 = arith.mulf %92, %91 : vector<32x128xf32>
    %cst_41 = arith.constant 5.000000e-01 : f32
    %94 = vector.broadcast %cst_41 : f32 to vector<32x128xf32>
    %95 = arith.addf %94, %93 : vector<32x128xf32>
    %c0_42 = arith.constant 0 : index
    %c1_43 = arith.constant 1 : index
    %c0_44 = arith.constant 0 : index
    %c0_45 = arith.constant 0 : index
    %96 = vector.load %arg5[%c0_42, %c1_43, %c0_44, %c0_45] : memref<1x3x32x512xf32, #tpu.memory_space<vmem>>, vector<1x1x32x128xf32>
    %97 = vector.shape_cast %96 : vector<1x1x32x128xf32> to vector<32x128xf32>
    %98 = vector.shape_cast %95 : vector<32x128xf32> to vector<1x1x32x128xf32>
    tpu.vector_store %arg5[%c0_42, %c1_43, %c0_44, %c0_45], %98 {strides = array<i32>} : memref<1x3x32x512xf32, #tpu.memory_space<vmem>>, vector<1x1x32x128xf32>,
    %c5 = arith.constant 5 : index
    %c0_46 = arith.constant 0 : index
    %99 = vector.load %arg3[%c5, %c0_46] : memref<12x128xf32, #tpu.memory_space<vmem>>, vector<1x128xf32>
    %100 = vector.shape_cast %99 : vector<1x128xf32> to vector<128xf32>
    %101 = vector.shape_cast %100 : vector<128xf32> to vector<1x128xf32>
    %102 = vector.broadcast %101 : vector<1x128xf32> to vector<32x128xf32>
    %103 = arith.mulf %1, %102 : vector<32x128xf32>
    %104 = vector.broadcast %79 : f32 to vector<32x128xf32>
    %105 = arith.addf %103, %104 : vector<32x128xf32>
    %cst_47 = arith.constant 0.000000e+00 : f32
    %106 = vector.broadcast %cst_47 : f32 to vector<32x128xf32>
    %107 = arith.maximumf %105, %106 : vector<32x128xf32>
    %cst_48 = arith.constant 5.000000e-01 : f32
    %108 = vector.broadcast %cst_48 : f32 to vector<32x128xf32>
    %109 = arith.mulf %108, %107 : vector<32x128xf32>
    %110 = math.tanh %109 : vector<32x128xf32>
    %cst_49 = arith.constant 5.000000e-01 : f32
    %111 = vector.broadcast %cst_49 : f32 to vector<32x128xf32>
    %112 = arith.mulf %111, %110 : vector<32x128xf32>
    %cst_50 = arith.constant 5.000000e-01 : f32
    %113 = vector.broadcast %cst_50 : f32 to vector<32x128xf32>
    %114 = arith.addf %113, %112 : vector<32x128xf32>
    %c0_51 = arith.constant 0 : index
    %c1_52 = arith.constant 1 : index
    %c0_53 = arith.constant 0 : index
    %c128_54 = arith.constant 128 : index
    %115 = vector.load %arg5[%c0_51, %c1_52, %c0_53, %c128_54] : memref<1x3x32x512xf32, #tpu.memory_space<vmem>>, vector<1x1x32x128xf32>
    %116 = vector.shape_cast %115 : vector<1x1x32x128xf32> to vector<32x128xf32>
    %117 = vector.shape_cast %114 : vector<32x128xf32> to vector<1x1x32x128xf32>
    tpu.vector_store %arg5[%c0_51, %c1_52, %c0_53, %c128_54], %117 {strides = array<i32>} : memref<1x3x32x512xf32, #tpu.memory_space<vmem>>, vector<1x1x32x128xf32>,
    %c6 = arith.constant 6 : index
    %c0_55 = arith.constant 0 : index
    %118 = vector.load %arg3[%c6, %c0_55] : memref<12x128xf32, #tpu.memory_space<vmem>>, vector<1x128xf32>
    %119 = vector.shape_cast %118 : vector<1x128xf32> to vector<128xf32>
    %120 = vector.shape_cast %119 : vector<128xf32> to vector<1x128xf32>
    %121 = vector.broadcast %120 : vector<1x128xf32> to vector<32x128xf32>
    %122 = arith.mulf %1, %121 : vector<32x128xf32>
    %123 = vector.broadcast %79 : f32 to vector<32x128xf32>
    %124 = arith.addf %122, %123 : vector<32x128xf32>
    %cst_56 = arith.constant 0.000000e+00 : f32
    %125 = vector.broadcast %cst_56 : f32 to vector<32x128xf32>
    %126 = arith.maximumf %124, %125 : vector<32x128xf32>
    %cst_57 = arith.constant 5.000000e-01 : f32
    %127 = vector.broadcast %cst_57 : f32 to vector<32x128xf32>
    %128 = arith.mulf %127, %126 : vector<32x128xf32>
    %129 = math.tanh %128 : vector<32x128xf32>
    %cst_58 = arith.constant 5.000000e-01 : f32
    %130 = vector.broadcast %cst_58 : f32 to vector<32x128xf32>
    %131 = arith.mulf %130, %129 : vector<32x128xf32>
    %cst_59 = arith.constant 5.000000e-01 : f32
    %132 = vector.broadcast %cst_59 : f32 to vector<32x128xf32>
    %133 = arith.addf %132, %131 : vector<32x128xf32>
    %c0_60 = arith.constant 0 : index
    %c1_61 = arith.constant 1 : index
    %c0_62 = arith.constant 0 : index
    %c256_63 = arith.constant 256 : index
    %134 = vector.load %arg5[%c0_60, %c1_61, %c0_62, %c256_63] : memref<1x3x32x512xf32, #tpu.memory_space<vmem>>, vector<1x1x32x128xf32>
    %135 = vector.shape_cast %134 : vector<1x1x32x128xf32> to vector<32x128xf32>
    %136 = vector.shape_cast %133 : vector<32x128xf32> to vector<1x1x32x128xf32>
    tpu.vector_store %arg5[%c0_60, %c1_61, %c0_62, %c256_63], %136 {strides = array<i32>} : memref<1x3x32x512xf32, #tpu.memory_space<vmem>>, vector<1x1x32x128xf32>,
    %c7 = arith.constant 7 : index
    %c0_64 = arith.constant 0 : index
    %137 = vector.load %arg3[%c7, %c0_64] : memref<12x128xf32, #tpu.memory_space<vmem>>, vector<1x128xf32>
    %138 = vector.shape_cast %137 : vector<1x128xf32> to vector<128xf32>
    %139 = vector.shape_cast %138 : vector<128xf32> to vector<1x128xf32>
    %140 = vector.broadcast %139 : vector<1x128xf32> to vector<32x128xf32>
    %141 = arith.mulf %1, %140 : vector<32x128xf32>
    %142 = vector.broadcast %79 : f32 to vector<32x128xf32>
    %143 = arith.addf %141, %142 : vector<32x128xf32>
    %cst_65 = arith.constant 0.000000e+00 : f32
    %144 = vector.broadcast %cst_65 : f32 to vector<32x128xf32>
    %145 = arith.maximumf %143, %144 : vector<32x128xf32>
    %cst_66 = arith.constant 5.000000e-01 : f32
    %146 = vector.broadcast %cst_66 : f32 to vector<32x128xf32>
    %147 = arith.mulf %146, %145 : vector<32x128xf32>
    %148 = math.tanh %147 : vector<32x128xf32>
    %cst_67 = arith.constant 5.000000e-01 : f32
    %149 = vector.broadcast %cst_67 : f32 to vector<32x128xf32>
    %150 = arith.mulf %149, %148 : vector<32x128xf32>
    %cst_68 = arith.constant 5.000000e-01 : f32
    %151 = vector.broadcast %cst_68 : f32 to vector<32x128xf32>
    %152 = arith.addf %151, %150 : vector<32x128xf32>
    %c0_69 = arith.constant 0 : index
    %c1_70 = arith.constant 1 : index
    %c0_71 = arith.constant 0 : index
    %c384_72 = arith.constant 384 : index
    %153 = vector.load %arg5[%c0_69, %c1_70, %c0_71, %c384_72] : memref<1x3x32x512xf32, #tpu.memory_space<vmem>>, vector<1x1x32x128xf32>
    %154 = vector.shape_cast %153 : vector<1x1x32x128xf32> to vector<32x128xf32>
    %155 = vector.shape_cast %152 : vector<32x128xf32> to vector<1x1x32x128xf32>
    tpu.vector_store %arg5[%c0_69, %c1_70, %c0_71, %c384_72], %155 {strides = array<i32>} : memref<1x3x32x512xf32, #tpu.memory_space<vmem>>, vector<1x1x32x128xf32>,
    %c2_73 = arith.constant 2 : index
    %156 = memref.load %arg4[%c2_73] : memref<3xf32, #tpu.memory_space<smem>>
    %c8 = arith.constant 8 : index
    %c0_74 = arith.constant 0 : index
    %157 = vector.load %arg3[%c8, %c0_74] : memref<12x128xf32, #tpu.memory_space<vmem>>, vector<1x128xf32>
    %158 = vector.shape_cast %157 : vector<1x128xf32> to vector<128xf32>
    %159 = vector.shape_cast %158 : vector<128xf32> to vector<1x128xf32>
    %160 = vector.broadcast %159 : vector<1x128xf32> to vector<32x128xf32>
    %161 = arith.mulf %1, %160 : vector<32x128xf32>
    %162 = vector.broadcast %156 : f32 to vector<32x128xf32>
    %163 = arith.addf %161, %162 : vector<32x128xf32>
    %cst_75 = arith.constant 0.000000e+00 : f32
    %164 = vector.broadcast %cst_75 : f32 to vector<32x128xf32>
    %165 = arith.maximumf %163, %164 : vector<32x128xf32>
    %cst_76 = arith.constant 5.000000e-01 : f32
    %166 = vector.broadcast %cst_76 : f32 to vector<32x128xf32>
    %167 = arith.mulf %166, %165 : vector<32x128xf32>
    %168 = math.tanh %167 : vector<32x128xf32>
    %cst_77 = arith.constant 5.000000e-01 : f32
    %169 = vector.broadcast %cst_77 : f32 to vector<32x128xf32>
    %170 = arith.mulf %169, %168 : vector<32x128xf32>
    %cst_78 = arith.constant 5.000000e-01 : f32
    %171 = vector.broadcast %cst_78 : f32 to vector<32x128xf32>
    %172 = arith.addf %171, %170 : vector<32x128xf32>
    %c0_79 = arith.constant 0 : index
    %c2_80 = arith.constant 2 : index
    %c0_81 = arith.constant 0 : index
    %c0_82 = arith.constant 0 : index
    %173 = vector.load %arg5[%c0_79, %c2_80, %c0_81, %c0_82] : memref<1x3x32x512xf32, #tpu.memory_space<vmem>>, vector<1x1x32x128xf32>
    %174 = vector.shape_cast %173 : vector<1x1x32x128xf32> to vector<32x128xf32>
    %175 = vector.shape_cast %172 : vector<32x128xf32> to vector<1x1x32x128xf32>
    tpu.vector_store %arg5[%c0_79, %c2_80, %c0_81, %c0_82], %175 {strides = array<i32>} : memref<1x3x32x512xf32, #tpu.memory_space<vmem>>, vector<1x1x32x128xf32>,
    %c9 = arith.constant 9 : index
    %c0_83 = arith.constant 0 : index
    %176 = vector.load %arg3[%c9, %c0_83] : memref<12x128xf32, #tpu.memory_space<vmem>>, vector<1x128xf32>
    %177 = vector.shape_cast %176 : vector<1x128xf32> to vector<128xf32>
    %178 = vector.shape_cast %177 : vector<128xf32> to vector<1x128xf32>
    %179 = vector.broadcast %178 : vector<1x128xf32> to vector<32x128xf32>
    %180 = arith.mulf %1, %179 : vector<32x128xf32>
    %181 = vector.broadcast %156 : f32 to vector<32x128xf32>
    %182 = arith.addf %180, %181 : vector<32x128xf32>
    %cst_84 = arith.constant 0.000000e+00 : f32
    %183 = vector.broadcast %cst_84 : f32 to vector<32x128xf32>
    %184 = arith.maximumf %182, %183 : vector<32x128xf32>
    %cst_85 = arith.constant 5.000000e-01 : f32
    %185 = vector.broadcast %cst_85 : f32 to vector<32x128xf32>
    %186 = arith.mulf %185, %184 : vector<32x128xf32>
    %187 = math.tanh %186 : vector<32x128xf32>
    %cst_86 = arith.constant 5.000000e-01 : f32
    %188 = vector.broadcast %cst_86 : f32 to vector<32x128xf32>
    %189 = arith.mulf %188, %187 : vector<32x128xf32>
    %cst_87 = arith.constant 5.000000e-01 : f32
    %190 = vector.broadcast %cst_87 : f32 to vector<32x128xf32>
    %191 = arith.addf %190, %189 : vector<32x128xf32>
    %c0_88 = arith.constant 0 : index
    %c2_89 = arith.constant 2 : index
    %c0_90 = arith.constant 0 : index
    %c128_91 = arith.constant 128 : index
    %192 = vector.load %arg5[%c0_88, %c2_89, %c0_90, %c128_91] : memref<1x3x32x512xf32, #tpu.memory_space<vmem>>, vector<1x1x32x128xf32>
    %193 = vector.shape_cast %192 : vector<1x1x32x128xf32> to vector<32x128xf32>
    %194 = vector.shape_cast %191 : vector<32x128xf32> to vector<1x1x32x128xf32>
    tpu.vector_store %arg5[%c0_88, %c2_89, %c0_90, %c128_91], %194 {strides = array<i32>} : memref<1x3x32x512xf32, #tpu.memory_space<vmem>>, vector<1x1x32x128xf32>,
    %c10 = arith.constant 10 : index
    %c0_92 = arith.constant 0 : index
    %195 = vector.load %arg3[%c10, %c0_92] : memref<12x128xf32, #tpu.memory_space<vmem>>, vector<1x128xf32>
    %196 = vector.shape_cast %195 : vector<1x128xf32> to vector<128xf32>
    %197 = vector.shape_cast %196 : vector<128xf32> to vector<1x128xf32>
    %198 = vector.broadcast %197 : vector<1x128xf32> to vector<32x128xf32>
    %199 = arith.mulf %1, %198 : vector<32x128xf32>
    %200 = vector.broadcast %156 : f32 to vector<32x128xf32>
    %201 = arith.addf %199, %200 : vector<32x128xf32>
    %cst_93 = arith.constant 0.000000e+00 : f32
    %202 = vector.broadcast %cst_93 : f32 to vector<32x128xf32>
    %203 = arith.maximumf %201, %202 : vector<32x128xf32>
    %cst_94 = arith.constant 5.000000e-01 : f32
    %204 = vector.broadcast %cst_94 : f32 to vector<32x128xf32>
    %205 = arith.mulf %204, %203 : vector<32x128xf32>
    %206 = math.tanh %205 : vector<32x128xf32>
    %cst_95 = arith.constant 5.000000e-01 : f32
    %207 = vector.broadcast %cst_95 : f32 to vector<32x128xf32>
    %208 = arith.mulf %207, %206 : vector<32x128xf32>
    %cst_96 = arith.constant 5.000000e-01 : f32
    %209 = vector.broadcast %cst_96 : f32 to vector<32x128xf32>
    %210 = arith.addf %209, %208 : vector<32x128xf32>
    %c0_97 = arith.constant 0 : index
    %c2_98 = arith.constant 2 : index
    %c0_99 = arith.constant 0 : index
    %c256_100 = arith.constant 256 : index
    %211 = vector.load %arg5[%c0_97, %c2_98, %c0_99, %c256_100] : memref<1x3x32x512xf32, #tpu.memory_space<vmem>>, vector<1x1x32x128xf32>
    %212 = vector.shape_cast %211 : vector<1x1x32x128xf32> to vector<32x128xf32>
    %213 = vector.shape_cast %210 : vector<32x128xf32> to vector<1x1x32x128xf32>
    tpu.vector_store %arg5[%c0_97, %c2_98, %c0_99, %c256_100], %213 {strides = array<i32>} : memref<1x3x32x512xf32, #tpu.memory_space<vmem>>, vector<1x1x32x128xf32>,
    %c11 = arith.constant 11 : index
    %c0_101 = arith.constant 0 : index
    %214 = vector.load %arg3[%c11, %c0_101] : memref<12x128xf32, #tpu.memory_space<vmem>>, vector<1x128xf32>
    %215 = vector.shape_cast %214 : vector<1x128xf32> to vector<128xf32>
    %216 = vector.shape_cast %215 : vector<128xf32> to vector<1x128xf32>
    %217 = vector.broadcast %216 : vector<1x128xf32> to vector<32x128xf32>
    %218 = arith.mulf %1, %217 : vector<32x128xf32>
    %219 = vector.broadcast %156 : f32 to vector<32x128xf32>
    %220 = arith.addf %218, %219 : vector<32x128xf32>
    %cst_102 = arith.constant 0.000000e+00 : f32
    %221 = vector.broadcast %cst_102 : f32 to vector<32x128xf32>
    %222 = arith.maximumf %220, %221 : vector<32x128xf32>
    %cst_103 = arith.constant 5.000000e-01 : f32
    %223 = vector.broadcast %cst_103 : f32 to vector<32x128xf32>
    %224 = arith.mulf %223, %222 : vector<32x128xf32>
    %225 = math.tanh %224 : vector<32x128xf32>
    %cst_104 = arith.constant 5.000000e-01 : f32
    %226 = vector.broadcast %cst_104 : f32 to vector<32x128xf32>
    %227 = arith.mulf %226, %225 : vector<32x128xf32>
    %cst_105 = arith.constant 5.000000e-01 : f32
    %228 = vector.broadcast %cst_105 : f32 to vector<32x128xf32>
    %229 = arith.addf %228, %227 : vector<32x128xf32>
    %c0_106 = arith.constant 0 : index
    %c2_107 = arith.constant 2 : index
    %c0_108 = arith.constant 0 : index
    %c384_109 = arith.constant 384 : index
    %230 = vector.load %arg5[%c0_106, %c2_107, %c0_108, %c384_109] : memref<1x3x32x512xf32, #tpu.memory_space<vmem>>, vector<1x1x32x128xf32>
    %231 = vector.shape_cast %230 : vector<1x1x32x128xf32> to vector<32x128xf32>
    %232 = vector.shape_cast %229 : vector<32x128xf32> to vector<1x1x32x128xf32>
    tpu.vector_store %arg5[%c0_106, %c2_107, %c0_108, %c384_109], %232 {strides = array<i32>} : memref<1x3x32x512xf32, #tpu.memory_space<vmem>>, vector<1x1x32x128xf32>,
    return
  }
  func.func @transform_0(%arg0: i32, %arg1: i32) -> (i32, i32, i32) {
    %c0_i32 = arith.constant 0 : i32
    %c0_i32_0 = arith.constant 0 : i32
    return %arg0, %arg1, %c0_i32 : i32, i32, i32
  }
  func.func @transform_1(%arg0: i32, %arg1: i32) -> (i32, i32) {
    %c0_i32 = arith.constant 0 : i32
    %c0_i32_0 = arith.constant 0 : i32
    %c0_i32_1 = arith.constant 0 : i32
    return %c0_i32, %c0_i32_0 : i32, i32
  }
  func.func @transform_2(%arg0: i32, %arg1: i32) -> i32 {
    %c0_i32 = arith.constant 0 : i32
    %c0_i32_0 = arith.constant 0 : i32
    return %c0_i32 : i32
  }
  func.func @transform_3(%arg0: i32, %arg1: i32) -> (i32, i32, i32, i32) {
    %c0_i32 = arith.constant 0 : i32
    %c0_i32_0 = arith.constant 0 : i32
    %c0_i32_1 = arith.constant 0 : i32
    return %arg0, %c0_i32, %arg1, %c0_i32_0 : i32, i32, i32, i32
  }
}

module attributes {stable_mosaic.version = 11 : i64} {
  func.func @_encoder_kernel(%arg0: i32, %arg1: memref<1x3x128x128xf32, #tpu.memory_space<vmem>>, %arg2: memref<27xf32, #tpu.memory_space<smem>>, %arg3: memref<1xf32, #tpu.memory_space<smem>>, %arg4: memref<1x32x128xf32, #tpu.memory_space<vmem>>, %arg5: memref<128x128xf32, #tpu.memory_space<vmem>>) attributes {dimension_semantics = [#tpu.dimension_semantics<parallel>], iteration_bounds = array<i64: 2>, scalar_prefetch = 0 : i64, scratch_operands = 1 : i64, tpu.core_type = #tpu.core_type<tc>, window_params = [{transform_indices = @transform_0, window_bounds = array<i64: 1, 3, 128, 128>}, {transform_indices = @transform_1, window_bounds = array<i64: 27>}, {transform_indices = @transform_2, window_bounds = array<i64: 1>}, {transform_indices = @transform_3, window_bounds = array<i64: 1, 32, 128>}]} {
    %cst = arith.constant 0.000000e+00 : f32
    %0 = vector.broadcast %cst : f32 to vector<128x128xf32>
    %cst_0 = arith.constant 0.000000e+00 : f32
    %1 = vector.broadcast %cst_0 : f32 to vector<128x128xf32>
    %cst_1 = arith.constant 0.000000e+00 : f32
    %2 = vector.broadcast %cst_1 : f32 to vector<128x128xf32>
    %c0 = arith.constant 0 : index
    %c0_2 = arith.constant 0 : index
    %c0_3 = arith.constant 0 : index
    %c0_4 = arith.constant 0 : index
    %3 = vector.load %arg1[%c0, %c0_2, %c0_3, %c0_4] : memref<1x3x128x128xf32, #tpu.memory_space<vmem>>, vector<1x1x128x128xf32>
    %4 = vector.shape_cast %3 : vector<1x1x128x128xf32> to vector<128x128xf32>
    %cst_5 = arith.constant 0.000000e+00 : f32
    %5 = vector.broadcast %cst_5 : f32 to vector<128x1xf32>
    %6 = vector.extract_strided_slice %4 {offsets = [0, 0], sizes = [128, 127], strides = [1, 1]} : vector<128x128xf32> to vector<128x127xf32>
    %7 = tpu.concatenate %5, %6 in 1 : vector<128x1xf32>, vector<128x127xf32> -> vector<128x128xf32>
    %8 = vector.extract_strided_slice %4 {offsets = [0, 1], sizes = [128, 127], strides = [1, 1]} : vector<128x128xf32> to vector<128x127xf32>
    %cst_6 = arith.constant 0.000000e+00 : f32
    %9 = vector.broadcast %cst_6 : f32 to vector<128x1xf32>
    %10 = tpu.concatenate %8, %9 in 1 : vector<128x127xf32>, vector<128x1xf32> -> vector<128x128xf32>
    %c0_7 = arith.constant 0 : index
    %11 = memref.load %arg2[%c0_7] : memref<27xf32, #tpu.memory_space<smem>>
    %12 = vector.broadcast %11 : f32 to vector<128x128xf32>
    %13 = arith.mulf %7, %12 : vector<128x128xf32>
    %14 = arith.addf %0, %13 : vector<128x128xf32>
    %c1 = arith.constant 1 : index
    %15 = memref.load %arg2[%c1] : memref<27xf32, #tpu.memory_space<smem>>
    %16 = vector.broadcast %15 : f32 to vector<128x128xf32>
    %17 = arith.mulf %4, %16 : vector<128x128xf32>
    %18 = arith.addf %14, %17 : vector<128x128xf32>
    %c2 = arith.constant 2 : index
    %19 = memref.load %arg2[%c2] : memref<27xf32, #tpu.memory_space<smem>>
    %20 = vector.broadcast %19 : f32 to vector<128x128xf32>
    %21 = arith.mulf %10, %20 : vector<128x128xf32>
    %22 = arith.addf %18, %21 : vector<128x128xf32>
    %c3 = arith.constant 3 : index
    %23 = memref.load %arg2[%c3] : memref<27xf32, #tpu.memory_space<smem>>
    %24 = vector.broadcast %23 : f32 to vector<128x128xf32>
    %25 = arith.mulf %7, %24 : vector<128x128xf32>
    %26 = arith.addf %1, %25 : vector<128x128xf32>
    %c4 = arith.constant 4 : index
    %27 = memref.load %arg2[%c4] : memref<27xf32, #tpu.memory_space<smem>>
    %28 = vector.broadcast %27 : f32 to vector<128x128xf32>
    %29 = arith.mulf %4, %28 : vector<128x128xf32>
    %30 = arith.addf %26, %29 : vector<128x128xf32>
    %c5 = arith.constant 5 : index
    %31 = memref.load %arg2[%c5] : memref<27xf32, #tpu.memory_space<smem>>
    %32 = vector.broadcast %31 : f32 to vector<128x128xf32>
    %33 = arith.mulf %10, %32 : vector<128x128xf32>
    %34 = arith.addf %30, %33 : vector<128x128xf32>
    %c6 = arith.constant 6 : index
    %35 = memref.load %arg2[%c6] : memref<27xf32, #tpu.memory_space<smem>>
    %36 = vector.broadcast %35 : f32 to vector<128x128xf32>
    %37 = arith.mulf %7, %36 : vector<128x128xf32>
    %38 = arith.addf %2, %37 : vector<128x128xf32>
    %c7 = arith.constant 7 : index
    %39 = memref.load %arg2[%c7] : memref<27xf32, #tpu.memory_space<smem>>
    %40 = vector.broadcast %39 : f32 to vector<128x128xf32>
    %41 = arith.mulf %4, %40 : vector<128x128xf32>
    %42 = arith.addf %38, %41 : vector<128x128xf32>
    %c8 = arith.constant 8 : index
    %43 = memref.load %arg2[%c8] : memref<27xf32, #tpu.memory_space<smem>>
    %44 = vector.broadcast %43 : f32 to vector<128x128xf32>
    %45 = arith.mulf %10, %44 : vector<128x128xf32>
    %46 = arith.addf %42, %45 : vector<128x128xf32>
    %c0_8 = arith.constant 0 : index
    %c1_9 = arith.constant 1 : index
    %c0_10 = arith.constant 0 : index
    %c0_11 = arith.constant 0 : index
    %47 = vector.load %arg1[%c0_8, %c1_9, %c0_10, %c0_11] : memref<1x3x128x128xf32, #tpu.memory_space<vmem>>, vector<1x1x128x128xf32>
    %48 = vector.shape_cast %47 : vector<1x1x128x128xf32> to vector<128x128xf32>
    %cst_12 = arith.constant 0.000000e+00 : f32
    %49 = vector.broadcast %cst_12 : f32 to vector<128x1xf32>
    %50 = vector.extract_strided_slice %48 {offsets = [0, 0], sizes = [128, 127], strides = [1, 1]} : vector<128x128xf32> to vector<128x127xf32>
    %51 = tpu.concatenate %49, %50 in 1 : vector<128x1xf32>, vector<128x127xf32> -> vector<128x128xf32>
    %52 = vector.extract_strided_slice %48 {offsets = [0, 1], sizes = [128, 127], strides = [1, 1]} : vector<128x128xf32> to vector<128x127xf32>
    %cst_13 = arith.constant 0.000000e+00 : f32
    %53 = vector.broadcast %cst_13 : f32 to vector<128x1xf32>
    %54 = tpu.concatenate %52, %53 in 1 : vector<128x127xf32>, vector<128x1xf32> -> vector<128x128xf32>
    %c9 = arith.constant 9 : index
    %55 = memref.load %arg2[%c9] : memref<27xf32, #tpu.memory_space<smem>>
    %56 = vector.broadcast %55 : f32 to vector<128x128xf32>
    %57 = arith.mulf %51, %56 : vector<128x128xf32>
    %58 = arith.addf %22, %57 : vector<128x128xf32>
    %c10 = arith.constant 10 : index
    %59 = memref.load %arg2[%c10] : memref<27xf32, #tpu.memory_space<smem>>
    %60 = vector.broadcast %59 : f32 to vector<128x128xf32>
    %61 = arith.mulf %48, %60 : vector<128x128xf32>
    %62 = arith.addf %58, %61 : vector<128x128xf32>
    %c11 = arith.constant 11 : index
    %63 = memref.load %arg2[%c11] : memref<27xf32, #tpu.memory_space<smem>>
    %64 = vector.broadcast %63 : f32 to vector<128x128xf32>
    %65 = arith.mulf %54, %64 : vector<128x128xf32>
    %66 = arith.addf %62, %65 : vector<128x128xf32>
    %c12 = arith.constant 12 : index
    %67 = memref.load %arg2[%c12] : memref<27xf32, #tpu.memory_space<smem>>
    %68 = vector.broadcast %67 : f32 to vector<128x128xf32>
    %69 = arith.mulf %51, %68 : vector<128x128xf32>
    %70 = arith.addf %34, %69 : vector<128x128xf32>
    %c13 = arith.constant 13 : index
    %71 = memref.load %arg2[%c13] : memref<27xf32, #tpu.memory_space<smem>>
    %72 = vector.broadcast %71 : f32 to vector<128x128xf32>
    %73 = arith.mulf %48, %72 : vector<128x128xf32>
    %74 = arith.addf %70, %73 : vector<128x128xf32>
    %c14 = arith.constant 14 : index
    %75 = memref.load %arg2[%c14] : memref<27xf32, #tpu.memory_space<smem>>
    %76 = vector.broadcast %75 : f32 to vector<128x128xf32>
    %77 = arith.mulf %54, %76 : vector<128x128xf32>
    %78 = arith.addf %74, %77 : vector<128x128xf32>
    %c15 = arith.constant 15 : index
    %79 = memref.load %arg2[%c15] : memref<27xf32, #tpu.memory_space<smem>>
    %80 = vector.broadcast %79 : f32 to vector<128x128xf32>
    %81 = arith.mulf %51, %80 : vector<128x128xf32>
    %82 = arith.addf %46, %81 : vector<128x128xf32>
    %c16 = arith.constant 16 : index
    %83 = memref.load %arg2[%c16] : memref<27xf32, #tpu.memory_space<smem>>
    %84 = vector.broadcast %83 : f32 to vector<128x128xf32>
    %85 = arith.mulf %48, %84 : vector<128x128xf32>
    %86 = arith.addf %82, %85 : vector<128x128xf32>
    %c17 = arith.constant 17 : index
    %87 = memref.load %arg2[%c17] : memref<27xf32, #tpu.memory_space<smem>>
    %88 = vector.broadcast %87 : f32 to vector<128x128xf32>
    %89 = arith.mulf %54, %88 : vector<128x128xf32>
    %90 = arith.addf %86, %89 : vector<128x128xf32>
    %c0_14 = arith.constant 0 : index
    %c2_15 = arith.constant 2 : index
    %c0_16 = arith.constant 0 : index
    %c0_17 = arith.constant 0 : index
    %91 = vector.load %arg1[%c0_14, %c2_15, %c0_16, %c0_17] : memref<1x3x128x128xf32, #tpu.memory_space<vmem>>, vector<1x1x128x128xf32>
    %92 = vector.shape_cast %91 : vector<1x1x128x128xf32> to vector<128x128xf32>
    %cst_18 = arith.constant 0.000000e+00 : f32
    %93 = vector.broadcast %cst_18 : f32 to vector<128x1xf32>
    %94 = vector.extract_strided_slice %92 {offsets = [0, 0], sizes = [128, 127], strides = [1, 1]} : vector<128x128xf32> to vector<128x127xf32>
    %95 = tpu.concatenate %93, %94 in 1 : vector<128x1xf32>, vector<128x127xf32> -> vector<128x128xf32>
    %96 = vector.extract_strided_slice %92 {offsets = [0, 1], sizes = [128, 127], strides = [1, 1]} : vector<128x128xf32> to vector<128x127xf32>
    %cst_19 = arith.constant 0.000000e+00 : f32
    %97 = vector.broadcast %cst_19 : f32 to vector<128x1xf32>
    %98 = tpu.concatenate %96, %97 in 1 : vector<128x127xf32>, vector<128x1xf32> -> vector<128x128xf32>
    %c18 = arith.constant 18 : index
    %99 = memref.load %arg2[%c18] : memref<27xf32, #tpu.memory_space<smem>>
    %100 = vector.broadcast %99 : f32 to vector<128x128xf32>
    %101 = arith.mulf %95, %100 : vector<128x128xf32>
    %102 = arith.addf %66, %101 : vector<128x128xf32>
    %c19 = arith.constant 19 : index
    %103 = memref.load %arg2[%c19] : memref<27xf32, #tpu.memory_space<smem>>
    %104 = vector.broadcast %103 : f32 to vector<128x128xf32>
    %105 = arith.mulf %92, %104 : vector<128x128xf32>
    %106 = arith.addf %102, %105 : vector<128x128xf32>
    %c20 = arith.constant 20 : index
    %107 = memref.load %arg2[%c20] : memref<27xf32, #tpu.memory_space<smem>>
    %108 = vector.broadcast %107 : f32 to vector<128x128xf32>
    %109 = arith.mulf %98, %108 : vector<128x128xf32>
    %110 = arith.addf %106, %109 : vector<128x128xf32>
    %c21 = arith.constant 21 : index
    %111 = memref.load %arg2[%c21] : memref<27xf32, #tpu.memory_space<smem>>
    %112 = vector.broadcast %111 : f32 to vector<128x128xf32>
    %113 = arith.mulf %95, %112 : vector<128x128xf32>
    %114 = arith.addf %78, %113 : vector<128x128xf32>
    %c22 = arith.constant 22 : index
    %115 = memref.load %arg2[%c22] : memref<27xf32, #tpu.memory_space<smem>>
    %116 = vector.broadcast %115 : f32 to vector<128x128xf32>
    %117 = arith.mulf %92, %116 : vector<128x128xf32>
    %118 = arith.addf %114, %117 : vector<128x128xf32>
    %c23 = arith.constant 23 : index
    %119 = memref.load %arg2[%c23] : memref<27xf32, #tpu.memory_space<smem>>
    %120 = vector.broadcast %119 : f32 to vector<128x128xf32>
    %121 = arith.mulf %98, %120 : vector<128x128xf32>
    %122 = arith.addf %118, %121 : vector<128x128xf32>
    %c24 = arith.constant 24 : index
    %123 = memref.load %arg2[%c24] : memref<27xf32, #tpu.memory_space<smem>>
    %124 = vector.broadcast %123 : f32 to vector<128x128xf32>
    %125 = arith.mulf %95, %124 : vector<128x128xf32>
    %126 = arith.addf %90, %125 : vector<128x128xf32>
    %c25 = arith.constant 25 : index
    %127 = memref.load %arg2[%c25] : memref<27xf32, #tpu.memory_space<smem>>
    %128 = vector.broadcast %127 : f32 to vector<128x128xf32>
    %129 = arith.mulf %92, %128 : vector<128x128xf32>
    %130 = arith.addf %126, %129 : vector<128x128xf32>
    %c26 = arith.constant 26 : index
    %131 = memref.load %arg2[%c26] : memref<27xf32, #tpu.memory_space<smem>>
    %132 = vector.broadcast %131 : f32 to vector<128x128xf32>
    %133 = arith.mulf %98, %132 : vector<128x128xf32>
    %134 = arith.addf %130, %133 : vector<128x128xf32>
    %cst_20 = arith.constant 0.000000e+00 : f32
    %135 = vector.broadcast %cst_20 : f32 to vector<1x128xf32>
    %136 = vector.extract_strided_slice %110 {offsets = [0, 0], sizes = [127, 128], strides = [1, 1]} : vector<128x128xf32> to vector<127x128xf32>
    %137 = tpu.concatenate %135, %136 in 0 : vector<1x128xf32>, vector<127x128xf32> -> vector<128x128xf32>
    %138 = arith.addf %122, %137 : vector<128x128xf32>
    %139 = vector.extract_strided_slice %134 {offsets = [1, 0], sizes = [127, 128], strides = [1, 1]} : vector<128x128xf32> to vector<127x128xf32>
    %cst_21 = arith.constant 0.000000e+00 : f32
    %140 = vector.broadcast %cst_21 : f32 to vector<1x128xf32>
    %141 = tpu.concatenate %139, %140 in 0 : vector<127x128xf32>, vector<1x128xf32> -> vector<128x128xf32>
    %142 = arith.addf %138, %141 : vector<128x128xf32>
    %c0_22 = arith.constant 0 : index
    %c0_23 = arith.constant 0 : index
    %143 = vector.load %arg5[%c0_22, %c0_23] : memref<128x128xf32, #tpu.memory_space<vmem>>, vector<128x128xf32>
    tpu.vector_store %arg5[%c0_22, %c0_23], %142 {strides = array<i32>} : memref<128x128xf32, #tpu.memory_space<vmem>>, vector<128x128xf32>,
    %c0_24 = arith.constant 0 : index
    %c0_25 = arith.constant 0 : index
    %144 = tpu.strided_load %arg5[%c0_24, %c0_25] {strides = array<i32: 4, 1>} : memref<128x128xf32, #tpu.memory_space<vmem>>, vector<32x128xf32>
    %c1_26 = arith.constant 1 : index
    %c0_27 = arith.constant 0 : index
    %145 = tpu.strided_load %arg5[%c1_26, %c0_27] {strides = array<i32: 4, 1>} : memref<128x128xf32, #tpu.memory_space<vmem>>, vector<32x128xf32>
    %c2_28 = arith.constant 2 : index
    %c0_29 = arith.constant 0 : index
    %146 = tpu.strided_load %arg5[%c2_28, %c0_29] {strides = array<i32: 4, 1>} : memref<128x128xf32, #tpu.memory_space<vmem>>, vector<32x128xf32>
    %c3_30 = arith.constant 3 : index
    %c0_31 = arith.constant 0 : index
    %147 = tpu.strided_load %arg5[%c3_30, %c0_31] {strides = array<i32: 4, 1>} : memref<128x128xf32, #tpu.memory_space<vmem>>, vector<32x128xf32>
    %148 = arith.maximumf %144, %145 : vector<32x128xf32>
    %149 = arith.maximumf %146, %147 : vector<32x128xf32>
    %150 = arith.maximumf %148, %149 : vector<32x128xf32>
    %151 = tpu.iota {dimensions = array<i32: 1>} : vector<32x128xi32>
    %152 = vector.extract_strided_slice %150 {offsets = [0, 1], sizes = [32, 127], strides = [1, 1]} : vector<32x128xf32> to vector<32x127xf32>
    %cst_32 = arith.constant 0.000000e+00 : f32
    %153 = vector.broadcast %cst_32 : f32 to vector<32x1xf32>
    %154 = tpu.concatenate %152, %153 in 1 : vector<32x127xf32>, vector<32x1xf32> -> vector<32x128xf32>
    %cst_33 = arith.constant 0.000000e+00 : f32
    %155 = vector.broadcast %cst_33 : f32 to vector<32x1xf32>
    %156 = vector.extract_strided_slice %150 {offsets = [0, 0], sizes = [32, 127], strides = [1, 1]} : vector<32x128xf32> to vector<32x127xf32>
    %157 = tpu.concatenate %155, %156 in 1 : vector<32x1xf32>, vector<32x127xf32> -> vector<32x128xf32>
    %c1_i32 = arith.constant 1 : i32
    %158 = vector.broadcast %c1_i32 : i32 to vector<32x128xi32>
    %159 = arith.andi %151, %158 : vector<32x128xi32>
    %c0_i32 = arith.constant 0 : i32
    %160 = vector.broadcast %c0_i32 : i32 to vector<32x128xi32>
    %161 = arith.cmpi eq, %159, %160 : vector<32x128xi32>
    %162 = arith.select %161, %154, %157 : vector<32x128xi1>, vector<32x128xf32>
    %163 = arith.maximumf %150, %162 : vector<32x128xf32>
    %164 = vector.extract_strided_slice %163 {offsets = [0, 2], sizes = [32, 126], strides = [1, 1]} : vector<32x128xf32> to vector<32x126xf32>
    %cst_34 = arith.constant 0.000000e+00 : f32
    %165 = vector.broadcast %cst_34 : f32 to vector<32x2xf32>
    %166 = tpu.concatenate %164, %165 in 1 : vector<32x126xf32>, vector<32x2xf32> -> vector<32x128xf32>
    %cst_35 = arith.constant 0.000000e+00 : f32
    %167 = vector.broadcast %cst_35 : f32 to vector<32x2xf32>
    %168 = vector.extract_strided_slice %163 {offsets = [0, 0], sizes = [32, 126], strides = [1, 1]} : vector<32x128xf32> to vector<32x126xf32>
    %169 = tpu.concatenate %167, %168 in 1 : vector<32x2xf32>, vector<32x126xf32> -> vector<32x128xf32>
    %c3_i32 = arith.constant 3 : i32
    %170 = vector.broadcast %c3_i32 : i32 to vector<32x128xi32>
    %171 = arith.andi %151, %170 : vector<32x128xi32>
    %c2_i32 = arith.constant 2 : i32
    %172 = vector.broadcast %c2_i32 : i32 to vector<32x128xi32>
    %173 = arith.cmpi slt, %171, %172 : vector<32x128xi32>
    %174 = arith.select %173, %166, %169 : vector<32x128xi1>, vector<32x128xf32>
    %175 = arith.maximumf %163, %174 : vector<32x128xf32>
    %c0_36 = arith.constant 0 : index
    %176 = memref.load %arg3[%c0_36] : memref<1xf32, #tpu.memory_space<smem>>
    %177 = vector.broadcast %176 : f32 to vector<32x128xf32>
    %178 = arith.addf %175, %177 : vector<32x128xf32>
    %cst_37 = arith.constant 0.000000e+00 : f32
    %179 = vector.broadcast %cst_37 : f32 to vector<32x128xf32>
    %180 = arith.maximumf %178, %179 : vector<32x128xf32>
    %c0_38 = arith.constant 0 : index
    %c0_39 = arith.constant 0 : index
    %c0_40 = arith.constant 0 : index
    %181 = vector.load %arg4[%c0_38, %c0_39, %c0_40] : memref<1x32x128xf32, #tpu.memory_space<vmem>>, vector<1x32x128xf32>
    %182 = vector.shape_cast %181 : vector<1x32x128xf32> to vector<32x128xf32>
    %183 = vector.shape_cast %180 : vector<32x128xf32> to vector<1x32x128xf32>
    tpu.vector_store %arg4[%c0_38, %c0_39, %c0_40], %183 {strides = array<i32>} : memref<1x32x128xf32, #tpu.memory_space<vmem>>, vector<1x32x128xf32>,
    return
  }
  func.func @transform_0(%arg0: i32) -> (i32, i32, i32, i32) {
    %c0_i32 = arith.constant 0 : i32
    %c0_i32_0 = arith.constant 0 : i32
    %c0_i32_1 = arith.constant 0 : i32
    %c0_i32_2 = arith.constant 0 : i32
    return %arg0, %c0_i32, %c0_i32_0, %c0_i32_1 : i32, i32, i32, i32
  }
  func.func @transform_1(%arg0: i32) -> i32 {
    %c0_i32 = arith.constant 0 : i32
    %c0_i32_0 = arith.constant 0 : i32
    return %c0_i32 : i32
  }
  func.func @transform_2(%arg0: i32) -> i32 {
    %c0_i32 = arith.constant 0 : i32
    %c0_i32_0 = arith.constant 0 : i32
    return %c0_i32 : i32
  }
  func.func @transform_3(%arg0: i32) -> (i32, i32, i32) {
    %c0_i32 = arith.constant 0 : i32
    %c0_i32_0 = arith.constant 0 : i32
    %c0_i32_1 = arith.constant 0 : i32
    return %arg0, %c0_i32, %c0_i32_0 : i32, i32, i32
  }
}

</mosaic_0001>

<llo_original>
// kernel: tile.7
$region0: #{tile.7}
  %s0 = inlined_call_operand.vmem [shape: f32[3,1,4,32,4], index: 0, kind: input, shape index: {}]
  %s1 = inlined_call_operand.vmem [shape: f32[12,128], index: 1, kind: output, shape index: {}]
  %v2 = vld [vmem:[%s0] sm:$0x1]
  %s3 = scalar_lea.vmem %s0, 31
  %v4 = vld [vmem:[%s3] sm:$0x2]
  %vm5 = vcmask 1041409
  %v6 = vsel %vm5, %v4, %v2
  %s7 = scalar_lea.vmem %s0, 62
  %v8 = vld [vmem:[%s7] sm:$0x4]
  %vm9 = vcmask 1042434
  %v10 = vsel %vm9, %v8, %v6
  %s11 = scalar_lea.vmem %s0, 93
  %v12 = vld [vmem:[%s11] sm:$0x8]
  %vm13 = vcmask 1043459
  %v14 = vsel %vm13, %v12, %v10
  %s15 = scalar_lea.vmem %s0, 124
  %v16 = vld [vmem:[%s15] sm:$0x10]
  %vm17 = vcmask 1044484
  %v18 = vsel %vm17, %v16, %v14
  %s19 = scalar_lea.vmem %s0, 155
  %v20 = vld [vmem:[%s19] sm:$0x20]
  %vm21 = vcmask 1045509
  %v22 = vsel %vm21, %v20, %v18
  %s23 = scalar_lea.vmem %s0, 186
  %v24 = vld [vmem:[%s23] sm:$0x40]
  %vm25 = vcmask 1046534
  %v26 = vsel %vm25, %v24, %v22
  %s27 = scalar_lea.vmem %s0, 217
  %v28 = vld [vmem:[%s27] sm:$0x80]
  %vm29 = vcmask 1047559
  %v30 = vsel %vm29, %v28, %v26
  %vm31 = vcmask 31744
  %32 = vst.msk [vmem:[%s1] sm:$0xff] %vm31, %v30
  %s33 = scalar_lea.vmem %s0, 256
  %v34 = vld [vmem:[%s33] sm:$0x1]
  %s35 = scalar_lea.vmem %s0, 287
  %v36 = vld [vmem:[%s35] sm:$0x2]
  %vm37 = vcmask 1041409
  %v38 = vsel %vm37, %v36, %v34
  %s39 = scalar_lea.vmem %s0, 318
  %v40 = vld [vmem:[%s39] sm:$0x4]
  %vm41 = vcmask 1042434
  %v42 = vsel %vm41, %v40, %v38
  %s43 = scalar_lea.vmem %s0, 349
  %v44 = vld [vmem:[%s43] sm:$0x8]
  %vm45 = vcmask 1043459
  %v46 = vsel %vm45, %v44, %v42
  %vm47 = vcmask 31744
  %s48 = scalar_lea.vmem %s1, 8
  %49 = vst.msk [vmem:[%s48] sm:$0xf] %vm47, %v46
  %s50 = scalar_lea.vmem %s0, 31
  %v51 = vld [vmem:[%s50] sm:$0x1]
  %s52 = scalar_lea.vmem %s0, 62
  %v53 = vld [vmem:[%s52] sm:$0x2]
  %vm54 = vcmask 1041409
  %v55 = vsel %vm54, %v53, %v51
  %s56 = scalar_lea.vmem %s0, 93
  %v57 = vld [vmem:[%s56] sm:$0x4]
  %vm58 = vcmask 1042434
  %v59 = vsel %vm58, %v57, %v55
  %s60 = scalar_lea.vmem %s0, 124
  %v61 = vld [vmem:[%s60] sm:$0x8]
  %vm62 = vcmask 1043459
  %v63 = vsel %vm62, %v61, %v59
  %s64 = scalar_lea.vmem %s0, 155
  %v65 = vld [vmem:[%s64] sm:$0x10]
  %vm66 = vcmask 1044484
  %v67 = vsel %vm66, %v65, %v63
  %s68 = scalar_lea.vmem %s0, 186
  %v69 = vld [vmem:[%s68] sm:$0x20]
  %vm70 = vcmask 1045509
  %v71 = vsel %vm70, %v69, %v67
  %s72 = scalar_lea.vmem %s0, 217
  %v73 = vld [vmem:[%s72] sm:$0x40]
  %vm74 = vcmask 1046534
  %v75 = vsel %vm74, %v73, %v71
  %s76 = scalar_lea.vmem %s0, 248
  %v77 = vld [vmem:[%s76] sm:$0x80]
  %vm78 = vcmask 1047559
  %v79 = vsel %vm78, %v77, %v75
  %80 = vrot.lane.b32.xlu0 %v79, 124
  %v81 = vpop.permute.xlu0 %80
  %vm82 = vcmask 1048544
  %83 = vst.msk [vmem:[%s1] sm:$0xff] %vm82, %v81
  %s84 = scalar_lea.vmem %s0, 287
  %v85 = vld [vmem:[%s84] sm:$0x1]
  %s86 = scalar_lea.vmem %s0, 318
  %v87 = vld [vmem:[%s86] sm:$0x2]
  %vm88 = vcmask 1041409
  %v89 = vsel %vm88, %v87, %v85
  %s90 = scalar_lea.vmem %s0, 349
  %v91 = vld [vmem:[%s90] sm:$0x4]
  %vm92 = vcmask 1042434
  %v93 = vsel %vm92, %v91, %v89
  %s94 = scalar_lea.vmem %s0, 380
  %v95 = vld [vmem:[%s94] sm:$0x8]
  %vm96 = vcmask 1043459
  %v97 = vsel %vm96, %v95, %v93
  %98 = vrot.lane.b32.xlu0 %v97, 124
  %v99 = vpop.permute.xlu0 %98
  %vm100 = vcmask 1048544
  %s101 = scalar_lea.vmem %s1, 8
  %102 = vst.msk [vmem:[%s101] sm:$0xf] %vm100, %v99
  %s103 = scalar_lea.vmem %s0, 30
  %v104 = vld [vmem:[%s103] sm:$0x1]
  %s105 = scalar_lea.vmem %s0, 61
  %v106 = vld [vmem:[%s105] sm:$0x2]
  %vm107 = vcmask 1041409
  %v108 = vsel %vm107, %v106, %v104
  %s109 = scalar_lea.vmem %s0, 92
  %v110 = vld [vmem:[%s109] sm:$0x4]
  %vm111 = vcmask 1042434
  %v112 = vsel %vm111, %v110, %v108
  %s113 = scalar_lea.vmem %s0, 123
  %v114 = vld [vmem:[%s113] sm:$0x8]
  %vm115 = vcmask 1043459
  %v116 = vsel %vm115, %v114, %v112
  %s117 = scalar_lea.vmem %s0, 154
  %v118 = vld [vmem:[%s117] sm:$0x10]
  %vm119 = vcmask 1044484
  %v120 = vsel %vm119, %v118, %v116
  %s121 = scalar_lea.vmem %s0, 185
  %v122 = vld [vmem:[%s121] sm:$0x20]
  %vm123 = vcmask 1045509
  %v124 = vsel %vm123, %v122, %v120
  %s125 = scalar_lea.vmem %s0, 216
  %v126 = vld [vmem:[%s125] sm:$0x40]
  %vm127 = vcmask 1046534
  %v128 = vsel %vm127, %v126, %v124
  %s129 = scalar_lea.vmem %s0, 247
  %v130 = vld [vmem:[%s129] sm:$0x80]
  %vm131 = vcmask 1047559
  %v132 = vsel %vm131, %v130, %v128
  %133 = vrot.lane.b32.xlu0 %v132, 120
  %v134 = vpop.permute.xlu0 %133
  %vm135 = vcmask 1015744
  %136 = vst.msk [vmem:[%s1] sm:$0xff] %vm135, %v134
  %s137 = scalar_lea.vmem %s0, 286
  %v138 = vld [vmem:[%s137] sm:$0x1]
  %s139 = scalar_lea.vmem %s0, 317
  %v140 = vld [vmem:[%s139] sm:$0x2]
  %vm141 = vcmask 1041409
  %v142 = vsel %vm141, %v140, %v138
  %s143 = scalar_lea.vmem %s0, 348
  %v144 = vld [vmem:[%s143] sm:$0x4]
  %vm145 = vcmask 1042434
  %v146 = vsel %vm145, %v144, %v142
  %s147 = scalar_lea.vmem %s0, 379
  %v148 = vld [vmem:[%s147] sm:$0x8]
  %vm149 = vcmask 1043459
  %v150 = vsel %vm149, %v148, %v146
  %151 = vrot.lane.b32.xlu0 %v150, 120
  %v152 = vpop.permute.xlu0 %151
  %vm153 = vcmask 1015744
  %s154 = scalar_lea.vmem %s1, 8
  %155 = vst.msk [vmem:[%s154] sm:$0xf] %vm153, %v152
  %s156 = scalar_lea.vmem %s0, 29
  %v157 = vld [vmem:[%s156] sm:$0x1]
  %s158 = scalar_lea.vmem %s0, 60
  %v159 = vld [vmem:[%s158] sm:$0x2]
  %vm160 = vcmask 1041409
  %v161 = vsel %vm160, %v159, %v157
  %s162 = scalar_lea.vmem %s0, 91
  %v163 = vld [vmem:[%s162] sm:$0x4]
  %vm164 = vcmask 1042434
  %v165 = vsel %vm164, %v163, %v161
  %s166 = scalar_lea.vmem %s0, 122
  %v167 = vld [vmem:[%s166] sm:$0x8]
  %vm168 = vcmask 1043459
  %v169 = vsel %vm168, %v167, %v165
  %s170 = scalar_lea.vmem %s0, 153
  %v171 = vld [vmem:[%s170] sm:$0x10]
  %vm172 = vcmask 1044484
  %v173 = vsel %vm172, %v171, %v169
  %s174 = scalar_lea.vmem %s0, 184
  %v175 = vld [vmem:[%s174] sm:$0x20]
  %vm176 = vcmask 1045509
  %v177 = vsel %vm176, %v175, %v173
  %s178 = scalar_lea.vmem %s0, 215
  %v179 = vld [vmem:[%s178] sm:$0x40]
  %vm180 = vcmask 1046534
  %v181 = vsel %vm180, %v179, %v177
  %s182 = scalar_lea.vmem %s0, 246
  %v183 = vld [vmem:[%s182] sm:$0x80]
  %vm184 = vcmask 1047559
  %v185 = vsel %vm184, %v183, %v181
  %186 = vrot.lane.b32.xlu0 %v185, 116
  %v187 = vpop.permute.xlu0 %186
  %vm188 = vcmask 982944
  %189 = vst.msk [vmem:[%s1] sm:$0xff] %vm188, %v187
  %s190 = scalar_lea.vmem %s0, 285
  %v191 = vld [vmem:[%s190] sm:$0x1]
  %s192 = scalar_lea.vmem %s0, 316
  %v193 = vld [vmem:[%s192] sm:$0x2]
  %vm194 = vcmask 1041409
  %v195 = vsel %vm194, %v193, %v191
  %s196 = scalar_lea.vmem %s0, 347
  %v197 = vld [vmem:[%s196] sm:$0x4]
  %vm198 = vcmask 1042434
  %v199 = vsel %vm198, %v197, %v195
  %s200 = scalar_lea.vmem %s0, 378
  %v201 = vld [vmem:[%s200] sm:$0x8]
  %vm202 = vcmask 1043459
  %v203 = vsel %vm202, %v201, %v199
  %204 = vrot.lane.b32.xlu0 %v203, 116
  %v205 = vpop.permute.xlu0 %204
  %vm206 = vcmask 982944
  %s207 = scalar_lea.vmem %s1, 8
  %208 = vst.msk [vmem:[%s207] sm:$0xf] %vm206, %v205
  %s209 = scalar_lea.vmem %s0, 28
  %v210 = vld [vmem:[%s209] sm:$0x1]
  %s211 = scalar_lea.vmem %s0, 59
  %v212 = vld [vmem:[%s211] sm:$0x2]
  %vm213 = vcmask 1041409
  %v214 = vsel %vm213, %v212, %v210
  %s215 = scalar_lea.vmem %s0, 90
  %v216 = vld [vmem:[%s215] sm:$0x4]
  %vm217 = vcmask 1042434
  %v218 = vsel %vm217, %v216, %v214
  %s219 = scalar_lea.vmem %s0, 121
  %v220 = vld [vmem:[%s219] sm:$0x8]
  %vm221 = vcmask 1043459
  %v222 = vsel %vm221, %v220, %v218
  %s223 = scalar_lea.vmem %s0, 152
  %v224 = vld [vmem:[%s223] sm:$0x10]
  %vm225 = vcmask 1044484
  %v226 = vsel %vm225, %v224, %v222
  %s227 = scalar_lea.vmem %s0, 183
  %v228 = vld [vmem:[%s227] sm:$0x20]
  %vm229 = vcmask 1045509
  %v230 = vsel %vm229, %v228, %v226
  %s231 = scalar_lea.vmem %s0, 214
  %v232 = vld [vmem:[%s231] sm:$0x40]
  %vm233 = vcmask 1046534
  %v234 = vsel %vm233, %v232, %v230
  %s235 = scalar_lea.vmem %s0, 245
  %v236 = vld [vmem:[%s235] sm:$0x80]
  %vm237 = vcmask 1047559
  %v238 = vsel %vm237, %v236, %v234
  %239 = vrot.lane.b32.xlu0 %v238, 112
  %v240 = vpop.permute.xlu0 %239
  %vm241 = vcmask 950144
  %242 = vst.msk [vmem:[%s1] sm:$0xff] %vm241, %v240
  %s243 = scalar_lea.vmem %s0, 284
  %v244 = vld [vmem:[%s243] sm:$0x1]
  %s245 = scalar_lea.vmem %s0, 315
  %v246 = vld [vmem:[%s245] sm:$0x2]
  %vm247 = vcmask 1041409
  %v248 = vsel %vm247, %v246, %v244
  %s249 = scalar_lea.vmem %s0, 346
  %v250 = vld [vmem:[%s249] sm:$0x4]
  %vm251 = vcmask 1042434
  %v252 = vsel %vm251, %v250, %v248
  %s253 = scalar_lea.vmem %s0, 377
  %v254 = vld [vmem:[%s253] sm:$0x8]
  %vm255 = vcmask 1043459
  %v256 = vsel %vm255, %v254, %v252
  %257 = vrot.lane.b32.xlu0 %v256, 112
  %v258 = vpop.permute.xlu0 %257
  %vm259 = vcmask 950144
  %s260 = scalar_lea.vmem %s1, 8
  %261 = vst.msk [vmem:[%s260] sm:$0xf] %vm259, %v258
  %s262 = scalar_lea.vmem %s0, 27
  %v263 = vld [vmem:[%s262] sm:$0x1]
  %s264 = scalar_lea.vmem %s0, 58
  %v265 = vld [vmem:[%s264] sm:$0x2]
  %vm266 = vcmask 1041409
  %v267 = vsel %vm266, %v265, %v263
  %s268 = scalar_lea.vmem %s0, 89
  %v269 = vld [vmem:[%s268] sm:$0x4]
  %vm270 = vcmask 1042434
  %v271 = vsel %vm270, %v269, %v267
  %s272 = scalar_lea.vmem %s0, 120
  %v273 = vld [vmem:[%s272] sm:$0x8]
  %vm274 = vcmask 1043459
  %v275 = vsel %vm274, %v273, %v271
  %s276 = scalar_lea.vmem %s0, 151
  %v277 = vld [vmem:[%s276] sm:$0x10]
  %vm278 = vcmask 1044484
  %v279 = vsel %vm278, %v277, %v275
  %s280 = scalar_lea.vmem %s0, 182
  %v281 = vld [vmem:[%s280] sm:$0x20]
  %vm282 = vcmask 1045509
  %v283 = vsel %vm282, %v281, %v279
  %s284 = scalar_lea.vmem %s0, 213
  %v285 = vld [vmem:[%s284] sm:$0x40]
  %vm286 = vcmask 1046534
  %v287 = vsel %vm286, %v285, %v283
  %s288 = scalar_lea.vmem %s0, 244
  %v289 = vld [vmem:[%s288] sm:$0x80]
  %vm290 = vcmask 1047559
  %v291 = vsel %vm290, %v289, %v287
  %292 = vrot.lane.b32.xlu0 %v291, 108
  %v293 = vpop.permute.xlu0 %292
  %vm294 = vcmask 917344
  %295 = vst.msk [vmem:[%s1] sm:$0xff] %vm294, %v293
  %s296 = scalar_lea.vmem %s0, 283
  %v297 = vld [vmem:[%s296] sm:$0x1]
  %s298 = scalar_lea.vmem %s0, 314
  %v299 = vld [vmem:[%s298] sm:$0x2]
  %vm300 = vcmask 1041409
  %v301 = vsel %vm300, %v299, %v297
  %s302 = scalar_lea.vmem %s0, 345
  %v303 = vld [vmem:[%s302] sm:$0x4]
  %vm304 = vcmask 1042434
  %v305 = vsel %vm304, %v303, %v301
  %s306 = scalar_lea.vmem %s0, 376
  %v307 = vld [vmem:[%s306] sm:$0x8]
  %vm308 = vcmask 1043459
  %v309 = vsel %vm308, %v307, %v305
  %310 = vrot.lane.b32.xlu0 %v309, 108
  %v311 = vpop.permute.xlu0 %310
  %vm312 = vcmask 917344
  %s313 = scalar_lea.vmem %s1, 8
  %314 = vst.msk [vmem:[%s313] sm:$0xf] %vm312, %v311
  %s315 = scalar_lea.vmem %s0, 26
  %v316 = vld [vmem:[%s315] sm:$0x1]
  %s317 = scalar_lea.vmem %s0, 57
  %v318 = vld [vmem:[%s317] sm:$0x2]
  %vm319 = vcmask 1041409
  %v320 = vsel %vm319, %v318, %v316
  %s321 = scalar_lea.vmem %s0, 88
  %v322 = vld [vmem:[%s321] sm:$0x4]
  %vm323 = vcmask 1042434
  %v324 = vsel %vm323, %v322, %v320
  %s325 = scalar_lea.vmem %s0, 119
  %v326 = vld [vmem:[%s325] sm:$0x8]
  %vm327 = vcmask 1043459
  %v328 = vsel %vm327, %v326, %v324
  %s329 = scalar_lea.vmem %s0, 150
  %v330 = vld [vmem:[%s329] sm:$0x10]
  %vm331 = vcmask 1044484
  %v332 = vsel %vm331, %v330, %v328
  %s333 = scalar_lea.vmem %s0, 181
  %v334 = vld [vmem:[%s333] sm:$0x20]
  %vm335 = vcmask 1045509
  %v336 = vsel %vm335, %v334, %v332
  %s337 = scalar_lea.vmem %s0, 212
  %v338 = vld [vmem:[%s337] sm:$0x40]
  %vm339 = vcmask 1046534
  %v340 = vsel %vm339, %v338, %v336
  %s341 = scalar_lea.vmem %s0, 243
  %v342 = vld [vmem:[%s341] sm:$0x80]
  %vm343 = vcmask 1047559
  %v344 = vsel %vm343, %v342, %v340
  %345 = vrot.lane.b32.xlu0 %v344, 104
  %v346 = vpop.permute.xlu0 %345
  %vm347 = vcmask 884544
  %348 = vst.msk [vmem:[%s1] sm:$0xff] %vm347, %v346
  %s349 = scalar_lea.vmem %s0, 282
  %v350 = vld [vmem:[%s349] sm:$0x1]
  %s351 = scalar_lea.vmem %s0, 313
  %v352 = vld [vmem:[%s351] sm:$0x2]
  %vm353 = vcmask 1041409
  %v354 = vsel %vm353, %v352, %v350
  %s355 = scalar_lea.vmem %s0, 344
  %v356 = vld [vmem:[%s355] sm:$0x4]
  %vm357 = vcmask 1042434
  %v358 = vsel %vm357, %v356, %v354
  %s359 = scalar_lea.vmem %s0, 375
  %v360 = vld [vmem:[%s359] sm:$0x8]
  %vm361 = vcmask 1043459
  %v362 = vsel %vm361, %v360, %v358
  %363 = vrot.lane.b32.xlu0 %v362, 104
  %v364 = vpop.permute.xlu0 %363
  %vm365 = vcmask 884544
  %s366 = scalar_lea.vmem %s1, 8
  %367 = vst.msk [vmem:[%s366] sm:$0xf] %vm365, %v364
  %s368 = scalar_lea.vmem %s0, 25
  %v369 = vld [vmem:[%s368] sm:$0x1]
  %s370 = scalar_lea.vmem %s0, 56
  %v371 = vld [vmem:[%s370] sm:$0x2]
  %vm372 = vcmask 1041409
  %v373 = vsel %vm372, %v371, %v369
  %s374 = scalar_lea.vmem %s0, 87
  %v375 = vld [vmem:[%s374] sm:$0x4]
  %vm376 = vcmask 1042434
  %v377 = vsel %vm376, %v375, %v373
  %s378 = scalar_lea.vmem %s0, 118
  %v379 = vld [vmem:[%s378] sm:$0x8]
  %vm380 = vcmask 1043459
  %v381 = vsel %vm380, %v379, %v377
  %s382 = scalar_lea.vmem %s0, 149
  %v383 = vld [vmem:[%s382] sm:$0x10]
  %vm384 = vcmask 1044484
  %v385 = vsel %vm384, %v383, %v381
  %s386 = scalar_lea.vmem %s0, 180
  %v387 = vld [vmem:[%s386] sm:$0x20]
  %vm388 = vcmask 1045509
  %v389 = vsel %vm388, %v387, %v385
  %s390 = scalar_lea.vmem %s0, 211
  %v391 = vld [vmem:[%s390] sm:$0x40]
  %vm392 = vcmask 1046534
  %v393 = vsel %vm392, %v391, %v389
  %s394 = scalar_lea.vmem %s0, 242
  %v395 = vld [vmem:[%s394] sm:$0x80]
  %vm396 = vcmask 1047559
  %v397 = vsel %vm396, %v395, %v393
  %398 = vrot.lane.b32.xlu0 %v397, 100
  %v399 = vpop.permute.xlu0 %398
  %vm400 = vcmask 851744
  %401 = vst.msk [vmem:[%s1] sm:$0xff] %vm400, %v399
  %s402 = scalar_lea.vmem %s0, 281
  %v403 = vld [vmem:[%s402] sm:$0x1]
  %s404 = scalar_lea.vmem %s0, 312
  %v405 = vld [vmem:[%s404] sm:$0x2]
  %vm406 = vcmask 1041409
  %v407 = vsel %vm406, %v405, %v403
  %s408 = scalar_lea.vmem %s0, 343
  %v409 = vld [vmem:[%s408] sm:$0x4]
  %vm410 = vcmask 1042434
  %v411 = vsel %vm410, %v409, %v407
  %s412 = scalar_lea.vmem %s0, 374
  %v413 = vld [vmem:[%s412] sm:$0x8]
  %vm414 = vcmask 1043459
  %v415 = vsel %vm414, %v413, %v411
  %416 = vrot.lane.b32.xlu0 %v415, 100
  %v417 = vpop.permute.xlu0 %416
  %vm418 = vcmask 851744
  %s419 = scalar_lea.vmem %s1, 8
  %420 = vst.msk [vmem:[%s419] sm:$0xf] %vm418, %v417
  %s421 = scalar_lea.vmem %s0, 24
  %v422 = vld [vmem:[%s421] sm:$0x1]
  %s423 = scalar_lea.vmem %s0, 55
  %v424 = vld [vmem:[%s423] sm:$0x2]
  %vm425 = vcmask 1041409
  %v426 = vsel %vm425, %v424, %v422
  %s427 = scalar_lea.vmem %s0, 86
  %v428 = vld [vmem:[%s427] sm:$0x4]
  %vm429 = vcmask 1042434
  %v430 = vsel %vm429, %v428, %v426
  %s431 = scalar_lea.vmem %s0, 117
  %v432 = vld [vmem:[%s431] sm:$0x8]
  %vm433 = vcmask 1043459
  %v434 = vsel %vm433, %v432, %v430
  %s435 = scalar_lea.vmem %s0, 148
  %v436 = vld [vmem:[%s435] sm:$0x10]
  %vm437 = vcmask 1044484
  %v438 = vsel %vm437, %v436, %v434
  %s439 = scalar_lea.vmem %s0, 179
  %v440 = vld [vmem:[%s439] sm:$0x20]
  %vm441 = vcmask 1045509
  %v442 = vsel %vm441, %v440, %v438
  %s443 = scalar_lea.vmem %s0, 210
  %v444 = vld [vmem:[%s443] sm:$0x40]
  %vm445 = vcmask 1046534
  %v446 = vsel %vm445, %v444, %v442
  %s447 = scalar_lea.vmem %s0, 241
  %v448 = vld [vmem:[%s447] sm:$0x80]
  %vm449 = vcmask 1047559
  %v450 = vsel %vm449, %v448, %v446
  %451 = vrot.lane.b32.xlu0 %v450, 96
  %v452 = vpop.permute.xlu0 %451
  %vm453 = vcmask 818944
  %454 = vst.msk [vmem:[%s1] sm:$0xff] %vm453, %v452
  %s455 = scalar_lea.vmem %s0, 280
  %v456 = vld [vmem:[%s455] sm:$0x1]
  %s457 = scalar_lea.vmem %s0, 311
  %v458 = vld [vmem:[%s457] sm:$0x2]
  %vm459 = vcmask 1041409
  %v460 = vsel %vm459, %v458, %v456
  %s461 = scalar_lea.vmem %s0, 342
  %v462 = vld [vmem:[%s461] sm:$0x4]
  %vm463 = vcmask 1042434
  %v464 = vsel %vm463, %v462, %v460
  %s465 = scalar_lea.vmem %s0, 373
  %v466 = vld [vmem:[%s465] sm:$0x8]
  %vm467 = vcmask 1043459
  %v468 = vsel %vm467, %v466, %v464
  %469 = vrot.lane.b32.xlu0 %v468, 96
  %v470 = vpop.permute.xlu0 %469
  %vm471 = vcmask 818944
  %s472 = scalar_lea.vmem %s1, 8
  %473 = vst.msk [vmem:[%s472] sm:$0xf] %vm471, %v470
  %s474 = scalar_lea.vmem %s0, 23
  %v475 = vld [vmem:[%s474] sm:$0x1]
  %s476 = scalar_lea.vmem %s0, 54
  %v477 = vld [vmem:[%s476] sm:$0x2]
  %vm478 = vcmask 1041409
  %v479 = vsel %vm478, %v477, %v475
  %s480 = scalar_lea.vmem %s0, 85
  %v481 = vld [vmem:[%s480] sm:$0x4]
  %vm482 = vcmask 1042434
  %v483 = vsel %vm482, %v481, %v479
  %s484 = scalar_lea.vmem %s0, 116
  %v485 = vld [vmem:[%s484] sm:$0x8]
  %vm486 = vcmask 1043459
  %v487 = vsel %vm486, %v485, %v483
  %s488 = scalar_lea.vmem %s0, 147
  %v489 = vld [vmem:[%s488] sm:$0x10]
  %vm490 = vcmask 1044484
  %v491 = vsel %vm490, %v489, %v487
  %s492 = scalar_lea.vmem %s0, 178
  %v493 = vld [vmem:[%s492] sm:$0x20]
  %vm494 = vcmask 1045509
  %v495 = vsel %vm494, %v493, %v491
  %s496 = scalar_lea.vmem %s0, 209
  %v497 = vld [vmem:[%s496] sm:$0x40]
  %vm498 = vcmask 1046534
  %v499 = vsel %vm498, %v497, %v495
  %s500 = scalar_lea.vmem %s0, 240
  %v501 = vld [vmem:[%s500] sm:$0x80]
  %vm502 = vcmask 1047559
  %v503 = vsel %vm502, %v501, %v499
  %504 = vrot.lane.b32.xlu0 %v503, 92
  %v505 = vpop.permute.xlu0 %504
  %vm506 = vcmask 786144
  %507 = vst.msk [vmem:[%s1] sm:$0xff] %vm506, %v505
  %s508 = scalar_lea.vmem %s0, 279
  %v509 = vld [vmem:[%s508] sm:$0x1]
  %s510 = scalar_lea.vmem %s0, 310
  %v511 = vld [vmem:[%s510] sm:$0x2]
  %vm512 = vcmask 1041409
  %v513 = vsel %vm512, %v511, %v509
  %s514 = scalar_lea.vmem %s0, 341
  %v515 = vld [vmem:[%s514] sm:$0x4]
  %vm516 = vcmask 1042434
  %v517 = vsel %vm516, %v515, %v513
  %s518 = scalar_lea.vmem %s0, 372
  %v519 = vld [vmem:[%s518] sm:$0x8]
  %vm520 = vcmask 1043459
  %v521 = vsel %vm520, %v519, %v517
  %522 = vrot.lane.b32.xlu0 %v521, 92
  %v523 = vpop.permute.xlu0 %522
  %vm524 = vcmask 786144
  %s525 = scalar_lea.vmem %s1, 8
  %526 = vst.msk [vmem:[%s525] sm:$0xf] %vm524, %v523
  %s527 = scalar_lea.vmem %s0, 22
  %v528 = vld [vmem:[%s527] sm:$0x1]
  %s529 = scalar_lea.vmem %s0, 53
  %v530 = vld [vmem:[%s529] sm:$0x2]
  %vm531 = vcmask 1041409
  %v532 = vsel %vm531, %v530, %v528
  %s533 = scalar_lea.vmem %s0, 84
  %v534 = vld [vmem:[%s533] sm:$0x4]
  %vm535 = vcmask 1042434
  %v536 = vsel %vm535, %v534, %v532
  %s537 = scalar_lea.vmem %s0, 115
  %v538 = vld [vmem:[%s537] sm:$0x8]
  %vm539 = vcmask 1043459
  %v540 = vsel %vm539, %v538, %v536
  %s541 = scalar_lea.vmem %s0, 146
  %v542 = vld [vmem:[%s541] sm:$0x10]
  %vm543 = vcmask 1044484
  %v544 = vsel %vm543, %v542, %v540
  %s545 = scalar_lea.vmem %s0, 177
  %v546 = vld [vmem:[%s545] sm:$0x20]
  %vm547 = vcmask 1045509
  %v548 = vsel %vm547, %v546, %v544
  %s549 = scalar_lea.vmem %s0, 208
  %v550 = vld [vmem:[%s549] sm:$0x40]
  %vm551 = vcmask 1046534
  %v552 = vsel %vm551, %v550, %v548
  %s553 = scalar_lea.vmem %s0, 239
  %v554 = vld [vmem:[%s553] sm:$0x80]
  %vm555 = vcmask 1047559
  %v556 = vsel %vm555, %v554, %v552
  %557 = vrot.lane.b32.xlu0 %v556, 88
  %v558 = vpop.permute.xlu0 %557
  %vm559 = vcmask 753344
  %560 = vst.msk [vmem:[%s1] sm:$0xff] %vm559, %v558
  %s561 = scalar_lea.vmem %s0, 278
  %v562 = vld [vmem:[%s561] sm:$0x1]
  %s563 = scalar_lea.vmem %s0, 309
  %v564 = vld [vmem:[%s563] sm:$0x2]
  %vm565 = vcmask 1041409
  %v566 = vsel %vm565, %v564, %v562
  %s567 = scalar_lea.vmem %s0, 340
  %v568 = vld [vmem:[%s567] sm:$0x4]
  %vm569 = vcmask 1042434
  %v570 = vsel %vm569, %v568, %v566
  %s571 = scalar_lea.vmem %s0, 371
  %v572 = vld [vmem:[%s571] sm:$0x8]
  %vm573 = vcmask 1043459
  %v574 = vsel %vm573, %v572, %v570
  %575 = vrot.lane.b32.xlu0 %v574, 88
  %v576 = vpop.permute.xlu0 %575
  %vm577 = vcmask 753344
  %s578 = scalar_lea.vmem %s1, 8
  %579 = vst.msk [vmem:[%s578] sm:$0xf] %vm577, %v576
  %s580 = scalar_lea.vmem %s0, 21
  %v581 = vld [vmem:[%s580] sm:$0x1]
  %s582 = scalar_lea.vmem %s0, 52
  %v583 = vld [vmem:[%s582] sm:$0x2]
  %vm584 = vcmask 1041409
  %v585 = vsel %vm584, %v583, %v581
  %s586 = scalar_lea.vmem %s0, 83
  %v587 = vld [vmem:[%s586] sm:$0x4]
  %vm588 = vcmask 1042434
  %v589 = vsel %vm588, %v587, %v585
  %s590 = scalar_lea.vmem %s0, 114
  %v591 = vld [vmem:[%s590] sm:$0x8]
  %vm592 = vcmask 1043459
  %v593 = vsel %vm592, %v591, %v589
  %s594 = scalar_lea.vmem %s0, 145
  %v595 = vld [vmem:[%s594] sm:$0x10]
  %vm596 = vcmask 1044484
  %v597 = vsel %vm596, %v595, %v593
  %s598 = scalar_lea.vmem %s0, 176
  %v599 = vld [vmem:[%s598] sm:$0x20]
  %vm600 = vcmask 1045509
  %v601 = vsel %vm600, %v599, %v597
  %s602 = scalar_lea.vmem %s0, 207
  %v603 = vld [vmem:[%s602] sm:$0x40]
  %vm604 = vcmask 1046534
  %v605 = vsel %vm604, %v603, %v601
  %s606 = scalar_lea.vmem %s0, 238
  %v607 = vld [vmem:[%s606] sm:$0x80]
  %vm608 = vcmask 1047559
  %v609 = vsel %vm608, %v607, %v605
  %610 = vrot.lane.b32.xlu0 %v609, 84
  %v611 = vpop.permute.xlu0 %610
  %vm612 = vcmask 720544
  %613 = vst.msk [vmem:[%s1] sm:$0xff] %vm612, %v611
  %s614 = scalar_lea.vmem %s0, 277
  %v615 = vld [vmem:[%s614] sm:$0x1]
  %s616 = scalar_lea.vmem %s0, 308
  %v617 = vld [vmem:[%s616] sm:$0x2]
  %vm618 = vcmask 1041409
  %v619 = vsel %vm618, %v617, %v615
  %s620 = scalar_lea.vmem %s0, 339
  %v621 = vld [vmem:[%s620] sm:$0x4]
  %vm622 = vcmask 1042434
  %v623 = vsel %vm622, %v621, %v619
  %s624 = scalar_lea.vmem %s0, 370
  %v625 = vld [vmem:[%s624] sm:$0x8]
  %vm626 = vcmask 1043459
  %v627 = vsel %vm626, %v625, %v623
  %628 = vrot.lane.b32.xlu0 %v627, 84
  %v629 = vpop.permute.xlu0 %628
  %vm630 = vcmask 720544
  %s631 = scalar_lea.vmem %s1, 8
  %632 = vst.msk [vmem:[%s631] sm:$0xf] %vm630, %v629
  %s633 = scalar_lea.vmem %s0, 20
  %v634 = vld [vmem:[%s633] sm:$0x1]
  %s635 = scalar_lea.vmem %s0, 51
  %v636 = vld [vmem:[%s635] sm:$0x2]
  %vm637 = vcmask 1041409
  %v638 = vsel %vm637, %v636, %v634
  %s639 = scalar_lea.vmem %s0, 82
  %v640 = vld [vmem:[%s639] sm:$0x4]
  %vm641 = vcmask 1042434
  %v642 = vsel %vm641, %v640, %v638
  %s643 = scalar_lea.vmem %s0, 113
  %v644 = vld [vmem:[%s643] sm:$0x8]
  %vm645 = vcmask 1043459
  %v646 = vsel %vm645, %v644, %v642
  %s647 = scalar_lea.vmem %s0, 144
  %v648 = vld [vmem:[%s647] sm:$0x10]
  %vm649 = vcmask 1044484
  %v650 = vsel %vm649, %v648, %v646
  %s651 = scalar_lea.vmem %s0, 175
  %v652 = vld [vmem:[%s651] sm:$0x20]
  %vm653 = vcmask 1045509
  %v654 = vsel %vm653, %v652, %v650
  %s655 = scalar_lea.vmem %s0, 206
  %v656 = vld [vmem:[%s655] sm:$0x40]
  %vm657 = vcmask 1046534
  %v658 = vsel %vm657, %v656, %v654
  %s659 = scalar_lea.vmem %s0, 237
  %v660 = vld [vmem:[%s659] sm:$0x80]
  %vm661 = vcmask 1047559
  %v662 = vsel %vm661, %v660, %v658
  %663 = vrot.lane.b32.xlu0 %v662, 80
  %v664 = vpop.permute.xlu0 %663
  %vm665 = vcmask 687744
  %666 = vst.msk [vmem:[%s1] sm:$0xff] %vm665, %v664
  %s667 = scalar_lea.vmem %s0, 276
  %v668 = vld [vmem:[%s667] sm:$0x1]
  %s669 = scalar_lea.vmem %s0, 307
  %v670 = vld [vmem:[%s669] sm:$0x2]
  %vm671 = vcmask 1041409
  %v672 = vsel %vm671, %v670, %v668
  %s673 = scalar_lea.vmem %s0, 338
  %v674 = vld [vmem:[%s673] sm:$0x4]
  %vm675 = vcmask 1042434
  %v676 = vsel %vm675, %v674, %v672
  %s677 = scalar_lea.vmem %s0, 369
  %v678 = vld [vmem:[%s677] sm:$0x8]
  %vm679 = vcmask 1043459
  %v680 = vsel %vm679, %v678, %v676
  %681 = vrot.lane.b32.xlu0 %v680, 80
  %v682 = vpop.permute.xlu0 %681
  %vm683 = vcmask 687744
  %s684 = scalar_lea.vmem %s1, 8
  %685 = vst.msk [vmem:[%s684] sm:$0xf] %vm683, %v682
  %s686 = scalar_lea.vmem %s0, 19
  %v687 = vld [vmem:[%s686] sm:$0x1]
  %s688 = scalar_lea.vmem %s0, 50
  %v689 = vld [vmem:[%s688] sm:$0x2]
  %vm690 = vcmask 1041409
  %v691 = vsel %vm690, %v689, %v687
  %s692 = scalar_lea.vmem %s0, 81
  %v693 = vld [vmem:[%s692] sm:$0x4]
  %vm694 = vcmask 1042434
  %v695 = vsel %vm694, %v693, %v691
  %s696 = scalar_lea.vmem %s0, 112
  %v697 = vld [vmem:[%s696] sm:$0x8]
  %vm698 = vcmask 1043459
  %v699 = vsel %vm698, %v697, %v695
  %s700 = scalar_lea.vmem %s0, 143
  %v701 = vld [vmem:[%s700] sm:$0x10]
  %vm702 = vcmask 1044484
  %v703 = vsel %vm702, %v701, %v699
  %s704 = scalar_lea.vmem %s0, 174
  %v705 = vld [vmem:[%s704] sm:$0x20]
  %vm706 = vcmask 1045509
  %v707 = vsel %vm706, %v705, %v703
  %s708 = scalar_lea.vmem %s0, 205
  %v709 = vld [vmem:[%s708] sm:$0x40]
  %vm710 = vcmask 1046534
  %v711 = vsel %vm710, %v709, %v707
  %s712 = scalar_lea.vmem %s0, 236
  %v713 = vld [vmem:[%s712] sm:$0x80]
  %vm714 = vcmask 1047559
  %v715 = vsel %vm714, %v713, %v711
  %716 = vrot.lane.b32.xlu0 %v715, 76
  %v717 = vpop.permute.xlu0 %716
  %vm718 = vcmask 654944
  %719 = vst.msk [vmem:[%s1] sm:$0xff] %vm718, %v717
  %s720 = scalar_lea.vmem %s0, 275
  %v721 = vld [vmem:[%s720] sm:$0x1]
  %s722 = scalar_lea.vmem %s0, 306
  %v723 = vld [vmem:[%s722] sm:$0x2]
  %vm724 = vcmask 1041409
  %v725 = vsel %vm724, %v723, %v721
  %s726 = scalar_lea.vmem %s0, 337
  %v727 = vld [vmem:[%s726] sm:$0x4]
  %vm728 = vcmask 1042434
  %v729 = vsel %vm728, %v727, %v725
  %s730 = scalar_lea.vmem %s0, 368
  %v731 = vld [vmem:[%s730] sm:$0x8]
  %vm732 = vcmask 1043459
  %v733 = vsel %vm732, %v731, %v729
  %734 = vrot.lane.b32.xlu0 %v733, 76
  %v735 = vpop.permute.xlu0 %734
  %vm736 = vcmask 654944
  %s737 = scalar_lea.vmem %s1, 8
  %738 = vst.msk [vmem:[%s737] sm:$0xf] %vm736, %v735
  %s739 = scalar_lea.vmem %s0, 18
  %v740 = vld [vmem:[%s739] sm:$0x1]
  %s741 = scalar_lea.vmem %s0, 49
  %v742 = vld [vmem:[%s741] sm:$0x2]
  %vm743 = vcmask 1041409
  %v744 = vsel %vm743, %v742, %v740
  %s745 = scalar_lea.vmem %s0, 80
  %v746 = vld [vmem:[%s745] sm:$0x4]
  %vm747 = vcmask 1042434
  %v748 = vsel %vm747, %v746, %v744
  %s749 = scalar_lea.vmem %s0, 111
  %v750 = vld [vmem:[%s749] sm:$0x8]
  %vm751 = vcmask 1043459
  %v752 = vsel %vm751, %v750, %v748
  %s753 = scalar_lea.vmem %s0, 142
  %v754 = vld [vmem:[%s753] sm:$0x10]
  %vm755 = vcmask 1044484
  %v756 = vsel %vm755, %v754, %v752
  %s757 = scalar_lea.vmem %s0, 173
  %v758 = vld [vmem:[%s757] sm:$0x20]
  %vm759 = vcmask 1045509
  %v760 = vsel %vm759, %v758, %v756
  %s761 = scalar_lea.vmem %s0, 204
  %v762 = vld [vmem:[%s761] sm:$0x40]
  %vm763 = vcmask 1046534
  %v764 = vsel %vm763, %v762, %v760
  %s765 = scalar_lea.vmem %s0, 235
  %v766 = vld [vmem:[%s765] sm:$0x80]
  %vm767 = vcmask 1047559
  %v768 = vsel %vm767, %v766, %v764
  %769 = vrot.lane.b32.xlu0 %v768, 72
  %v770 = vpop.permute.xlu0 %769
  %vm771 = vcmask 622144
  %772 = vst.msk [vmem:[%s1] sm:$0xff] %vm771, %v770
  %s773 = scalar_lea.vmem %s0, 274
  %v774 = vld [vmem:[%s773] sm:$0x1]
  %s775 = scalar_lea.vmem %s0, 305
  %v776 = vld [vmem:[%s775] sm:$0x2]
  %vm777 = vcmask 1041409
  %v778 = vsel %vm777, %v776, %v774
  %s779 = scalar_lea.vmem %s0, 336
  %v780 = vld [vmem:[%s779] sm:$0x4]
  %vm781 = vcmask 1042434
  %v782 = vsel %vm781, %v780, %v778
  %s783 = scalar_lea.vmem %s0, 367
  %v784 = vld [vmem:[%s783] sm:$0x8]
  %vm785 = vcmask 1043459
  %v786 = vsel %vm785, %v784, %v782
  %787 = vrot.lane.b32.xlu0 %v786, 72
  %v788 = vpop.permute.xlu0 %787
  %vm789 = vcmask 622144
  %s790 = scalar_lea.vmem %s1, 8
  %791 = vst.msk [vmem:[%s790] sm:$0xf] %vm789, %v788
  %s792 = scalar_lea.vmem %s0, 17
  %v793 = vld [vmem:[%s792] sm:$0x1]
  %s794 = scalar_lea.vmem %s0, 48
  %v795 = vld [vmem:[%s794] sm:$0x2]
  %vm796 = vcmask 1041409
  %v797 = vsel %vm796, %v795, %v793
  %s798 = scalar_lea.vmem %s0, 79
  %v799 = vld [vmem:[%s798] sm:$0x4]
  %vm800 = vcmask 1042434
  %v801 = vsel %vm800, %v799, %v797
  %s802 = scalar_lea.vmem %s0, 110
  %v803 = vld [vmem:[%s802] sm:$0x8]
  %vm804 = vcmask 1043459
  %v805 = vsel %vm804, %v803, %v801
  %s806 = scalar_lea.vmem %s0, 141
  %v807 = vld [vmem:[%s806] sm:$0x10]
  %vm808 = vcmask 1044484
  %v809 = vsel %vm808, %v807, %v805
  %s810 = scalar_lea.vmem %s0, 172
  %v811 = vld [vmem:[%s810] sm:$0x20]
  %vm812 = vcmask 1045509
  %v813 = vsel %vm812, %v811, %v809
  %s814 = scalar_lea.vmem %s0, 203
  %v815 = vld [vmem:[%s814] sm:$0x40]
  %vm816 = vcmask 1046534
  %v817 = vsel %vm816, %v815, %v813
  %s818 = scalar_lea.vmem %s0, 234
  %v819 = vld [vmem:[%s818] sm:$0x80]
  %vm820 = vcmask 1047559
  %v821 = vsel %vm820, %v819, %v817
  %822 = vrot.lane.b32.xlu0 %v821, 68
  %v823 = vpop.permute.xlu0 %822
  %vm824 = vcmask 589344
  %825 = vst.msk [vmem:[%s1] sm:$0xff] %vm824, %v823
  %s826 = scalar_lea.vmem %s0, 273
  %v827 = vld [vmem:[%s826] sm:$0x1]
  %s828 = scalar_lea.vmem %s0, 304
  %v829 = vld [vmem:[%s828] sm:$0x2]
  %vm830 = vcmask 1041409
  %v831 = vsel %vm830, %v829, %v827
  %s832 = scalar_lea.vmem %s0, 335
  %v833 = vld [vmem:[%s832] sm:$0x4]
  %vm834 = vcmask 1042434
  %v835 = vsel %vm834, %v833, %v831
  %s836 = scalar_lea.vmem %s0, 366
  %v837 = vld [vmem:[%s836] sm:$0x8]
  %vm838 = vcmask 1043459
  %v839 = vsel %vm838, %v837, %v835
  %840 = vrot.lane.b32.xlu0 %v839, 68
  %v841 = vpop.permute.xlu0 %840
  %vm842 = vcmask 589344
  %s843 = scalar_lea.vmem %s1, 8
  %844 = vst.msk [vmem:[%s843] sm:$0xf] %vm842, %v841
  %s845 = scalar_lea.vmem %s0, 16
  %v846 = vld [vmem:[%s845] sm:$0x1]
  %s847 = scalar_lea.vmem %s0, 47
  %v848 = vld [vmem:[%s847] sm:$0x2]
  %vm849 = vcmask 1041409
  %v850 = vsel %vm849, %v848, %v846
  %s851 = scalar_lea.vmem %s0, 78
  %v852 = vld [vmem:[%s851] sm:$0x4]
  %vm853 = vcmask 1042434
  %v854 = vsel %vm853, %v852, %v850
  %s855 = scalar_lea.vmem %s0, 109
  %v856 = vld [vmem:[%s855] sm:$0x8]
  %vm857 = vcmask 1043459
  %v858 = vsel %vm857, %v856, %v854
  %s859 = scalar_lea.vmem %s0, 140
  %v860 = vld [vmem:[%s859] sm:$0x10]
  %vm861 = vcmask 1044484
  %v862 = vsel %vm861, %v860, %v858
  %s863 = scalar_lea.vmem %s0, 171
  %v864 = vld [vmem:[%s863] sm:$0x20]
  %vm865 = vcmask 1045509
  %v866 = vsel %vm865, %v864, %v862
  %s867 = scalar_lea.vmem %s0, 202
  %v868 = vld [vmem:[%s867] sm:$0x40]
  %vm869 = vcmask 1046534
  %v870 = vsel %vm869, %v868, %v866
  %s871 = scalar_lea.vmem %s0, 233
  %v872 = vld [vmem:[%s871] sm:$0x80]
  %vm873 = vcmask 1047559
  %v874 = vsel %vm873, %v872, %v870
  %875 = vrot.lane.b32.xlu0 %v874, 64
  %v876 = vpop.permute.xlu0 %875
  %vm877 = vcmask 556544
  %878 = vst.msk [vmem:[%s1] sm:$0xff] %vm877, %v876
  %s879 = scalar_lea.vmem %s0, 272
  %v880 = vld [vmem:[%s879] sm:$0x1]
  %s881 = scalar_lea.vmem %s0, 303
  %v882 = vld [vmem:[%s881] sm:$0x2]
  %vm883 = vcmask 1041409
  %v884 = vsel %vm883, %v882, %v880
  %s885 = scalar_lea.vmem %s0, 334
  %v886 = vld [vmem:[%s885] sm:$0x4]
  %vm887 = vcmask 1042434
  %v888 = vsel %vm887, %v886, %v884
  %s889 = scalar_lea.vmem %s0, 365
  %v890 = vld [vmem:[%s889] sm:$0x8]
  %vm891 = vcmask 1043459
  %v892 = vsel %vm891, %v890, %v888
  %893 = vrot.lane.b32.xlu0 %v892, 64
  %v894 = vpop.permute.xlu0 %893
  %vm895 = vcmask 556544
  %s896 = scalar_lea.vmem %s1, 8
  %897 = vst.msk [vmem:[%s896] sm:$0xf] %vm895, %v894
  %s898 = scalar_lea.vmem %s0, 15
  %v899 = vld [vmem:[%s898] sm:$0x1]
  %s900 = scalar_lea.vmem %s0, 46
  %v901 = vld [vmem:[%s900] sm:$0x2]
  %vm902 = vcmask 1041409
  %v903 = vsel %vm902, %v901, %v899
  %s904 = scalar_lea.vmem %s0, 77
  %v905 = vld [vmem:[%s904] sm:$0x4]
  %vm906 = vcmask 1042434
  %v907 = vsel %vm906, %v905, %v903
  %s908 = scalar_lea.vmem %s0, 108
  %v909 = vld [vmem:[%s908] sm:$0x8]
  %vm910 = vcmask 1043459
  %v911 = vsel %vm910, %v909, %v907
  %s912 = scalar_lea.vmem %s0, 139
  %v913 = vld [vmem:[%s912] sm:$0x10]
  %vm914 = vcmask 1044484
  %v915 = vsel %vm914, %v913, %v911
  %s916 = scalar_lea.vmem %s0, 170
  %v917 = vld [vmem:[%s916] sm:$0x20]
  %vm918 = vcmask 1045509
  %v919 = vsel %vm918, %v917, %v915
  %s920 = scalar_lea.vmem %s0, 201
  %v921 = vld [vmem:[%s920] sm:$0x40]
  %vm922 = vcmask 1046534
  %v923 = vsel %vm922, %v921, %v919
  %s924 = scalar_lea.vmem %s0, 232
  %v925 = vld [vmem:[%s924] sm:$0x80]
  %vm926 = vcmask 1047559
  %v927 = vsel %vm926, %v925, %v923
  %928 = vrot.lane.b32.xlu0 %v927, 60
  %v929 = vpop.permute.xlu0 %928
  %vm930 = vcmask 523744
  %931 = vst.msk [vmem:[%s1] sm:$0xff] %vm930, %v929
  %s932 = scalar_lea.vmem %s0, 271
  %v933 = vld [vmem:[%s932] sm:$0x1]
  %s934 = scalar_lea.vmem %s0, 302
  %v935 = vld [vmem:[%s934] sm:$0x2]
  %vm936 = vcmask 1041409
  %v937 = vsel %vm936, %v935, %v933
  %s938 = scalar_lea.vmem %s0, 333
  %v939 = vld [vmem:[%s938] sm:$0x4]
  %vm940 = vcmask 1042434
  %v941 = vsel %vm940, %v939, %v937
  %s942 = scalar_lea.vmem %s0, 364
  %v943 = vld [vmem:[%s942] sm:$0x8]
  %vm944 = vcmask 1043459
  %v945 = vsel %vm944, %v943, %v941
  %946 = vrot.lane.b32.xlu0 %v945, 60
  %v947 = vpop.permute.xlu0 %946
  %vm948 = vcmask 523744
  %s949 = scalar_lea.vmem %s1, 8
  %950 = vst.msk [vmem:[%s949] sm:$0xf] %vm948, %v947
  %s951 = scalar_lea.vmem %s0, 14
  %v952 = vld [vmem:[%s951] sm:$0x1]
  %s953 = scalar_lea.vmem %s0, 45
  %v954 = vld [vmem:[%s953] sm:$0x2]
  %vm955 = vcmask 1041409
  %v956 = vsel %vm955, %v954, %v952
  %s957 = scalar_lea.vmem %s0, 76
  %v958 = vld [vmem:[%s957] sm:$0x4]
  %vm959 = vcmask 1042434
  %v960 = vsel %vm959, %v958, %v956
  %s961 = scalar_lea.vmem %s0, 107
  %v962 = vld [vmem:[%s961] sm:$0x8]
  %vm963 = vcmask 1043459
  %v964 = vsel %vm963, %v962, %v960
  %s965 = scalar_lea.vmem %s0, 138
  %v966 = vld [vmem:[%s965] sm:$0x10]
  %vm967 = vcmask 1044484
  %v968 = vsel %vm967, %v966, %v964
  %s969 = scalar_lea.vmem %s0, 169
  %v970 = vld [vmem:[%s969] sm:$0x20]
  %vm971 = vcmask 1045509
  %v972 = vsel %vm971, %v970, %v968
  %s973 = scalar_lea.vmem %s0, 200
  %v974 = vld [vmem:[%s973] sm:$0x40]
  %vm975 = vcmask 1046534
  %v976 = vsel %vm975, %v974, %v972
  %s977 = scalar_lea.vmem %s0, 231
  %v978 = vld [vmem:[%s977] sm:$0x80]
  %vm979 = vcmask 1047559
  %v980 = vsel %vm979, %v978, %v976
  %981 = vrot.lane.b32.xlu0 %v980, 56
  %v982 = vpop.permute.xlu0 %981
  %vm983 = vcmask 490944
  %984 = vst.msk [vmem:[%s1] sm:$0xff] %vm983, %v982
  %s985 = scalar_lea.vmem %s0, 270
  %v986 = vld [vmem:[%s985] sm:$0x1]
  %s987 = scalar_lea.vmem %s0, 301
  %v988 = vld [vmem:[%s987] sm:$0x2]
  %vm989 = vcmask 1041409
  %v990 = vsel %vm989, %v988, %v986
  %s991 = scalar_lea.vmem %s0, 332
  %v992 = vld [vmem:[%s991] sm:$0x4]
  %vm993 = vcmask 1042434
  %v994 = vsel %vm993, %v992, %v990
  %s995 = scalar_lea.vmem %s0, 363
  %v996 = vld [vmem:[%s995] sm:$0x8]
  %vm997 = vcmask 1043459
  %v998 = vsel %vm997, %v996, %v994
  %999 = vrot.lane.b32.xlu0 %v998, 56
  %v1000 = vpop.permute.xlu0 %999
  %vm1001 = vcmask 490944
  %s1002 = scalar_lea.vmem %s1, 8
  %1003 = vst.msk [vmem:[%s1002] sm:$0xf] %vm1001, %v1000
  %s1004 = scalar_lea.vmem %s0, 13
  %v1005 = vld [vmem:[%s1004] sm:$0x1]
  %s1006 = scalar_lea.vmem %s0, 44
  %v1007 = vld [vmem:[%s1006] sm:$0x2]
  %vm1008 = vcmask 1041409
  %v1009 = vsel %vm1008, %v1007, %v1005
  %s1010 = scalar_lea.vmem %s0, 75
  %v1011 = vld [vmem:[%s1010] sm:$0x4]
  %vm1012 = vcmask 1042434
  %v1013 = vsel %vm1012, %v1011, %v1009
  %s1014 = scalar_lea.vmem %s0, 106
  %v1015 = vld [vmem:[%s1014] sm:$0x8]
  %vm1016 = vcmask 1043459
  %v1017 = vsel %vm1016, %v1015, %v1013
  %s1018 = scalar_lea.vmem %s0, 137
  %v1019 = vld [vmem:[%s1018] sm:$0x10]
  %vm1020 = vcmask 1044484
  %v1021 = vsel %vm1020, %v1019, %v1017
  %s1022 = scalar_lea.vmem %s0, 168
  %v1023 = vld [vmem:[%s1022] sm:$0x20]
  %vm1024 = vcmask 1045509
  %v1025 = vsel %vm1024, %v1023, %v1021
  %s1026 = scalar_lea.vmem %s0, 199
  %v1027 = vld [vmem:[%s1026] sm:$0x40]
  %vm1028 = vcmask 1046534
  %v1029 = vsel %vm1028, %v1027, %v1025
  %s1030 = scalar_lea.vmem %s0, 230
  %v1031 = vld [vmem:[%s1030] sm:$0x80]
  %vm1032 = vcmask 1047559
  %v1033 = vsel %vm1032, %v1031, %v1029
  %1034 = vrot.lane.b32.xlu0 %v1033, 52
  %v1035 = vpop.permute.xlu0 %1034
  %vm1036 = vcmask 458144
  %1037 = vst.msk [vmem:[%s1] sm:$0xff] %vm1036, %v1035
  %s1038 = scalar_lea.vmem %s0, 269
  %v1039 = vld [vmem:[%s1038] sm:$0x1]
  %s1040 = scalar_lea.vmem %s0, 300
  %v1041 = vld [vmem:[%s1040] sm:$0x2]
  %vm1042 = vcmask 1041409
  %v1043 = vsel %vm1042, %v1041, %v1039
  %s1044 = scalar_lea.vmem %s0, 331
  %v1045 = vld [vmem:[%s1044] sm:$0x4]
  %vm1046 = vcmask 1042434
  %v1047 = vsel %vm1046, %v1045, %v1043
  %s1048 = scalar_lea.vmem %s0, 362
  %v1049 = vld [vmem:[%s1048] sm:$0x8]
  %vm1050 = vcmask 1043459
  %v1051 = vsel %vm1050, %v1049, %v1047
  %1052 = vrot.lane.b32.xlu0 %v1051, 52
  %v1053 = vpop.permute.xlu0 %1052
  %vm1054 = vcmask 458144
  %s1055 = scalar_lea.vmem %s1, 8
  %1056 = vst.msk [vmem:[%s1055] sm:$0xf] %vm1054, %v1053
  %s1057 = scalar_lea.vmem %s0, 12
  %v1058 = vld [vmem:[%s1057] sm:$0x1]
  %s1059 = scalar_lea.vmem %s0, 43
  %v1060 = vld [vmem:[%s1059] sm:$0x2]
  %vm1061 = vcmask 1041409
  %v1062 = vsel %vm1061, %v1060, %v1058
  %s1063 = scalar_lea.vmem %s0, 74
  %v1064 = vld [vmem:[%s1063] sm:$0x4]
  %vm1065 = vcmask 1042434
  %v1066 = vsel %vm1065, %v1064, %v1062
  %s1067 = scalar_lea.vmem %s0, 105
  %v1068 = vld [vmem:[%s1067] sm:$0x8]
  %vm1069 = vcmask 1043459
  %v1070 = vsel %vm1069, %v1068, %v1066
  %s1071 = scalar_lea.vmem %s0, 136
  %v1072 = vld [vmem:[%s1071] sm:$0x10]
  %vm1073 = vcmask 1044484
  %v1074 = vsel %vm1073, %v1072, %v1070
  %s1075 = scalar_lea.vmem %s0, 167
  %v1076 = vld [vmem:[%s1075] sm:$0x20]
  %vm1077 = vcmask 1045509
  %v1078 = vsel %vm1077, %v1076, %v1074
  %s1079 = scalar_lea.vmem %s0, 198
  %v1080 = vld [vmem:[%s1079] sm:$0x40]
  %vm1081 = vcmask 1046534
  %v1082 = vsel %vm1081, %v1080, %v1078
  %s1083 = scalar_lea.vmem %s0, 229
  %v1084 = vld [vmem:[%s1083] sm:$0x80]
  %vm1085 = vcmask 1047559
  %v1086 = vsel %vm1085, %v1084, %v1082
  %1087 = vrot.lane.b32.xlu0 %v1086, 48
  %v1088 = vpop.permute.xlu0 %1087
  %vm1089 = vcmask 425344
  %1090 = vst.msk [vmem:[%s1] sm:$0xff] %vm1089, %v1088
  %s1091 = scalar_lea.vmem %s0, 268
  %v1092 = vld [vmem:[%s1091] sm:$0x1]
  %s1093 = scalar_lea.vmem %s0, 299
  %v1094 = vld [vmem:[%s1093] sm:$0x2]
  %vm1095 = vcmask 1041409
  %v1096 = vsel %vm1095, %v1094, %v1092
  %s1097 = scalar_lea.vmem %s0, 330
  %v1098 = vld [vmem:[%s1097] sm:$0x4]
  %vm1099 = vcmask 1042434
  %v1100 = vsel %vm1099, %v1098, %v1096
  %s1101 = scalar_lea.vmem %s0, 361
  %v1102 = vld [vmem:[%s1101] sm:$0x8]
  %vm1103 = vcmask 1043459
  %v1104 = vsel %vm1103, %v1102, %v1100
  %1105 = vrot.lane.b32.xlu0 %v1104, 48
  %v1106 = vpop.permute.xlu0 %1105
  %vm1107 = vcmask 425344
  %s1108 = scalar_lea.vmem %s1, 8
  %1109 = vst.msk [vmem:[%s1108] sm:$0xf] %vm1107, %v1106
  %s1110 = scalar_lea.vmem %s0, 11
  %v1111 = vld [vmem:[%s1110] sm:$0x1]
  %s1112 = scalar_lea.vmem %s0, 42
  %v1113 = vld [vmem:[%s1112] sm:$0x2]
  %vm1114 = vcmask 1041409
  %v1115 = vsel %vm1114, %v1113, %v1111
  %s1116 = scalar_lea.vmem %s0, 73
  %v1117 = vld [vmem:[%s1116] sm:$0x4]
  %vm1118 = vcmask 1042434
  %v1119 = vsel %vm1118, %v1117, %v1115
  %s1120 = scalar_lea.vmem %s0, 104
  %v1121 = vld [vmem:[%s1120] sm:$0x8]
  %vm1122 = vcmask 1043459
  %v1123 = vsel %vm1122, %v1121, %v1119
  %s1124 = scalar_lea.vmem %s0, 135
  %v1125 = vld [vmem:[%s1124] sm:$0x10]
  %vm1126 = vcmask 1044484
  %v1127 = vsel %vm1126, %v1125, %v1123
  %s1128 = scalar_lea.vmem %s0, 166
  %v1129 = vld [vmem:[%s1128] sm:$0x20]
  %vm1130 = vcmask 1045509
  %v1131 = vsel %vm1130, %v1129, %v1127
  %s1132 = scalar_lea.vmem %s0, 197
  %v1133 = vld [vmem:[%s1132] sm:$0x40]
  %vm1134 = vcmask 1046534
  %v1135 = vsel %vm1134, %v1133, %v1131
  %s1136 = scalar_lea.vmem %s0, 228
  %v1137 = vld [vmem:[%s1136] sm:$0x80]
  %vm1138 = vcmask 1047559
  %v1139 = vsel %vm1138, %v1137, %v1135
  %1140 = vrot.lane.b32.xlu0 %v1139, 44
  %v1141 = vpop.permute.xlu0 %1140
  %vm1142 = vcmask 392544
  %1143 = vst.msk [vmem:[%s1] sm:$0xff] %vm1142, %v1141
  %s1144 = scalar_lea.vmem %s0, 267
  %v1145 = vld [vmem:[%s1144] sm:$0x1]
  %s1146 = scalar_lea.vmem %s0, 298
  %v1147 = vld [vmem:[%s1146] sm:$0x2]
  %vm1148 = vcmask 1041409
  %v1149 = vsel %vm1148, %v1147, %v1145
  %s1150 = scalar_lea.vmem %s0, 329
  %v1151 = vld [vmem:[%s1150] sm:$0x4]
  %vm1152 = vcmask 1042434
  %v1153 = vsel %vm1152, %v1151, %v1149
  %s1154 = scalar_lea.vmem %s0, 360
  %v1155 = vld [vmem:[%s1154] sm:$0x8]
  %vm1156 = vcmask 1043459
  %v1157 = vsel %vm1156, %v1155, %v1153
  %1158 = vrot.lane.b32.xlu0 %v1157, 44
  %v1159 = vpop.permute.xlu0 %1158
  %vm1160 = vcmask 392544
  %s1161 = scalar_lea.vmem %s1, 8
  %1162 = vst.msk [vmem:[%s1161] sm:$0xf] %vm1160, %v1159
  %s1163 = scalar_lea.vmem %s0, 10
  %v1164 = vld [vmem:[%s1163] sm:$0x1]
  %s1165 = scalar_lea.vmem %s0, 41
  %v1166 = vld [vmem:[%s1165] sm:$0x2]
  %vm1167 = vcmask 1041409
  %v1168 = vsel %vm1167, %v1166, %v1164
  %s1169 = scalar_lea.vmem %s0, 72
  %v1170 = vld [vmem:[%s1169] sm:$0x4]
  %vm1171 = vcmask 1042434
  %v1172 = vsel %vm1171, %v1170, %v1168
  %s1173 = scalar_lea.vmem %s0, 103
  %v1174 = vld [vmem:[%s1173] sm:$0x8]
  %vm1175 = vcmask 1043459
  %v1176 = vsel %vm1175, %v1174, %v1172
  %s1177 = scalar_lea.vmem %s0, 134
  %v1178 = vld [vmem:[%s1177] sm:$0x10]
  %vm1179 = vcmask 1044484
  %v1180 = vsel %vm1179, %v1178, %v1176
  %s1181 = scalar_lea.vmem %s0, 165
  %v1182 = vld [vmem:[%s1181] sm:$0x20]
  %vm1183 = vcmask 1045509
  %v1184 = vsel %vm1183, %v1182, %v1180
  %s1185 = scalar_lea.vmem %s0, 196
  %v1186 = vld [vmem:[%s1185] sm:$0x40]
  %vm1187 = vcmask 1046534
  %v1188 = vsel %vm1187, %v1186, %v1184
  %s1189 = scalar_lea.vmem %s0, 227
  %v1190 = vld [vmem:[%s1189] sm:$0x80]
  %vm1191 = vcmask 1047559
  %v1192 = vsel %vm1191, %v1190, %v1188
  %1193 = vrot.lane.b32.xlu0 %v1192, 40
  %v1194 = vpop.permute.xlu0 %1193
  %vm1195 = vcmask 359744
  %1196 = vst.msk [vmem:[%s1] sm:$0xff] %vm1195, %v1194
  %s1197 = scalar_lea.vmem %s0, 266
  %v1198 = vld [vmem:[%s1197] sm:$0x1]
  %s1199 = scalar_lea.vmem %s0, 297
  %v1200 = vld [vmem:[%s1199] sm:$0x2]
  %vm1201 = vcmask 1041409
  %v1202 = vsel %vm1201, %v1200, %v1198
  %s1203 = scalar_lea.vmem %s0, 328
  %v1204 = vld [vmem:[%s1203] sm:$0x4]
  %vm1205 = vcmask 1042434
  %v1206 = vsel %vm1205, %v1204, %v1202
  %s1207 = scalar_lea.vmem %s0, 359
  %v1208 = vld [vmem:[%s1207] sm:$0x8]
  %vm1209 = vcmask 1043459
  %v1210 = vsel %vm1209, %v1208, %v1206
  %1211 = vrot.lane.b32.xlu0 %v1210, 40
  %v1212 = vpop.permute.xlu0 %1211
  %vm1213 = vcmask 359744
  %s1214 = scalar_lea.vmem %s1, 8
  %1215 = vst.msk [vmem:[%s1214] sm:$0xf] %vm1213, %v1212
  %s1216 = scalar_lea.vmem %s0, 9
  %v1217 = vld [vmem:[%s1216] sm:$0x1]
  %s1218 = scalar_lea.vmem %s0, 40
  %v1219 = vld [vmem:[%s1218] sm:$0x2]
  %vm1220 = vcmask 1041409
  %v1221 = vsel %vm1220, %v1219, %v1217
  %s1222 = scalar_lea.vmem %s0, 71
  %v1223 = vld [vmem:[%s1222] sm:$0x4]
  %vm1224 = vcmask 1042434
  %v1225 = vsel %vm1224, %v1223, %v1221
  %s1226 = scalar_lea.vmem %s0, 102
  %v1227 = vld [vmem:[%s1226] sm:$0x8]
  %vm1228 = vcmask 1043459
  %v1229 = vsel %vm1228, %v1227, %v1225
  %s1230 = scalar_lea.vmem %s0, 133
  %v1231 = vld [vmem:[%s1230] sm:$0x10]
  %vm1232 = vcmask 1044484
  %v1233 = vsel %vm1232, %v1231, %v1229
  %s1234 = scalar_lea.vmem %s0, 164
  %v1235 = vld [vmem:[%s1234] sm:$0x20]
  %vm1236 = vcmask 1045509
  %v1237 = vsel %vm1236, %v1235, %v1233
  %s1238 = scalar_lea.vmem %s0, 195
  %v1239 = vld [vmem:[%s1238] sm:$0x40]
  %vm1240 = vcmask 1046534
  %v1241 = vsel %vm1240, %v1239, %v1237
  %s1242 = scalar_lea.vmem %s0, 226
  %v1243 = vld [vmem:[%s1242] sm:$0x80]
  %vm1244 = vcmask 1047559
  %v1245 = vsel %vm1244, %v1243, %v1241
  %1246 = vrot.lane.b32.xlu0 %v1245, 36
  %v1247 = vpop.permute.xlu0 %1246
  %vm1248 = vcmask 326944
  %1249 = vst.msk [vmem:[%s1] sm:$0xff] %vm1248, %v1247
  %s1250 = scalar_lea.vmem %s0, 265
  %v1251 = vld [vmem:[%s1250] sm:$0x1]
  %s1252 = scalar_lea.vmem %s0, 296
  %v1253 = vld [vmem:[%s1252] sm:$0x2]
  %vm1254 = vcmask 1041409
  %v1255 = vsel %vm1254, %v1253, %v1251
  %s1256 = scalar_lea.vmem %s0, 327
  %v1257 = vld [vmem:[%s1256] sm:$0x4]
  %vm1258 = vcmask 1042434
  %v1259 = vsel %vm1258, %v1257, %v1255
  %s1260 = scalar_lea.vmem %s0, 358
  %v1261 = vld [vmem:[%s1260] sm:$0x8]
  %vm1262 = vcmask 1043459
  %v1263 = vsel %vm1262, %v1261, %v1259
  %1264 = vrot.lane.b32.xlu0 %v1263, 36
  %v1265 = vpop.permute.xlu0 %1264
  %vm1266 = vcmask 326944
  %s1267 = scalar_lea.vmem %s1, 8
  %1268 = vst.msk [vmem:[%s1267] sm:$0xf] %vm1266, %v1265
  %s1269 = scalar_lea.vmem %s0, 8
  %v1270 = vld [vmem:[%s1269] sm:$0x1]
  %s1271 = scalar_lea.vmem %s0, 39
  %v1272 = vld [vmem:[%s1271] sm:$0x2]
  %vm1273 = vcmask 1041409
  %v1274 = vsel %vm1273, %v1272, %v1270
  %s1275 = scalar_lea.vmem %s0, 70
  %v1276 = vld [vmem:[%s1275] sm:$0x4]
  %vm1277 = vcmask 1042434
  %v1278 = vsel %vm1277, %v1276, %v1274
  %s1279 = scalar_lea.vmem %s0, 101
  %v1280 = vld [vmem:[%s1279] sm:$0x8]
  %vm1281 = vcmask 1043459
  %v1282 = vsel %vm1281, %v1280, %v1278
  %s1283 = scalar_lea.vmem %s0, 132
  %v1284 = vld [vmem:[%s1283] sm:$0x10]
  %vm1285 = vcmask 1044484
  %v1286 = vsel %vm1285, %v1284, %v1282
  %s1287 = scalar_lea.vmem %s0, 163
  %v1288 = vld [vmem:[%s1287] sm:$0x20]
  %vm1289 = vcmask 1045509
  %v1290 = vsel %vm1289, %v1288, %v1286
  %s1291 = scalar_lea.vmem %s0, 194
  %v1292 = vld [vmem:[%s1291] sm:$0x40]
  %vm1293 = vcmask 1046534
  %v1294 = vsel %vm1293, %v1292, %v1290
  %s1295 = scalar_lea.vmem %s0, 225
  %v1296 = vld [vmem:[%s1295] sm:$0x80]
  %vm1297 = vcmask 1047559
  %v1298 = vsel %vm1297, %v1296, %v1294
  %1299 = vrot.lane.b32.xlu0 %v1298, 32
  %v1300 = vpop.permute.xlu0 %1299
  %vm1301 = vcmask 294144
  %1302 = vst.msk [vmem:[%s1] sm:$0xff] %vm1301, %v1300
  %s1303 = scalar_lea.vmem %s0, 264
  %v1304 = vld [vmem:[%s1303] sm:$0x1]
  %s1305 = scalar_lea.vmem %s0, 295
  %v1306 = vld [vmem:[%s1305] sm:$0x2]
  %vm1307 = vcmask 1041409
  %v1308 = vsel %vm1307, %v1306, %v1304
  %s1309 = scalar_lea.vmem %s0, 326
  %v1310 = vld [vmem:[%s1309] sm:$0x4]
  %vm1311 = vcmask 1042434
  %v1312 = vsel %vm1311, %v1310, %v1308
  %s1313 = scalar_lea.vmem %s0, 357
  %v1314 = vld [vmem:[%s1313] sm:$0x8]
  %vm1315 = vcmask 1043459
  %v1316 = vsel %vm1315, %v1314, %v1312
  %1317 = vrot.lane.b32.xlu0 %v1316, 32
  %v1318 = vpop.permute.xlu0 %1317
  %vm1319 = vcmask 294144
  %s1320 = scalar_lea.vmem %s1, 8
  %1321 = vst.msk [vmem:[%s1320] sm:$0xf] %vm1319, %v1318
  %s1322 = scalar_lea.vmem %s0, 7
  %v1323 = vld [vmem:[%s1322] sm:$0x1]
  %s1324 = scalar_lea.vmem %s0, 38
  %v1325 = vld [vmem:[%s1324] sm:$0x2]
  %vm1326 = vcmask 1041409
  %v1327 = vsel %vm1326, %v1325, %v1323
  %s1328 = scalar_lea.vmem %s0, 69
  %v1329 = vld [vmem:[%s1328] sm:$0x4]
  %vm1330 = vcmask 1042434
  %v1331 = vsel %vm1330, %v1329, %v1327
  %s1332 = scalar_lea.vmem %s0, 100
  %v1333 = vld [vmem:[%s1332] sm:$0x8]
  %vm1334 = vcmask 1043459
  %v1335 = vsel %vm1334, %v1333, %v1331
  %s1336 = scalar_lea.vmem %s0, 131
  %v1337 = vld [vmem:[%s1336] sm:$0x10]
  %vm1338 = vcmask 1044484
  %v1339 = vsel %vm1338, %v1337, %v1335
  %s1340 = scalar_lea.vmem %s0, 162
  %v1341 = vld [vmem:[%s1340] sm:$0x20]
  %vm1342 = vcmask 1045509
  %v1343 = vsel %vm1342, %v1341, %v1339
  %s1344 = scalar_lea.vmem %s0, 193
  %v1345 = vld [vmem:[%s1344] sm:$0x40]
  %vm1346 = vcmask 1046534
  %v1347 = vsel %vm1346, %v1345, %v1343
  %s1348 = scalar_lea.vmem %s0, 224
  %v1349 = vld [vmem:[%s1348] sm:$0x80]
  %vm1350 = vcmask 1047559
  %v1351 = vsel %vm1350, %v1349, %v1347
  %1352 = vrot.lane.b32.xlu0 %v1351, 28
  %v1353 = vpop.permute.xlu0 %1352
  %vm1354 = vcmask 261344
  %1355 = vst.msk [vmem:[%s1] sm:$0xff] %vm1354, %v1353
  %s1356 = scalar_lea.vmem %s0, 263
  %v1357 = vld [vmem:[%s1356] sm:$0x1]
  %s1358 = scalar_lea.vmem %s0, 294
  %v1359 = vld [vmem:[%s1358] sm:$0x2]
  %vm1360 = vcmask 1041409
  %v1361 = vsel %vm1360, %v1359, %v1357
  %s1362 = scalar_lea.vmem %s0, 325
  %v1363 = vld [vmem:[%s1362] sm:$0x4]
  %vm1364 = vcmask 1042434
  %v1365 = vsel %vm1364, %v1363, %v1361
  %s1366 = scalar_lea.vmem %s0, 356
  %v1367 = vld [vmem:[%s1366] sm:$0x8]
  %vm1368 = vcmask 1043459
  %v1369 = vsel %vm1368, %v1367, %v1365
  %1370 = vrot.lane.b32.xlu0 %v1369, 28
  %v1371 = vpop.permute.xlu0 %1370
  %vm1372 = vcmask 261344
  %s1373 = scalar_lea.vmem %s1, 8
  %1374 = vst.msk [vmem:[%s1373] sm:$0xf] %vm1372, %v1371
  %s1375 = scalar_lea.vmem %s0, 6
  %v1376 = vld [vmem:[%s1375] sm:$0x1]
  %s1377 = scalar_lea.vmem %s0, 37
  %v1378 = vld [vmem:[%s1377] sm:$0x2]
  %vm1379 = vcmask 1041409
  %v1380 = vsel %vm1379, %v1378, %v1376
  %s1381 = scalar_lea.vmem %s0, 68
  %v1382 = vld [vmem:[%s1381] sm:$0x4]
  %vm1383 = vcmask 1042434
  %v1384 = vsel %vm1383, %v1382, %v1380
  %s1385 = scalar_lea.vmem %s0, 99
  %v1386 = vld [vmem:[%s1385] sm:$0x8]
  %vm1387 = vcmask 1043459
  %v1388 = vsel %vm1387, %v1386, %v1384
  %s1389 = scalar_lea.vmem %s0, 130
  %v1390 = vld [vmem:[%s1389] sm:$0x10]
  %vm1391 = vcmask 1044484
  %v1392 = vsel %vm1391, %v1390, %v1388
  %s1393 = scalar_lea.vmem %s0, 161
  %v1394 = vld [vmem:[%s1393] sm:$0x20]
  %vm1395 = vcmask 1045509
  %v1396 = vsel %vm1395, %v1394, %v1392
  %s1397 = scalar_lea.vmem %s0, 192
  %v1398 = vld [vmem:[%s1397] sm:$0x40]
  %vm1399 = vcmask 1046534
  %v1400 = vsel %vm1399, %v1398, %v1396
  %s1401 = scalar_lea.vmem %s0, 223
  %v1402 = vld [vmem:[%s1401] sm:$0x80]
  %vm1403 = vcmask 1047559
  %v1404 = vsel %vm1403, %v1402, %v1400
  %1405 = vrot.lane.b32.xlu0 %v1404, 24
  %v1406 = vpop.permute.xlu0 %1405
  %vm1407 = vcmask 228544
  %1408 = vst.msk [vmem:[%s1] sm:$0xff] %vm1407, %v1406
  %s1409 = scalar_lea.vmem %s0, 262
  %v1410 = vld [vmem:[%s1409] sm:$0x1]
  %s1411 = scalar_lea.vmem %s0, 293
  %v1412 = vld [vmem:[%s1411] sm:$0x2]
  %vm1413 = vcmask 1041409
  %v1414 = vsel %vm1413, %v1412, %v1410
  %s1415 = scalar_lea.vmem %s0, 324
  %v1416 = vld [vmem:[%s1415] sm:$0x4]
  %vm1417 = vcmask 1042434
  %v1418 = vsel %vm1417, %v1416, %v1414
  %s1419 = scalar_lea.vmem %s0, 355
  %v1420 = vld [vmem:[%s1419] sm:$0x8]
  %vm1421 = vcmask 1043459
  %v1422 = vsel %vm1421, %v1420, %v1418
  %1423 = vrot.lane.b32.xlu0 %v1422, 24
  %v1424 = vpop.permute.xlu0 %1423
  %vm1425 = vcmask 228544
  %s1426 = scalar_lea.vmem %s1, 8
  %1427 = vst.msk [vmem:[%s1426] sm:$0xf] %vm1425, %v1424
  %s1428 = scalar_lea.vmem %s0, 5
  %v1429 = vld [vmem:[%s1428] sm:$0x1]
  %s1430 = scalar_lea.vmem %s0, 36
  %v1431 = vld [vmem:[%s1430] sm:$0x2]
  %vm1432 = vcmask 1041409
  %v1433 = vsel %vm1432, %v1431, %v1429
  %s1434 = scalar_lea.vmem %s0, 67
  %v1435 = vld [vmem:[%s1434] sm:$0x4]
  %vm1436 = vcmask 1042434
  %v1437 = vsel %vm1436, %v1435, %v1433
  %s1438 = scalar_lea.vmem %s0, 98
  %v1439 = vld [vmem:[%s1438] sm:$0x8]
  %vm1440 = vcmask 1043459
  %v1441 = vsel %vm1440, %v1439, %v1437
  %s1442 = scalar_lea.vmem %s0, 129
  %v1443 = vld [vmem:[%s1442] sm:$0x10]
  %vm1444 = vcmask 1044484
  %v1445 = vsel %vm1444, %v1443, %v1441
  %s1446 = scalar_lea.vmem %s0, 160
  %v1447 = vld [vmem:[%s1446] sm:$0x20]
  %vm1448 = vcmask 1045509
  %v1449 = vsel %vm1448, %v1447, %v1445
  %s1450 = scalar_lea.vmem %s0, 191
  %v1451 = vld [vmem:[%s1450] sm:$0x40]
  %vm1452 = vcmask 1046534
  %v1453 = vsel %vm1452, %v1451, %v1449
  %s1454 = scalar_lea.vmem %s0, 222
  %v1455 = vld [vmem:[%s1454] sm:$0x80]
  %vm1456 = vcmask 1047559
  %v1457 = vsel %vm1456, %v1455, %v1453
  %1458 = vrot.lane.b32.xlu0 %v1457, 20
  %v1459 = vpop.permute.xlu0 %1458
  %vm1460 = vcmask 195744
  %1461 = vst.msk [vmem:[%s1] sm:$0xff] %vm1460, %v1459
  %s1462 = scalar_lea.vmem %s0, 261
  %v1463 = vld [vmem:[%s1462] sm:$0x1]
  %s1464 = scalar_lea.vmem %s0, 292
  %v1465 = vld [vmem:[%s1464] sm:$0x2]
  %vm1466 = vcmask 1041409
  %v1467 = vsel %vm1466, %v1465, %v1463
  %s1468 = scalar_lea.vmem %s0, 323
  %v1469 = vld [vmem:[%s1468] sm:$0x4]
  %vm1470 = vcmask 1042434
  %v1471 = vsel %vm1470, %v1469, %v1467
  %s1472 = scalar_lea.vmem %s0, 354
  %v1473 = vld [vmem:[%s1472] sm:$0x8]
  %vm1474 = vcmask 1043459
  %v1475 = vsel %vm1474, %v1473, %v1471
  %1476 = vrot.lane.b32.xlu0 %v1475, 20
  %v1477 = vpop.permute.xlu0 %1476
  %vm1478 = vcmask 195744
  %s1479 = scalar_lea.vmem %s1, 8
  %1480 = vst.msk [vmem:[%s1479] sm:$0xf] %vm1478, %v1477
  %s1481 = scalar_lea.vmem %s0, 4
  %v1482 = vld [vmem:[%s1481] sm:$0x1]
  %s1483 = scalar_lea.vmem %s0, 35
  %v1484 = vld [vmem:[%s1483] sm:$0x2]
  %vm1485 = vcmask 1041409
  %v1486 = vsel %vm1485, %v1484, %v1482
  %s1487 = scalar_lea.vmem %s0, 66
  %v1488 = vld [vmem:[%s1487] sm:$0x4]
  %vm1489 = vcmask 1042434
  %v1490 = vsel %vm1489, %v1488, %v1486
  %s1491 = scalar_lea.vmem %s0, 97
  %v1492 = vld [vmem:[%s1491] sm:$0x8]
  %vm1493 = vcmask 1043459
  %v1494 = vsel %vm1493, %v1492, %v1490
  %s1495 = scalar_lea.vmem %s0, 128
  %v1496 = vld [vmem:[%s1495] sm:$0x10]
  %vm1497 = vcmask 1044484
  %v1498 = vsel %vm1497, %v1496, %v1494
  %s1499 = scalar_lea.vmem %s0, 159
  %v1500 = vld [vmem:[%s1499] sm:$0x20]
  %vm1501 = vcmask 1045509
  %v1502 = vsel %vm1501, %v1500, %v1498
  %s1503 = scalar_lea.vmem %s0, 190
  %v1504 = vld [vmem:[%s1503] sm:$0x40]
  %vm1505 = vcmask 1046534
  %v1506 = vsel %vm1505, %v1504, %v1502
  %s1507 = scalar_lea.vmem %s0, 221
  %v1508 = vld [vmem:[%s1507] sm:$0x80]
  %vm1509 = vcmask 1047559
  %v1510 = vsel %vm1509, %v1508, %v1506
  %1511 = vrot.lane.b32.xlu0 %v1510, 16
  %v1512 = vpop.permute.xlu0 %1511
  %vm1513 = vcmask 162944
  %1514 = vst.msk [vmem:[%s1] sm:$0xff] %vm1513, %v1512
  %s1515 = scalar_lea.vmem %s0, 260
  %v1516 = vld [vmem:[%s1515] sm:$0x1]
  %s1517 = scalar_lea.vmem %s0, 291
  %v1518 = vld [vmem:[%s1517] sm:$0x2]
  %vm1519 = vcmask 1041409
  %v1520 = vsel %vm1519, %v1518, %v1516
  %s1521 = scalar_lea.vmem %s0, 322
  %v1522 = vld [vmem:[%s1521] sm:$0x4]
  %vm1523 = vcmask 1042434
  %v1524 = vsel %vm1523, %v1522, %v1520
  %s1525 = scalar_lea.vmem %s0, 353
  %v1526 = vld [vmem:[%s1525] sm:$0x8]
  %vm1527 = vcmask 1043459
  %v1528 = vsel %vm1527, %v1526, %v1524
  %1529 = vrot.lane.b32.xlu0 %v1528, 16
  %v1530 = vpop.permute.xlu0 %1529
  %vm1531 = vcmask 162944
  %s1532 = scalar_lea.vmem %s1, 8
  %1533 = vst.msk [vmem:[%s1532] sm:$0xf] %vm1531, %v1530
  %s1534 = scalar_lea.vmem %s0, 3
  %v1535 = vld [vmem:[%s1534] sm:$0x1]
  %s1536 = scalar_lea.vmem %s0, 34
  %v1537 = vld [vmem:[%s1536] sm:$0x2]
  %vm1538 = vcmask 1041409
  %v1539 = vsel %vm1538, %v1537, %v1535
  %s1540 = scalar_lea.vmem %s0, 65
  %v1541 = vld [vmem:[%s1540] sm:$0x4]
  %vm1542 = vcmask 1042434
  %v1543 = vsel %vm1542, %v1541, %v1539
  %s1544 = scalar_lea.vmem %s0, 96
  %v1545 = vld [vmem:[%s1544] sm:$0x8]
  %vm1546 = vcmask 1043459
  %v1547 = vsel %vm1546, %v1545, %v1543
  %s1548 = scalar_lea.vmem %s0, 127
  %v1549 = vld [vmem:[%s1548] sm:$0x10]
  %vm1550 = vcmask 1044484
  %v1551 = vsel %vm1550, %v1549, %v1547
  %s1552 = scalar_lea.vmem %s0, 158
  %v1553 = vld [vmem:[%s1552] sm:$0x20]
  %vm1554 = vcmask 1045509
  %v1555 = vsel %vm1554, %v1553, %v1551
  %s1556 = scalar_lea.vmem %s0, 189
  %v1557 = vld [vmem:[%s1556] sm:$0x40]
  %vm1558 = vcmask 1046534
  %v1559 = vsel %vm1558, %v1557, %v1555
  %s1560 = scalar_lea.vmem %s0, 220
  %v1561 = vld [vmem:[%s1560] sm:$0x80]
  %vm1562 = vcmask 1047559
  %v1563 = vsel %vm1562, %v1561, %v1559
  %1564 = vrot.lane.b32.xlu0 %v1563, 12
  %v1565 = vpop.permute.xlu0 %1564
  %vm1566 = vcmask 130144
  %1567 = vst.msk [vmem:[%s1] sm:$0xff] %vm1566, %v1565
  %s1568 = scalar_lea.vmem %s0, 259
  %v1569 = vld [vmem:[%s1568] sm:$0x1]
  %s1570 = scalar_lea.vmem %s0, 290
  %v1571 = vld [vmem:[%s1570] sm:$0x2]
  %vm1572 = vcmask 1041409
  %v1573 = vsel %vm1572, %v1571, %v1569
  %s1574 = scalar_lea.vmem %s0, 321
  %v1575 = vld [vmem:[%s1574] sm:$0x4]
  %vm1576 = vcmask 1042434
  %v1577 = vsel %vm1576, %v1575, %v1573
  %s1578 = scalar_lea.vmem %s0, 352
  %v1579 = vld [vmem:[%s1578] sm:$0x8]
  %vm1580 = vcmask 1043459
  %v1581 = vsel %vm1580, %v1579, %v1577
  %1582 = vrot.lane.b32.xlu0 %v1581, 12
  %v1583 = vpop.permute.xlu0 %1582
  %vm1584 = vcmask 130144
  %s1585 = scalar_lea.vmem %s1, 8
  %1586 = vst.msk [vmem:[%s1585] sm:$0xf] %vm1584, %v1583
  %s1587 = scalar_lea.vmem %s0, 2
  %v1588 = vld [vmem:[%s1587] sm:$0x1]
  %s1589 = scalar_lea.vmem %s0, 33
  %v1590 = vld [vmem:[%s1589] sm:$0x2]
  %vm1591 = vcmask 1041409
  %v1592 = vsel %vm1591, %v1590, %v1588
  %s1593 = scalar_lea.vmem %s0, 64
  %v1594 = vld [vmem:[%s1593] sm:$0x4]
  %vm1595 = vcmask 1042434
  %v1596 = vsel %vm1595, %v1594, %v1592
  %s1597 = scalar_lea.vmem %s0, 95
  %v1598 = vld [vmem:[%s1597] sm:$0x8]
  %vm1599 = vcmask 1043459
  %v1600 = vsel %vm1599, %v1598, %v1596
  %s1601 = scalar_lea.vmem %s0, 126
  %v1602 = vld [vmem:[%s1601] sm:$0x10]
  %vm1603 = vcmask 1044484
  %v1604 = vsel %vm1603, %v1602, %v1600
  %s1605 = scalar_lea.vmem %s0, 157
  %v1606 = vld [vmem:[%s1605] sm:$0x20]
  %vm1607 = vcmask 1045509
  %v1608 = vsel %vm1607, %v1606, %v1604
  %s1609 = scalar_lea.vmem %s0, 188
  %v1610 = vld [vmem:[%s1609] sm:$0x40]
  %vm1611 = vcmask 1046534
  %v1612 = vsel %vm1611, %v1610, %v1608
  %s1613 = scalar_lea.vmem %s0, 219
  %v1614 = vld [vmem:[%s1613] sm:$0x80]
  %vm1615 = vcmask 1047559
  %v1616 = vsel %vm1615, %v1614, %v1612
  %1617 = vrot.lane.b32.xlu0 %v1616, 8
  %v1618 = vpop.permute.xlu0 %1617
  %vm1619 = vcmask 97344
  %1620 = vst.msk [vmem:[%s1] sm:$0xff] %vm1619, %v1618
  %s1621 = scalar_lea.vmem %s0, 258
  %v1622 = vld [vmem:[%s1621] sm:$0x1]
  %s1623 = scalar_lea.vmem %s0, 289
  %v1624 = vld [vmem:[%s1623] sm:$0x2]
  %vm1625 = vcmask 1041409
  %v1626 = vsel %vm1625, %v1624, %v1622
  %s1627 = scalar_lea.vmem %s0, 320
  %v1628 = vld [vmem:[%s1627] sm:$0x4]
  %vm1629 = vcmask 1042434
  %v1630 = vsel %vm1629, %v1628, %v1626
  %s1631 = scalar_lea.vmem %s0, 351
  %v1632 = vld [vmem:[%s1631] sm:$0x8]
  %vm1633 = vcmask 1043459
  %v1634 = vsel %vm1633, %v1632, %v1630
  %1635 = vrot.lane.b32.xlu0 %v1634, 8
  %v1636 = vpop.permute.xlu0 %1635
  %vm1637 = vcmask 97344
  %s1638 = scalar_lea.vmem %s1, 8
  %1639 = vst.msk [vmem:[%s1638] sm:$0xf] %vm1637, %v1636
  %s1640 = scalar_lea.vmem %s0, 1
  %v1641 = vld [vmem:[%s1640] sm:$0x1]
  %s1642 = scalar_lea.vmem %s0, 32
  %v1643 = vld [vmem:[%s1642] sm:$0x2]
  %vm1644 = vcmask 1041409
  %v1645 = vsel %vm1644, %v1643, %v1641
  %s1646 = scalar_lea.vmem %s0, 63
  %v1647 = vld [vmem:[%s1646] sm:$0x4]
  %vm1648 = vcmask 1042434
  %v1649 = vsel %vm1648, %v1647, %v1645
  %s1650 = scalar_lea.vmem %s0, 94
  %v1651 = vld [vmem:[%s1650] sm:$0x8]
  %vm1652 = vcmask 1043459
  %v1653 = vsel %vm1652, %v1651, %v1649
  %s1654 = scalar_lea.vmem %s0, 125
  %v1655 = vld [vmem:[%s1654] sm:$0x10]
  %vm1656 = vcmask 1044484
  %v1657 = vsel %vm1656, %v1655, %v1653
  %s1658 = scalar_lea.vmem %s0, 156
  %v1659 = vld [vmem:[%s1658] sm:$0x20]
  %vm1660 = vcmask 1045509
  %v1661 = vsel %vm1660, %v1659, %v1657
  %s1662 = scalar_lea.vmem %s0, 187
  %v1663 = vld [vmem:[%s1662] sm:$0x40]
  %vm1664 = vcmask 1046534
  %v1665 = vsel %vm1664, %v1663, %v1661
  %s1666 = scalar_lea.vmem %s0, 218
  %v1667 = vld [vmem:[%s1666] sm:$0x80]
  %vm1668 = vcmask 1047559
  %v1669 = vsel %vm1668, %v1667, %v1665
  %1670 = vrot.lane.b32.xlu0 %v1669, 4
  %v1671 = vpop.permute.xlu0 %1670
  %vm1672 = vcmask 64544
  %1673 = vst.msk [vmem:[%s1] sm:$0xff] %vm1672, %v1671
  %s1674 = scalar_lea.vmem %s0, 257
  %v1675 = vld [vmem:[%s1674] sm:$0x1]
  %s1676 = scalar_lea.vmem %s0, 288
  %v1677 = vld [vmem:[%s1676] sm:$0x2]
  %vm1678 = vcmask 1041409
  %v1679 = vsel %vm1678, %v1677, %v1675
  %s1680 = scalar_lea.vmem %s0, 319
  %v1681 = vld [vmem:[%s1680] sm:$0x4]
  %vm1682 = vcmask 1042434
  %v1683 = vsel %vm1682, %v1681, %v1679
  %s1684 = scalar_lea.vmem %s0, 350
  %v1685 = vld [vmem:[%s1684] sm:$0x8]
  %vm1686 = vcmask 1043459
  %v1687 = vsel %vm1686, %v1685, %v1683
  %1688 = vrot.lane.b32.xlu0 %v1687, 4
  %v1689 = vpop.permute.xlu0 %1688
  %vm1690 = vcmask 64544
  %s1691 = scalar_lea.vmem %s1, 8
  %1692 = vst.msk [vmem:[%s1691] sm:$0xf] %vm1690, %v1689

// kernel: cae_forward.3
$region0: #{cae_forward.3}
  #allocation0 [shape = 'u32[]', space=smem, size = 0x4, offset = 0x4, fixed_abs, tag = 'smem constant byte address 0x4 - core index']
  #allocation1 [shape = 'u32[144,128]{1,0:T(1,128)}', space=vmem, size = 0x12000, scoped, tag = 'internal scratch']
  %s0 = inlined_call_operand.vmem [shape: f32[2,32,128], index: 0, kind: input, shape index: {}]
  %s1 = inlined_call_operand.vmem [shape: f32[12,128], index: 1, kind: input, shape index: {}]
  %s2 = inlined_call_operand.vmem [shape: f32[3], index: 2, kind: input, shape index: {}]
  %s3 = inlined_call_operand.vmem [shape: f32[2,3,32,512], index: 3, kind: output, shape index: {}]
  %s4 = sld [smem:[#allocation0]]
  $region49: #{cae_forward.3} parent=0
    _
  %s6 = ssub.s32 1, %s4
  %s7 = scalar_select 0, %s6, %s4
  $region1: #{cae_forward.3} parent=0
    #allocation2 [shape = 'u8[512]{0}', space=smem, size = 0x200, scoped, tag = 'input window, operand 2, single buffered']
    #allocation3 [shape = 's32[2]{0}', space=sflag, size = 0x8, scoped, tag = 'scoped memory for cae_forward.3']
    %8 = vsyncpa [#allocation3], 0
    loop: start=0, step=1, limit=4
    $region2: #{cae_forward.3} parent=1 // loop_pre_header
      _
    $region3: #{cae_forward.3} parent=1 // loop_header
      %s10 = sphi 0, %s14
      %p11 = scmp.ge.s32.totalorder %s10, 4
      %s17 = sphi 0, %s29
      %s18 = sphi 0, %s25
      %s19 = sphi 0, %s17
      %s20 = sphi 0, %s18
      %s21 = sphi 0, %s19
      %s22 = sphi 0, %s20
      %s34 = sphi 0, %s36
      %s37 = sphi 0, %s34
      %s38 = sphi 0, %s37
      %s54 = sphi 0, %s38
      %s58 = sphi 0, %s58
      %s60 = sphi 0, %s58
      %s61 = sphi 0, %s60
      %s75 = sphi 0, %s61
      %s79 = sphi 0, %s79
      %s81 = sphi 0, %s79
      %s82 = sphi 0, %s81
      %s96 = sphi 0, %s82
      %s104 = sphi 0, %s106
      %s107 = sphi 0, %s104
      %s108 = sphi 0, %s107
      %s124 = sphi 0, %s108
    $region4: #{cae_forward.3} parent=1 // loop_header_branch
      %13 = sbr.rel (%p11) target = $region8
    $region5: #{cae_forward.3} parent=1 // loop_body
      %s15 = ssub.s32 %s10, 1
      %s16 = ssub.s32 %s10, 2
      %s23 = sadd.s32 1, %s18
      %p24 = scmp.ge.s32.totalorder %s23, 1
      %s25 = scalar_select %p24, 0, %s23
      %s26 = sadd.s32 1, %s17
      %s27 = scalar_select %p24, %s26, %s17
      %p28 = scmp.ge.s32.totalorder %s27, 2
      %s29 = scalar_select %p28, 0, %s27
      %s30 = ssub.s32 %s17, %s29
      %s31 = ssub.s32 %s18, %s25
      %s32 = sor.u32 %s30, %s31
      %p33 = scmp.eq.s32.totalorder %s32, 0
      %s35 = sadd.s32 %s34, 1
      %s36 = scalar_select %p33, %s34, %s35
      %p39 = pneg %p33
      %p40 = scmp.eq.s32.totalorder %s10, 1
      %p41 = por %p39, %p40
      %p42 = scmp.ne.s32.totalorder %s34, %s37
      %p43 = scmp.eq.s32.totalorder %s10, 0
      %p44 = por %p42, %p43
      %p45 = scmp.ne.s32.totalorder %s34, %s37
      %p46 = scmp.eq.s32.totalorder %s15, 1
      %p47 = por %p45, %p46
      %p48 = scmp.ne.s32.totalorder %s37, %s38
      %p49 = scmp.eq.s32.totalorder %s15, 0
      %p50 = por %p48, %p49
      %p51 = scmp.ne.s32.totalorder %s37, %s38
      %p52 = scmp.eq.s32.totalorder %s16, 1
      %p53 = por %p51, %p52
      %p55 = scmp.ne.s32.totalorder %s38, %s54
      %p56 = scmp.eq.s32.totalorder %s16, 0
      %p57 = por %p55, %p56
      %s59 = sadd.s32 %s58, 1
      %p62 = scmp.eq.s32.totalorder %s10, 1
      %p63 = scmp.ne.s32.totalorder %s58, %s60
      %p64 = scmp.eq.s32.totalorder %s10, 0
      %p65 = por %p63, %p64
      %p66 = scmp.ne.s32.totalorder %s58, %s60
      %p67 = scmp.eq.s32.totalorder %s15, 1
      %p68 = por %p66, %p67
      %p69 = scmp.ne.s32.totalorder %s60, %s61
      %p70 = scmp.eq.s32.totalorder %s15, 0
      %p71 = por %p69, %p70
      %p72 = scmp.ne.s32.totalorder %s60, %s61
      %p73 = scmp.eq.s32.totalorder %s16, 1
      %p74 = por %p72, %p73
      %p76 = scmp.ne.s32.totalorder %s61, %s75
      %p77 = scmp.eq.s32.totalorder %s16, 0
      %p78 = por %p76, %p77
      %s80 = sadd.s32 %s79, 1
      %p83 = scmp.eq.s32.totalorder %s10, 1
      %p84 = scmp.ne.s32.totalorder %s79, %s81
      %p85 = scmp.eq.s32.totalorder %s10, 0
      %p86 = por %p84, %p85
      %p87 = scmp.ne.s32.totalorder %s79, %s81
      %p88 = scmp.eq.s32.totalorder %s15, 1
      %p89 = por %p87, %p88
      %p90 = scmp.ne.s32.totalorder %s81, %s82
      %p91 = scmp.eq.s32.totalorder %s15, 0
      %p92 = por %p90, %p91
      %p93 = scmp.ne.s32.totalorder %s81, %s82
      %p94 = scmp.eq.s32.totalorder %s16, 1
      %p95 = por %p93, %p94
      %p97 = scmp.ne.s32.totalorder %s82, %s96
      %p98 = scmp.eq.s32.totalorder %s16, 0
      %p99 = por %p97, %p98
      %s100 = ssub.s32 %s17, %s29
      %s101 = ssub.s32 %s18, %s25
      %s102 = sor.u32 %s100, %s101
      %p103 = scmp.eq.s32.totalorder %s102, 0
      %s105 = sadd.s32 %s104, 1
      %s106 = scalar_select %p103, %s104, %s105
      %p109 = pneg %p103
      %p110 = scmp.eq.s32.totalorder %s10, 1
      %p111 = por %p109, %p110
      %p112 = scmp.ne.s32.totalorder %s104, %s107
      %p113 = scmp.eq.s32.totalorder %s10, 0
      %p114 = por %p112, %p113
      %p115 = scmp.ne.s32.totalorder %s104, %s107
      %p116 = scmp.eq.s32.totalorder %s15, 1
      %p117 = por %p115, %p116
      %p118 = scmp.ne.s32.totalorder %s107, %s108
      %p119 = scmp.eq.s32.totalorder %s15, 0
      %p120 = por %p118, %p119
      %p121 = scmp.ne.s32.totalorder %s107, %s108
      %p122 = scmp.eq.s32.totalorder %s16, 1
      %p123 = por %p121, %p122
      %p125 = scmp.ne.s32.totalorder %s108, %s124
      %p126 = scmp.eq.s32.totalorder %s16, 0
      %p127 = por %p125, %p126
      %p128 = scmp.le.s32.totalorder 1, %s10
      %p129 = scmp.lt.s32.totalorder %s10, 3
      %p130 = pnand %p128, %p129
      %p131 = pneg %p130
      // Predicated region
      $region9: #{cae_forward.3} parent=5 // pred_check
        _
      $region10: #{cae_forward.3} parent=5 // pred_check_branch
        %133 = sbr.rel (%p130) target = $region12
      $region11: #{cae_forward.3} parent=5 // pred_region
        %s134 = ssub.s32 %s10, 1
        // Predicated region
        $region13: #{cae_forward.3} parent=11 // pred_check
          %p135 = pneg %p71
        $region14: #{cae_forward.3} parent=11 // pred_check_branch
          %137 = sbr.rel (%p135) target = $region16
        $region15: #{cae_forward.3} parent=11 // pred_region
          _
        $region16: #{cae_forward.3} parent=11 // pred_fallthru
          _
        // Predicated region
        $region17: #{cae_forward.3} parent=11 // pred_check
          %p138 = pneg %p92
        $region18: #{cae_forward.3} parent=11 // pred_check_branch
          %140 = sbr.rel (%p138) target = $region20
        $region19: #{cae_forward.3} parent=11 // pred_region
          %s142 = ssub.s32 16, 16
          %143 = vsyncadd [#allocation3], %s142
          %s145 = sshll.u32 %s2, 4
          %s146 = int_to_ptr.vmem [resolvable:$true] %s145
          %148 = dma.vmem_to_smem %s146, 16, [#allocation2], [#allocation3]
        $region20: #{cae_forward.3} parent=11 // pred_fallthru
          _
      $region12: #{cae_forward.3} parent=5 // pred_fallthru
        _
      %p149 = scmp.lt.s32.totalorder %s10, 2
      // Predicated region
      $region21: #{cae_forward.3} parent=5 // pred_check
        %p150 = pneg %p149
      $region22: #{cae_forward.3} parent=5 // pred_check_branch
        %152 = sbr.rel (%p150) target = $region24
      $region23: #{cae_forward.3} parent=5 // pred_region
        // Predicated region
        $region25: #{cae_forward.3} parent=23 // pred_check
          %p153 = pneg %p44
        $region26: #{cae_forward.3} parent=23 // pred_check_branch
          %155 = sbr.rel (%p153) target = $region28
        $region27: #{cae_forward.3} parent=23 // pred_region
          %s156 = smul.u32 4, %s18
          %p157 = scmp.lt.s32.totalorder %s17, 1
          %s158 = scalar_select %p157, %s17, 1
          %p159 = scmp.lt.s32.totalorder %s156, 3
          %s160 = scalar_select %p159, %s156, 3
          %s161 = smul.addr %s158, 4
          %s162 = sadd.s32 %s160, %s161
          %s163 = smul.addr %s162, 8
          %s164 = scalar_lea.vmem %s0, %s163
          %s165 = smul.u32 4, %s18
        $region28: #{cae_forward.3} parent=23 // pred_fallthru
          _
      $region24: #{cae_forward.3} parent=5 // pred_fallthru
        _
      %p166 = scmp.le.s32.totalorder 1, %s10
      %p167 = scmp.lt.s32.totalorder %s10, 3
      %p168 = pnand %p166, %p167
      %p169 = pneg %p168
      // Predicated region
      $region29: #{cae_forward.3} parent=5 // pred_check
        _
      $region30: #{cae_forward.3} parent=5 // pred_check_branch
        %171 = sbr.rel (%p168) target = $region32
      $region31: #{cae_forward.3} parent=5 // pred_region
        %s172 = ssub.s32 %s10, 1
        // Predicated region
        $region33: #{cae_forward.3} parent=31 // pred_check
          %p173 = pneg %p92
        $region34: #{cae_forward.3} parent=31 // pred_check_branch
          %175 = sbr.rel (%p173) target = $region36
        $region35: #{cae_forward.3} parent=31 // pred_region
          %176 = dma.done [#allocation3], 16
        $region36: #{cae_forward.3} parent=31 // pred_fallthru
          _
        %177 = sfence
        %s178 = smul.u32 4, %s20
        %p179 = scmp.lt.s32.totalorder %s19, 1
        %s180 = scalar_select %p179, %s19, 1
        %p181 = scmp.lt.s32.totalorder %s178, 3
        %s182 = scalar_select %p181, %s178, 3
        %s183 = smul.addr %s180, 4
        %s184 = sadd.s32 %s182, %s183
        %s185 = smul.addr %s184, 8
        %s186 = scalar_lea.vmem %s0, %s185
        %p187 = pneg %p50
        %p188 = pneg %p47
        %p189 = pneg %p71
        %p190 = pneg %p68
        %p191 = pneg %p92
        %p192 = pneg %p89
        %p193 = pneg %p120
        %p194 = pneg %p117
        %s195 = smul.u32 4, %s20
        %p196 = scmp.lt.s32.totalorder %s19, 1
        %s197 = scalar_select %p196, %s19, 1
        %p198 = scmp.lt.s32.totalorder %s195, 3
        %s199 = scalar_select %p198, %s195, 3
        %s200 = smul.addr %s199, 4
        %s201 = smul.addr %s197, 48
        %s202 = sadd.s32 %s200, %s201
        %s203 = smul.addr %s202, 8
        %s204 = scalar_lea.vmem %s3, %s203
        %s205 = smul.u32 4, %s20
        %p206 = scmp.lt.s32.totalorder %s19, 1
        %s207 = scalar_select %p206, %s19, 1
        %p208 = scmp.lt.s32.totalorder %s205, 3
        %s209 = scalar_select %p208, %s205, 3
        %s210 = smul.addr %s207, 4
        %s211 = sadd.s32 %s209, %s210
        %s212 = smul.addr %s211, 8
        %s213 = scalar_lea.vmem %s0, %s212
        %s214 = smul.u32 4, %s20
        %s215 = smul.u32 4, %s20
        %p216 = scmp.lt.s32.totalorder %s19, 1
        %s217 = scalar_select %p216, %s19, 1
        %p218 = scmp.lt.s32.totalorder %s215, 3
        %s219 = scalar_select %p218, %s215, 3
        %s220 = smul.addr %s219, 4
        %s221 = smul.addr %s217, 48
        %s222 = sadd.s32 %s220, %s221
        %s223 = smul.addr %s222, 8
        %s224 = scalar_lea.vmem %s3, %s223
        %s225 = smul.u32 4, %s20
        %v226 = vld [vmem:[%s213] sm:$0xff]
        %v227 = vld [vmem:[%s213 + $0x8] sm:$0xff]
        %v228 = vld [vmem:[%s213 + $0x10] sm:$0xff]
        %v229 = vld [vmem:[%s213 + $0x18] sm:$0xff]
        %s230 = sld [smem:[#allocation2]]
        %v231 = vld [vmem:[%s1] sm:$0x1]
        %v232 = vlaneseq
        %v233 = vshrl.u32 %v232, 7
        %v234 = vsub.s32 0, %v233
        %v235 = vrot.slane %v231, %v234
        %v236 = vmul.f32 %v226, %v235
        %v237 = vmul.f32 %v227, %v235
        %v238 = vmul.f32 %v228, %v235
        %v239 = vmul.f32 %v229, %v235
        %v240 = vstv %s230
        %v241 = vadd.f32 %v236, %v240
        %v242 = vadd.f32 %v237, %v240
        %v243 = vadd.f32 %v238, %v240
        %v244 = vadd.f32 %v239, %v240
        %v245 = vmax.f32 %v241, 0.0
        %v246 = vmax.f32 %v242, 0.0
        %v247 = vmax.f32 %v243, 0.0
        %v248 = vmax.f32 %v244, 0.0
        %v249 = vmul.f32 %v245, 0.5
        %v250 = vmul.f32 %v246, 0.5
        %v251 = vmul.f32 %v247, 0.5
        %v252 = vmul.f32 %v248, 0.5
        %v253 = vtanh.pop %v249
        %v254 = vtanh.pop %v250
        %v255 = vtanh.pop %v251
        %v256 = vtanh.pop %v252
        %v257 = vmul.f32 %v253, 0.5
        %v258 = vmul.f32 %v254, 0.5
        %v259 = vmul.f32 %v255, 0.5
        %v260 = vmul.f32 %v256, 0.5
        %v261 = vadd.f32 %v257, 0.5
        %v262 = vadd.f32 %v258, 0.5
        %v263 = vadd.f32 %v259, 0.5
        %v264 = vadd.f32 %v260, 0.5
        %265 = vst [vmem:[%s224] sm:$0xff] %v261
        %266 = vst [vmem:[%s224 + $0x20] sm:$0xff] %v262
        %267 = vst [vmem:[%s224 + $0x40] sm:$0xff] %v263
        %268 = vst [vmem:[%s224 + $0x60] sm:$0xff] %v264
        %v269 = vld [vmem:[%s1 + $0x1] sm:$0x1]
        %v270 = vlaneseq
        %v271 = vshrl.u32 %v270, 7
        %v272 = vsub.s32 0, %v271
        %v273 = vrot.slane %v269, %v272
        %v274 = vmul.f32 %v226, %v273
        %v275 = vmul.f32 %v227, %v273
        %v276 = vmul.f32 %v228, %v273
        %v277 = vmul.f32 %v229, %v273
        %v278 = vadd.f32 %v274, %v240
        %v279 = vadd.f32 %v275, %v240
        %v280 = vadd.f32 %v276, %v240
        %v281 = vadd.f32 %v277, %v240
        %v282 = vmax.f32 %v278, 0.0
        %v283 = vmax.f32 %v279, 0.0
        %v284 = vmax.f32 %v280, 0.0
        %v285 = vmax.f32 %v281, 0.0
        %v286 = vmul.f32 %v282, 0.5
        %v287 = vmul.f32 %v283, 0.5
        %v288 = vmul.f32 %v284, 0.5
        %v289 = vmul.f32 %v285, 0.5
        %v290 = vtanh.pop %v286
        %v291 = vtanh.pop %v287
        %v292 = vtanh.pop %v288
        %v293 = vtanh.pop %v289
        %v294 = vmul.f32 %v290, 0.5
        %v295 = vmul.f32 %v291, 0.5
        %v296 = vmul.f32 %v292, 0.5
        %v297 = vmul.f32 %v293, 0.5
        %v298 = vadd.f32 %v294, 0.5
        %v299 = vadd.f32 %v295, 0.5
        %v300 = vadd.f32 %v296, 0.5
        %v301 = vadd.f32 %v297, 0.5
        %302 = vst [vmem:[%s224 + $0x8] sm:$0xff] %v298
        %303 = vst [vmem:[%s224 + $0x28] sm:$0xff] %v299
        %304 = vst [vmem:[%s224 + $0x48] sm:$0xff] %v300
        %305 = vst [vmem:[%s224 + $0x68] sm:$0xff] %v301
        %v306 = vld [vmem:[%s1 + $0x2] sm:$0x1]
        %v307 = vlaneseq
        %v308 = vshrl.u32 %v307, 7
        %v309 = vsub.s32 0, %v308
        %v310 = vrot.slane %v306, %v309
        %v311 = vmul.f32 %v226, %v310
        %v312 = vmul.f32 %v227, %v310
        %v313 = vmul.f32 %v228, %v310
        %v314 = vmul.f32 %v229, %v310
        %v315 = vadd.f32 %v311, %v240
        %v316 = vadd.f32 %v312, %v240
        %v317 = vadd.f32 %v313, %v240
        %v318 = vadd.f32 %v314, %v240
        %v319 = vmax.f32 %v315, 0.0
        %v320 = vmax.f32 %v316, 0.0
        %v321 = vmax.f32 %v317, 0.0
        %v322 = vmax.f32 %v318, 0.0
        %v323 = vmul.f32 %v319, 0.5
        %v324 = vmul.f32 %v320, 0.5
        %v325 = vmul.f32 %v321, 0.5
        %v326 = vmul.f32 %v322, 0.5
        %v327 = vtanh.pop %v323
        %v328 = vtanh.pop %v324
        %v329 = vtanh.pop %v325
        %v330 = vtanh.pop %v326
        %v331 = vmul.f32 %v327, 0.5
        %v332 = vmul.f32 %v328, 0.5
        %v333 = vmul.f32 %v329, 0.5
        %v334 = vmul.f32 %v330, 0.5
        %v335 = vadd.f32 %v331, 0.5
        %v336 = vadd.f32 %v332, 0.5
        %v337 = vadd.f32 %v333, 0.5
        %v338 = vadd.f32 %v334, 0.5
        %339 = vst [vmem:[%s224 + $0x10] sm:$0xff] %v335
        %340 = vst [vmem:[%s224 + $0x30] sm:$0xff] %v336
        %341 = vst [vmem:[%s224 + $0x50] sm:$0xff] %v337
        %342 = vst [vmem:[%s224 + $0x70] sm:$0xff] %v338
        %v343 = vld [vmem:[%s1 + $0x3] sm:$0x1]
        %v344 = vlaneseq
        %v345 = vshrl.u32 %v344, 7
        %v346 = vsub.s32 0, %v345
        %v347 = vrot.slane %v343, %v346
        %v348 = vmul.f32 %v226, %v347
        %v349 = vmul.f32 %v227, %v347
        %v350 = vmul.f32 %v228, %v347
        %v351 = vmul.f32 %v229, %v347
        %v352 = vadd.f32 %v348, %v240
        %v353 = vadd.f32 %v349, %v240
        %v354 = vadd.f32 %v350, %v240
        %v355 = vadd.f32 %v351, %v240
        %v356 = vmax.f32 %v352, 0.0
        %v357 = vmax.f32 %v353, 0.0
        %v358 = vmax.f32 %v354, 0.0
        %v359 = vmax.f32 %v355, 0.0
        %v360 = vmul.f32 %v356, 0.5
        %v361 = vmul.f32 %v357, 0.5
        %v362 = vmul.f32 %v358, 0.5
        %v363 = vmul.f32 %v359, 0.5
        %v364 = vtanh.pop %v360
        %v365 = vtanh.pop %v361
        %v366 = vtanh.pop %v362
        %v367 = vtanh.pop %v363
        %v368 = vmul.f32 %v364, 0.5
        %v369 = vmul.f32 %v365, 0.5
        %v370 = vmul.f32 %v366, 0.5
        %v371 = vmul.f32 %v367, 0.5
        %v372 = vadd.f32 %v368, 0.5
        %v373 = vadd.f32 %v369, 0.5
        %v374 = vadd.f32 %v370, 0.5
        %v375 = vadd.f32 %v371, 0.5
        %376 = vst [vmem:[%s224 + $0x18] sm:$0xff] %v372
        %377 = vst [vmem:[%s224 + $0x38] sm:$0xff] %v373
        %378 = vst [vmem:[%s224 + $0x58] sm:$0xff] %v374
        %379 = vst [vmem:[%s224 + $0x78] sm:$0xff] %v375
        %s380 = sld [smem:[#allocation2 + $0x1]]
        %v381 = vld [vmem:[%s1 + $0x4] sm:$0x1]
        %v382 = vlaneseq
        %v383 = vshrl.u32 %v382, 7
        %v384 = vsub.s32 0, %v383
        %v385 = vrot.slane %v381, %v384
        %v386 = vmul.f32 %v226, %v385
        %v387 = vmul.f32 %v227, %v385
        %v388 = vmul.f32 %v228, %v385
        %v389 = vmul.f32 %v229, %v385
        %v390 = vstv %s380
        %v391 = vadd.f32 %v386, %v390
        %v392 = vadd.f32 %v387, %v390
        %v393 = vadd.f32 %v388, %v390
        %v394 = vadd.f32 %v389, %v390
        %v395 = vmax.f32 %v391, 0.0
        %v396 = vmax.f32 %v392, 0.0
        %v397 = vmax.f32 %v393, 0.0
        %v398 = vmax.f32 %v394, 0.0
        %v399 = vmul.f32 %v395, 0.5
        %v400 = vmul.f32 %v396, 0.5
        %v401 = vmul.f32 %v397, 0.5
        %v402 = vmul.f32 %v398, 0.5
        %v403 = vtanh.pop %v399
        %v404 = vtanh.pop %v400
        %v405 = vtanh.pop %v401
        %v406 = vtanh.pop %v402
        %v407 = vmul.f32 %v403, 0.5
        %v408 = vmul.f32 %v404, 0.5
        %v409 = vmul.f32 %v405, 0.5
        %v410 = vmul.f32 %v406, 0.5
        %v411 = vadd.f32 %v407, 0.5
        %v412 = vadd.f32 %v408, 0.5
        %v413 = vadd.f32 %v409, 0.5
        %v414 = vadd.f32 %v410, 0.5
        %s415 = scalar_lea.vmem %s224, 128
        %416 = vst [vmem:[%s415] sm:$0xff] %v411
        %417 = vst [vmem:[%s415 + $0x20] sm:$0xff] %v412
        %418 = vst [vmem:[%s415 + $0x40] sm:$0xff] %v413
        %419 = vst [vmem:[%s415 + $0x60] sm:$0xff] %v414
        %v420 = vld [vmem:[%s1 + $0x5] sm:$0x1]
        %v421 = vlaneseq
        %v422 = vshrl.u32 %v421, 7
        %v423 = vsub.s32 0, %v422
        %v424 = vrot.slane %v420, %v423
        %v425 = vmul.f32 %v226, %v424
        %v426 = vmul.f32 %v227, %v424
        %v427 = vmul.f32 %v228, %v424
        %v428 = vmul.f32 %v229, %v424
        %v429 = vadd.f32 %v425, %v390
        %v430 = vadd.f32 %v426, %v390
        %v431 = vadd.f32 %v427, %v390
        %v432 = vadd.f32 %v428, %v390
        %v433 = vmax.f32 %v429, 0.0
        %v434 = vmax.f32 %v430, 0.0
        %v435 = vmax.f32 %v431, 0.0
        %v436 = vmax.f32 %v432, 0.0
        %v437 = vmul.f32 %v433, 0.5
        %v438 = vmul.f32 %v434, 0.5
        %v439 = vmul.f32 %v435, 0.5
        %v440 = vmul.f32 %v436, 0.5
        %v441 = vtanh.pop %v437
        %v442 = vtanh.pop %v438
        %v443 = vtanh.pop %v439
        %v444 = vtanh.pop %v440
        %v445 = vmul.f32 %v441, 0.5
        %v446 = vmul.f32 %v442, 0.5
        %v447 = vmul.f32 %v443, 0.5
        %v448 = vmul.f32 %v444, 0.5
        %v449 = vadd.f32 %v445, 0.5
        %v450 = vadd.f32 %v446, 0.5
        %v451 = vadd.f32 %v447, 0.5
        %v452 = vadd.f32 %v448, 0.5
        %453 = vst [vmem:[%s415 + $0x8] sm:$0xff] %v449
        %454 = vst [vmem:[%s415 + $0x28] sm:$0xff] %v450
        %455 = vst [vmem:[%s415 + $0x48] sm:$0xff] %v451
        %456 = vst [vmem:[%s415 + $0x68] sm:$0xff] %v452
        %v457 = vld [vmem:[%s1 + $0x6] sm:$0x1]
        %v458 = vlaneseq
        %v459 = vshrl.u32 %v458, 7
        %v460 = vsub.s32 0, %v459
        %v461 = vrot.slane %v457, %v460
        %v462 = vmul.f32 %v226, %v461
        %v463 = vmul.f32 %v227, %v461
        %v464 = vmul.f32 %v228, %v461
        %v465 = vmul.f32 %v229, %v461
        %v466 = vadd.f32 %v462, %v390
        %v467 = vadd.f32 %v463, %v390
        %v468 = vadd.f32 %v464, %v390
        %v469 = vadd.f32 %v465, %v390
        %v470 = vmax.f32 %v466, 0.0
        %v471 = vmax.f32 %v467, 0.0
        %v472 = vmax.f32 %v468, 0.0
        %v473 = vmax.f32 %v469, 0.0
        %v474 = vmul.f32 %v470, 0.5
        %v475 = vmul.f32 %v471, 0.5
        %v476 = vmul.f32 %v472, 0.5
        %v477 = vmul.f32 %v473, 0.5
        %v478 = vtanh.pop %v474
        %v479 = vtanh.pop %v475
        %v480 = vtanh.pop %v476
        %v481 = vtanh.pop %v477
        %v482 = vmul.f32 %v478, 0.5
        %v483 = vmul.f32 %v479, 0.5
        %v484 = vmul.f32 %v480, 0.5
        %v485 = vmul.f32 %v481, 0.5
        %v486 = vadd.f32 %v482, 0.5
        %v487 = vadd.f32 %v483, 0.5
        %v488 = vadd.f32 %v484, 0.5
        %v489 = vadd.f32 %v485, 0.5
        %490 = vst [vmem:[%s415 + $0x10] sm:$0xff] %v486
        %491 = vst [vmem:[%s415 + $0x30] sm:$0xff] %v487
        %492 = vst [vmem:[%s415 + $0x50] sm:$0xff] %v488
        %493 = vst [vmem:[%s415 + $0x70] sm:$0xff] %v489
        %v494 = vld [vmem:[%s1 + $0x7] sm:$0x1]
        %v495 = vlaneseq
        %v496 = vshrl.u32 %v495, 7
        %v497 = vsub.s32 0, %v496
        %v498 = vrot.slane %v494, %v497
        %v499 = vmul.f32 %v226, %v498
        %v500 = vmul.f32 %v227, %v498
        %v501 = vmul.f32 %v228, %v498
        %v502 = vmul.f32 %v229, %v498
        %v503 = vadd.f32 %v499, %v390
        %v504 = vadd.f32 %v500, %v390
        %v505 = vadd.f32 %v501, %v390
        %v506 = vadd.f32 %v502, %v390
        %v507 = vmax.f32 %v503, 0.0
        %v508 = vmax.f32 %v504, 0.0
        %v509 = vmax.f32 %v505, 0.0
        %v510 = vmax.f32 %v506, 0.0
        %v511 = vmul.f32 %v507, 0.5
        %v512 = vmul.f32 %v508, 0.5
        %v513 = vmul.f32 %v509, 0.5
        %v514 = vmul.f32 %v510, 0.5
        %v515 = vtanh.pop %v511
        %v516 = vtanh.pop %v512
        %v517 = vtanh.pop %v513
        %v518 = vtanh.pop %v514
        %v519 = vmul.f32 %v515, 0.5
        %v520 = vmul.f32 %v516, 0.5
        %v521 = vmul.f32 %v517, 0.5
        %v522 = vmul.f32 %v518, 0.5
        %v523 = vadd.f32 %v519, 0.5
        %v524 = vadd.f32 %v520, 0.5
        %v525 = vadd.f32 %v521, 0.5
        %v526 = vadd.f32 %v522, 0.5
        %527 = vst [vmem:[%s415 + $0x18] sm:$0xff] %v523
        %528 = vst [vmem:[%s415 + $0x38] sm:$0xff] %v524
        %529 = vst [vmem:[%s415 + $0x58] sm:$0xff] %v525
        %530 = vst [vmem:[%s415 + $0x78] sm:$0xff] %v526
        %s531 = sld [smem:[#allocation2 + $0x2]]
        %v532 = vld [vmem:[%s1 + $0x8] sm:$0x1]
        %v533 = vlaneseq
        %v534 = vshrl.u32 %v533, 7
        %v535 = vsub.s32 0, %v534
        %v536 = vrot.slane %v532, %v535
        %v537 = vmul.f32 %v226, %v536
        %v538 = vmul.f32 %v227, %v536
        %v539 = vmul.f32 %v228, %v536
        %v540 = vmul.f32 %v229, %v536
        %v541 = vstv %s531
        %v542 = vadd.f32 %v537, %v541
        %v543 = vadd.f32 %v538, %v541
        %v544 = vadd.f32 %v539, %v541
        %v545 = vadd.f32 %v540, %v541
        %v546 = vmax.f32 %v542, 0.0
        %v547 = vmax.f32 %v543, 0.0
        %v548 = vmax.f32 %v544, 0.0
        %v549 = vmax.f32 %v545, 0.0
        %v550 = vmul.f32 %v546, 0.5
        %v551 = vmul.f32 %v547, 0.5
        %v552 = vmul.f32 %v548, 0.5
        %v553 = vmul.f32 %v549, 0.5
        %v554 = vtanh.pop %v550
        %v555 = vtanh.pop %v551
        %v556 = vtanh.pop %v552
        %v557 = vtanh.pop %v553
        %v558 = vmul.f32 %v554, 0.5
        %v559 = vmul.f32 %v555, 0.5
        %v560 = vmul.f32 %v556, 0.5
        %v561 = vmul.f32 %v557, 0.5
        %v562 = vadd.f32 %v558, 0.5
        %v563 = vadd.f32 %v559, 0.5
        %v564 = vadd.f32 %v560, 0.5
        %v565 = vadd.f32 %v561, 0.5
        %s566 = scalar_lea.vmem %s224, 256
        %567 = vst [vmem:[%s566] sm:$0xff] %v562
        %568 = vst [vmem:[%s566 + $0x20] sm:$0xff] %v563
        %569 = vst [vmem:[%s566 + $0x40] sm:$0xff] %v564
        %570 = vst [vmem:[%s566 + $0x60] sm:$0xff] %v565
        %v571 = vld [vmem:[%s1 + $0x9] sm:$0x1]
        %v572 = vlaneseq
        %v573 = vshrl.u32 %v572, 7
        %v574 = vsub.s32 0, %v573
        %v575 = vrot.slane %v571, %v574
        %v576 = vmul.f32 %v226, %v575
        %v577 = vmul.f32 %v227, %v575
        %v578 = vmul.f32 %v228, %v575
        %v579 = vmul.f32 %v229, %v575
        %v580 = vadd.f32 %v576, %v541
        %v581 = vadd.f32 %v577, %v541
        %v582 = vadd.f32 %v578, %v541
        %v583 = vadd.f32 %v579, %v541
        %v584 = vmax.f32 %v580, 0.0
        %v585 = vmax.f32 %v581, 0.0
        %v586 = vmax.f32 %v582, 0.0
        %v587 = vmax.f32 %v583, 0.0
        %v588 = vmul.f32 %v584, 0.5
        %v589 = vmul.f32 %v585, 0.5
        %v590 = vmul.f32 %v586, 0.5
        %v591 = vmul.f32 %v587, 0.5
        %v592 = vtanh.pop %v588
        %v593 = vtanh.pop %v589
        %v594 = vtanh.pop %v590
        %v595 = vtanh.pop %v591
        %v596 = vmul.f32 %v592, 0.5
        %v597 = vmul.f32 %v593, 0.5
        %v598 = vmul.f32 %v594, 0.5
        %v599 = vmul.f32 %v595, 0.5
        %v600 = vadd.f32 %v596, 0.5
        %v601 = vadd.f32 %v597, 0.5
        %v602 = vadd.f32 %v598, 0.5
        %v603 = vadd.f32 %v599, 0.5
        %604 = vst [vmem:[%s566 + $0x8] sm:$0xff] %v600
        %605 = vst [vmem:[%s566 + $0x28] sm:$0xff] %v601
        %606 = vst [vmem:[%s566 + $0x48] sm:$0xff] %v602
        %607 = vst [vmem:[%s566 + $0x68] sm:$0xff] %v603
        %v608 = vld [vmem:[%s1 + $0xa] sm:$0x1]
        %v609 = vlaneseq
        %v610 = vshrl.u32 %v609, 7
        %v611 = vsub.s32 0, %v610
        %v612 = vrot.slane %v608, %v611
        %v613 = vmul.f32 %v226, %v612
        %v614 = vmul.f32 %v227, %v612
        %v615 = vmul.f32 %v228, %v612
        %v616 = vmul.f32 %v229, %v612
        %v617 = vadd.f32 %v613, %v541
        %v618 = vadd.f32 %v614, %v541
        %v619 = vadd.f32 %v615, %v541
        %v620 = vadd.f32 %v616, %v541
        %v621 = vmax.f32 %v617, 0.0
        %v622 = vmax.f32 %v618, 0.0
        %v623 = vmax.f32 %v619, 0.0
        %v624 = vmax.f32 %v620, 0.0
        %v625 = vmul.f32 %v621, 0.5
        %v626 = vmul.f32 %v622, 0.5
        %v627 = vmul.f32 %v623, 0.5
        %v628 = vmul.f32 %v624, 0.5
        %v629 = vtanh.pop %v625
        %v630 = vtanh.pop %v626
        %v631 = vtanh.pop %v627
        %v632 = vtanh.pop %v628
        %v633 = vmul.f32 %v629, 0.5
        %v634 = vmul.f32 %v630, 0.5
        %v635 = vmul.f32 %v631, 0.5
        %v636 = vmul.f32 %v632, 0.5
        %v637 = vadd.f32 %v633, 0.5
        %v638 = vadd.f32 %v634, 0.5
        %v639 = vadd.f32 %v635, 0.5
        %v640 = vadd.f32 %v636, 0.5
        %641 = vst [vmem:[%s566 + $0x10] sm:$0xff] %v637
        %642 = vst [vmem:[%s566 + $0x30] sm:$0xff] %v638
        %643 = vst [vmem:[%s566 + $0x50] sm:$0xff] %v639
        %644 = vst [vmem:[%s566 + $0x70] sm:$0xff] %v640
        %v645 = vld [vmem:[%s1 + $0xb] sm:$0x1]
        %v646 = vlaneseq
        %v647 = vshrl.u32 %v646, 7
        %v648 = vsub.s32 0, %v647
        %v649 = vrot.slane %v645, %v648
        %v650 = vmul.f32 %v226, %v649
        %v651 = vmul.f32 %v227, %v649
        %v652 = vmul.f32 %v228, %v649
        %v653 = vmul.f32 %v229, %v649
        %v654 = vadd.f32 %v650, %v541
        %v655 = vadd.f32 %v651, %v541
        %v656 = vadd.f32 %v652, %v541
        %v657 = vadd.f32 %v653, %v541
        %v658 = vmax.f32 %v654, 0.0
        %v659 = vmax.f32 %v655, 0.0
        %v660 = vmax.f32 %v656, 0.0
        %v661 = vmax.f32 %v657, 0.0
        %v662 = vmul.f32 %v658, 0.5
        %v663 = vmul.f32 %v659, 0.5
        %v664 = vmul.f32 %v660, 0.5
        %v665 = vmul.f32 %v661, 0.5
        %v666 = vtanh.pop %v662
        %v667 = vtanh.pop %v663
        %v668 = vtanh.pop %v664
        %v669 = vtanh.pop %v665
        %v670 = vmul.f32 %v666, 0.5
        %v671 = vmul.f32 %v667, 0.5
        %v672 = vmul.f32 %v668, 0.5
        %v673 = vmul.f32 %v669, 0.5
        %v674 = vadd.f32 %v670, 0.5
        %v675 = vadd.f32 %v671, 0.5
        %v676 = vadd.f32 %v672, 0.5
        %v677 = vadd.f32 %v673, 0.5
        %678 = vst [vmem:[%s566 + $0x18] sm:$0xff] %v674
        %679 = vst [vmem:[%s566 + $0x38] sm:$0xff] %v675
        %680 = vst [vmem:[%s566 + $0x58] sm:$0xff] %v676
        %681 = vst [vmem:[%s566 + $0x78] sm:$0xff] %v677
        %s682 = smul.u32 4, %s20
        %p683 = scmp.lt.s32.totalorder %s19, 1
        %s684 = scalar_select %p683, %s19, 1
        %p685 = scmp.lt.s32.totalorder %s682, 3
        %s686 = scalar_select %p685, %s682, 3
        %s687 = smul.addr %s686, 4
        %s688 = smul.addr %s684, 48
        %s689 = sadd.s32 %s687, %s688
        %s690 = smul.addr %s689, 8
        %s691 = scalar_lea.vmem %s3, %s690
        // Predicated region
        $region37: #{cae_forward.3} parent=31 // pred_check
          %p692 = pneg %p117
        $region38: #{cae_forward.3} parent=31 // pred_check_branch
          %694 = sbr.rel (%p692) target = $region40
        $region39: #{cae_forward.3} parent=31 // pred_region
          %s695 = smul.u32 4, %s20
        $region40: #{cae_forward.3} parent=31 // pred_fallthru
          _
      $region32: #{cae_forward.3} parent=5 // pred_fallthru
        _
      %p696 = scmp.le.s32.totalorder 2, %s10
      // Predicated region
      $region41: #{cae_forward.3} parent=5 // pred_check
        %p697 = pneg %p696
      $region42: #{cae_forward.3} parent=5 // pred_check_branch
        %699 = sbr.rel (%p697) target = $region44
      $region43: #{cae_forward.3} parent=5 // pred_region
        %s700 = ssub.s32 %s10, 2
        // Predicated region
        $region45: #{cae_forward.3} parent=43 // pred_check
          %p701 = pneg %p123
        $region46: #{cae_forward.3} parent=43 // pred_check_branch
          %703 = sbr.rel (%p701) target = $region48
        $region47: #{cae_forward.3} parent=43 // pred_region
          %s704 = smul.u32 4, %s22
          %p705 = scmp.lt.s32.totalorder %s21, 1
          %s706 = scalar_select %p705, %s21, 1
          %p707 = scmp.lt.s32.totalorder %s704, 3
          %s708 = scalar_select %p707, %s704, 3
          %s709 = smul.addr %s708, 4
          %s710 = smul.addr %s706, 48
          %s711 = sadd.s32 %s709, %s710
          %s712 = smul.addr %s711, 8
          %s713 = scalar_lea.vmem %s3, %s712
        $region48: #{cae_forward.3} parent=43 // pred_fallthru
          _
      $region44: #{cae_forward.3} parent=5 // pred_fallthru
        _
    $region6: #{cae_forward.3} parent=1 // loop_footer
      %s14 = sadd.s32 1, %s10
    $region7: #{cae_forward.3} parent=1 // loop_footer_branch
      %9 = sbr.rel target = $region3
    $region8: #{cae_forward.3} parent=1 // loop_exit
      _
    %714 = vsyncpa [#allocation3], 1
    %s715 = scalar_lea.sflag [#allocation3], 1
    %716 = vsyncpa %s715, 1

// kernel: cae_forward.2
$region0: #{cae_forward.2}
  #allocation0 [shape = 'u32[]', space=smem, size = 0x4, offset = 0x4, fixed_abs, tag = 'smem constant byte address 0x4 - core index']
  #allocation1 [shape = 'u32[144,128]{1,0:T(1,128)}', space=vmem, size = 0x12000, scoped, tag = 'internal scratch']
  #allocation2 [shape = 'f32[128,128]{1,0:T(8,128)}', space=vmem, size = 0x10000, scoped, tag = 'scratch operand']
  #allocation3 [shape = 'f32[1]{0:T(128)S(6)}', space=smem, size = 0x200, scoped, tag = 'scoped memory for cae_forward.2']
  %s0 = inlined_call_operand.hbm [shape: f32[2,3,128,128], index: 0, kind: input, shape index: {}]
  %s1 = inlined_call_operand.vmem [shape: f32[27], index: 1, kind: input, shape index: {}]
  %s2 = inlined_call_operand.<no memory space> [shape: f32[1], index: 2, kind: input, shape index: {}]
  %s3 = inlined_call_operand.vmem [shape: f32[2,32,128], index: 3, kind: output, shape index: {}]
  %s4 = sld [smem:[#allocation0]]
  $region53: #{cae_forward.2} parent=0
    _
  %s6 = ssub.s32 1, %s4
  %s7 = scalar_select 0, %s6, %s4
  %8 = sst [smem:[#allocation3]] %s2
  $region1: #{cae_forward.2} parent=0
    #allocation4 [shape = 'u8[393216]{0}', space=vmem, size = 0x60000, scoped, tag = 'input window, operand 0']
    #allocation5 [shape = 's32[2]{0}', space=sflag, size = 0x8, scoped, tag = 'scoped memory for cae_forward.2']
    #allocation6 [shape = 's32[2]{0}', space=sflag, size = 0x8, scoped, tag = 'scoped memory for cae_forward.2']
    #allocation7 [shape = 'u8[512]{0}', space=smem, size = 0x200, scoped, tag = 'input window, operand 1, single buffered']
    %9 = vsyncpa [#allocation5], 0
    %s10 = scalar_lea.sflag [#allocation5], 1
    %11 = vsyncpa %s10, 0
    %12 = vsyncpa [#allocation6], 0
    loop: start=0, step=1, limit=4
    $region2: #{cae_forward.2} parent=1 // loop_pre_header
      _
    $region3: #{cae_forward.2} parent=1 // loop_header
      %s14 = sphi 0, %s18
      %p15 = scmp.ge.s32.totalorder %s14, 4
      %s24 = sphi 0, %s26
      %s27 = sphi 0, %s24
      %s28 = sphi 0, %s27
      %s44 = sphi 0, %s28
      %s48 = sphi 0, %s48
      %s50 = sphi 0, %s48
      %s51 = sphi 0, %s50
      %s65 = sphi 0, %s51
      %s69 = sphi 0, %s69
      %s71 = sphi 0, %s69
      %s72 = sphi 0, %s71
      %s86 = sphi 0, %s72
      %s92 = sphi 0, %s94
      %s95 = sphi 0, %s92
      %s96 = sphi 0, %s95
      %s112 = sphi 0, %s96
    $region4: #{cae_forward.2} parent=1 // loop_header_branch
      %17 = sbr.rel (%p15) target = $region8
    $region5: #{cae_forward.2} parent=1 // loop_body
      %s19 = ssub.s32 %s14, 1
      %s20 = ssub.s32 %s14, 2
      %s21 = sadd.s32 %s14, 1
      %s22 = ssub.s32 %s14, %s21
      %p23 = scmp.eq.s32.totalorder %s22, 0
      %s25 = sadd.s32 %s24, 1
      %s26 = scalar_select %p23, %s24, %s25
      %p29 = pneg %p23
      %p30 = scmp.eq.s32.totalorder %s14, 1
      %p31 = por %p29, %p30
      %p32 = scmp.ne.s32.totalorder %s24, %s27
      %p33 = scmp.eq.s32.totalorder %s14, 0
      %p34 = por %p32, %p33
      %p35 = scmp.ne.s32.totalorder %s24, %s27
      %p36 = scmp.eq.s32.totalorder %s19, 1
      %p37 = por %p35, %p36
      %p38 = scmp.ne.s32.totalorder %s27, %s28
      %p39 = scmp.eq.s32.totalorder %s19, 0
      %p40 = por %p38, %p39
      %p41 = scmp.ne.s32.totalorder %s27, %s28
      %p42 = scmp.eq.s32.totalorder %s20, 1
      %p43 = por %p41, %p42
      %p45 = scmp.ne.s32.totalorder %s28, %s44
      %p46 = scmp.eq.s32.totalorder %s20, 0
      %p47 = por %p45, %p46
      %s49 = sadd.s32 %s48, 1
      %p52 = scmp.eq.s32.totalorder %s14, 1
      %p53 = scmp.ne.s32.totalorder %s48, %s50
      %p54 = scmp.eq.s32.totalorder %s14, 0
      %p55 = por %p53, %p54
      %p56 = scmp.ne.s32.totalorder %s48, %s50
      %p57 = scmp.eq.s32.totalorder %s19, 1
      %p58 = por %p56, %p57
      %p59 = scmp.ne.s32.totalorder %s50, %s51
      %p60 = scmp.eq.s32.totalorder %s19, 0
      %p61 = por %p59, %p60
      %p62 = scmp.ne.s32.totalorder %s50, %s51
      %p63 = scmp.eq.s32.totalorder %s20, 1
      %p64 = por %p62, %p63
      %p66 = scmp.ne.s32.totalorder %s51, %s65
      %p67 = scmp.eq.s32.totalorder %s20, 0
      %p68 = por %p66, %p67
      %s70 = sadd.s32 %s69, 1
      %p73 = scmp.eq.s32.totalorder %s14, 1
      %p74 = scmp.ne.s32.totalorder %s69, %s71
      %p75 = scmp.eq.s32.totalorder %s14, 0
      %p76 = por %p74, %p75
      %p77 = scmp.ne.s32.totalorder %s69, %s71
      %p78 = scmp.eq.s32.totalorder %s19, 1
      %p79 = por %p77, %p78
      %p80 = scmp.ne.s32.totalorder %s71, %s72
      %p81 = scmp.eq.s32.totalorder %s19, 0
      %p82 = por %p80, %p81
      %p83 = scmp.ne.s32.totalorder %s71, %s72
      %p84 = scmp.eq.s32.totalorder %s20, 1
      %p85 = por %p83, %p84
      %p87 = scmp.ne.s32.totalorder %s72, %s86
      %p88 = scmp.eq.s32.totalorder %s20, 0
      %p89 = por %p87, %p88
      %s90 = ssub.s32 %s14, %s21
      %p91 = scmp.eq.s32.totalorder %s90, 0
      %s93 = sadd.s32 %s92, 1
      %s94 = scalar_select %p91, %s92, %s93
      %p97 = pneg %p91
      %p98 = scmp.eq.s32.totalorder %s14, 1
      %p99 = por %p97, %p98
      %p100 = scmp.ne.s32.totalorder %s92, %s95
      %p101 = scmp.eq.s32.totalorder %s14, 0
      %p102 = por %p100, %p101
      %p103 = scmp.ne.s32.totalorder %s92, %s95
      %p104 = scmp.eq.s32.totalorder %s19, 1
      %p105 = por %p103, %p104
      %p106 = scmp.ne.s32.totalorder %s95, %s96
      %p107 = scmp.eq.s32.totalorder %s19, 0
      %p108 = por %p106, %p107
      %p109 = scmp.ne.s32.totalorder %s95, %s96
      %p110 = scmp.eq.s32.totalorder %s20, 1
      %p111 = por %p109, %p110
      %p113 = scmp.ne.s32.totalorder %s96, %s112
      %p114 = scmp.eq.s32.totalorder %s20, 0
      %p115 = por %p113, %p114
      %p116 = scmp.le.s32.totalorder 1, %s14
      %p117 = scmp.lt.s32.totalorder %s14, 3
      %p118 = pnand %p116, %p117
      %p119 = pneg %p118
      // Predicated region
      $region9: #{cae_forward.2} parent=5 // pred_check
        _
      $region10: #{cae_forward.2} parent=5 // pred_check_branch
        %121 = sbr.rel (%p118) target = $region12
      $region11: #{cae_forward.2} parent=5 // pred_region
        %s122 = ssub.s32 %s14, 1
        // Predicated region
        $region13: #{cae_forward.2} parent=11 // pred_check
          %p123 = pneg %p61
        $region14: #{cae_forward.2} parent=11 // pred_check_branch
          %125 = sbr.rel (%p123) target = $region16
        $region15: #{cae_forward.2} parent=11 // pred_region
          %s127 = ssub.s32 16, 16
          %128 = vsyncadd [#allocation6], %s127
          %s130 = sshll.u32 %s1, 4
          %s131 = int_to_ptr.vmem [resolvable:$true] %s130
          %133 = dma.vmem_to_smem %s131, 16, [#allocation7], [#allocation6]
        $region16: #{cae_forward.2} parent=11 // pred_fallthru
          _
        // Predicated region
        $region17: #{cae_forward.2} parent=11 // pred_check
          %p134 = pneg %p82
        $region18: #{cae_forward.2} parent=11 // pred_check_branch
          %136 = sbr.rel (%p134) target = $region20
        $region19: #{cae_forward.2} parent=11 // pred_region
          _
        $region20: #{cae_forward.2} parent=11 // pred_fallthru
          _
      $region12: #{cae_forward.2} parent=5 // pred_fallthru
        _
      %p137 = scmp.lt.s32.totalorder %s14, 2
      // Predicated region
      $region21: #{cae_forward.2} parent=5 // pred_check
        %p138 = pneg %p137
      $region22: #{cae_forward.2} parent=5 // pred_check_branch
        %140 = sbr.rel (%p138) target = $region24
      $region23: #{cae_forward.2} parent=5 // pred_region
        // Predicated region
        $region25: #{cae_forward.2} parent=23 // pred_check
          %p141 = pneg %p34
        $region26: #{cae_forward.2} parent=23 // pred_check_branch
          %143 = sbr.rel (%p141) target = $region28
        $region27: #{cae_forward.2} parent=23 // pred_region
          %s144 = sand.u32 %s24, 1
          %s145 = scalar_lea.sflag [#allocation5], %s144
          %s146 = sand.u32 %s24, 1
          %s147 = smul.addr %s146, 384
          %s148 = scalar_lea.vmem [#allocation4], %s147
          %s150 = ssub.s32 6144, 6144
          %151 = vsyncadd %s145, %s150
          %s152 = smul.addr %s14, 48
          %s153 = smul.addr %s152, 128
          %s154 = scalar_lea.hbm %s0, %s153
          %s155 = sshll.u32 %s148, 4
          %s156 = int_to_ptr.vmem [resolvable:$true] %s155
          %161 = dma.hbm_to_vmem [thread:$0]  %s154, 6144, %s156, %s145, 128, 128, 8
        $region28: #{cae_forward.2} parent=23 // pred_fallthru
          _
      $region24: #{cae_forward.2} parent=5 // pred_fallthru
        _
      %p162 = scmp.le.s32.totalorder 1, %s14
      %p163 = scmp.lt.s32.totalorder %s14, 3
      %p164 = pnand %p162, %p163
      %p165 = pneg %p164
      // Predicated region
      $region29: #{cae_forward.2} parent=5 // pred_check
        _
      $region30: #{cae_forward.2} parent=5 // pred_check_branch
        %167 = sbr.rel (%p164) target = $region32
      $region31: #{cae_forward.2} parent=5 // pred_region
        %s168 = ssub.s32 %s14, 1
        %s169 = sand.u32 %s27, 1
        %s170 = scalar_lea.sflag [#allocation5], %s169
        %s171 = sand.u32 %s27, 1
        %s172 = smul.addr %s171, 384
        %s173 = scalar_lea.vmem [#allocation4], %s172
        // Predicated region
        $region33: #{cae_forward.2} parent=31 // pred_check
          %p174 = pneg %p40
        $region34: #{cae_forward.2} parent=31 // pred_check_branch
          %176 = sbr.rel (%p174) target = $region36
        $region35: #{cae_forward.2} parent=31 // pred_region
          %177 = dma.done %s170, 6144
        $region36: #{cae_forward.2} parent=31 // pred_fallthru
          _
        // Predicated region
        $region37: #{cae_forward.2} parent=31 // pred_check
          %p178 = pneg %p61
        $region38: #{cae_forward.2} parent=31 // pred_check_branch
          %180 = sbr.rel (%p178) target = $region40
        $region39: #{cae_forward.2} parent=31 // pred_region
          %181 = dma.done [#allocation6], 16
        $region40: #{cae_forward.2} parent=31 // pred_fallthru
          _
        %182 = sfence
        %s183 = sand.u32 %s27, 1
        %s184 = scalar_lea.sflag [#allocation5], %s183
        %s185 = sand.u32 %s27, 1
        %s186 = smul.addr %s185, 384
        %s187 = scalar_lea.vmem [#allocation4], %s186
        %p188 = pneg %p40
        %p189 = pneg %p37
        %p190 = pneg %p61
        %p191 = pneg %p58
        %p192 = pneg %p82
        %p193 = pneg %p79
        %p194 = pneg %p108
        %p195 = pneg %p105
        %p196 = scmp.lt.s32.totalorder %s19, 1
        %s197 = scalar_select %p196, %s19, 1
        %s198 = smul.addr %s197, 4
        %s199 = smul.addr %s198, 8
        %s200 = scalar_lea.vmem %s3, %s199
        %p201 = scmp.lt.s32.totalorder %s19, 1
        %s202 = scalar_select %p201, %s19, 1
        %s203 = smul.addr %s202, 4
        %s204 = smul.addr %s203, 8
        %s205 = scalar_lea.vmem %s3, %s204
        %v206 = vld [vmem:[%s173] sm:$0xff]
        %v207 = vld [vmem:[%s173 + $0x8] sm:$0xff]
        %v208 = vld [vmem:[%s173 + $0x10] sm:$0xff]
        %v209 = vld [vmem:[%s173 + $0x18] sm:$0xff]
        %v210 = vld [vmem:[%s173 + $0x20] sm:$0xff]
        %v211 = vld [vmem:[%s173 + $0x28] sm:$0xff]
        %v212 = vld [vmem:[%s173 + $0x30] sm:$0xff]
        %v213 = vld [vmem:[%s173 + $0x38] sm:$0xff]
        %v214 = vld [vmem:[%s173 + $0x40] sm:$0xff]
        %v215 = vld [vmem:[%s173 + $0x48] sm:$0xff]
        %v216 = vld [vmem:[%s173 + $0x50] sm:$0xff]
        %v217 = vld [vmem:[%s173 + $0x58] sm:$0xff]
        %v218 = vld [vmem:[%s173 + $0x60] sm:$0xff]
        %v219 = vld [vmem:[%s173 + $0x68] sm:$0xff]
        %v220 = vld [vmem:[%s173 + $0x70] sm:$0xff]
        %v221 = vld [vmem:[%s173 + $0x78] sm:$0xff]
        %238 = vrot.lane.b32.xlu0 %v206, 1
        %v239 = vpop.permute.xlu0 %238
        %240 = vrot.lane.b32.xlu0 %v207, 1
        %v241 = vpop.permute.xlu0 %240
        %242 = vrot.lane.b32.xlu0 %v208, 1
        %v243 = vpop.permute.xlu0 %242
        %244 = vrot.lane.b32.xlu0 %v209, 1
        %v245 = vpop.permute.xlu0 %244
        %246 = vrot.lane.b32.xlu0 %v210, 1
        %v247 = vpop.permute.xlu0 %246
        %248 = vrot.lane.b32.xlu0 %v211, 1
        %v249 = vpop.permute.xlu0 %248
        %250 = vrot.lane.b32.xlu0 %v212, 1
        %v251 = vpop.permute.xlu0 %250
        %252 = vrot.lane.b32.xlu0 %v213, 1
        %v253 = vpop.permute.xlu0 %252
        %254 = vrot.lane.b32.xlu0 %v214, 1
        %v255 = vpop.permute.xlu0 %254
        %256 = vrot.lane.b32.xlu0 %v215, 1
        %v257 = vpop.permute.xlu0 %256
        %258 = vrot.lane.b32.xlu0 %v216, 1
        %v259 = vpop.permute.xlu0 %258
        %260 = vrot.lane.b32.xlu0 %v217, 1
        %v261 = vpop.permute.xlu0 %260
        %262 = vrot.lane.b32.xlu0 %v218, 1
        %v263 = vpop.permute.xlu0 %262
        %264 = vrot.lane.b32.xlu0 %v219, 1
        %v265 = vpop.permute.xlu0 %264
        %266 = vrot.lane.b32.xlu0 %v220, 1
        %v267 = vpop.permute.xlu0 %266
        %268 = vrot.lane.b32.xlu0 %v221, 1
        %v269 = vpop.permute.xlu0 %268
        %vm286 = vcmask 7168
        %v287 = vsel %vm286, 0.0, %v239
        %v288 = vsel %vm286, 0.0, %v241
        %v289 = vsel %vm286, 0.0, %v243
        %v290 = vsel %vm286, 0.0, %v245
        %v291 = vsel %vm286, 0.0, %v247
        %v292 = vsel %vm286, 0.0, %v249
        %v293 = vsel %vm286, 0.0, %v251
        %v294 = vsel %vm286, 0.0, %v253
        %v295 = vsel %vm286, 0.0, %v255
        %v296 = vsel %vm286, 0.0, %v257
        %v297 = vsel %vm286, 0.0, %v259
        %v298 = vsel %vm286, 0.0, %v261
        %v299 = vsel %vm286, 0.0, %v263
        %v300 = vsel %vm286, 0.0, %v265
        %v301 = vsel %vm286, 0.0, %v267
        %v302 = vsel %vm286, 0.0, %v269
        %303 = vrot.lane.b32.xlu0 %v206, 127
        %v304 = vpop.permute.xlu0 %303
        %305 = vrot.lane.b32.xlu0 %v207, 127
        %v306 = vpop.permute.xlu0 %305
        %307 = vrot.lane.b32.xlu0 %v208, 127
        %v308 = vpop.permute.xlu0 %307
        %309 = vrot.lane.b32.xlu0 %v209, 127
        %v310 = vpop.permute.xlu0 %309
        %311 = vrot.lane.b32.xlu0 %v210, 127
        %v312 = vpop.permute.xlu0 %311
        %313 = vrot.lane.b32.xlu0 %v211, 127
        %v314 = vpop.permute.xlu0 %313
        %315 = vrot.lane.b32.xlu0 %v212, 127
        %v316 = vpop.permute.xlu0 %315
        %317 = vrot.lane.b32.xlu0 %v213, 127
        %v318 = vpop.permute.xlu0 %317
        %319 = vrot.lane.b32.xlu0 %v214, 127
        %v320 = vpop.permute.xlu0 %319
        %321 = vrot.lane.b32.xlu0 %v215, 127
        %v322 = vpop.permute.xlu0 %321
        %323 = vrot.lane.b32.xlu0 %v216, 127
        %v324 = vpop.permute.xlu0 %323
        %325 = vrot.lane.b32.xlu0 %v217, 127
        %v326 = vpop.permute.xlu0 %325
        %327 = vrot.lane.b32.xlu0 %v218, 127
        %v328 = vpop.permute.xlu0 %327
        %329 = vrot.lane.b32.xlu0 %v219, 127
        %v330 = vpop.permute.xlu0 %329
        %331 = vrot.lane.b32.xlu0 %v220, 127
        %v332 = vpop.permute.xlu0 %331
        %333 = vrot.lane.b32.xlu0 %v221, 127
        %v334 = vpop.permute.xlu0 %333
        %vm351 = vcmask 1039360
        %v352 = vsel %vm351, %v304, 0.0
        %v353 = vsel %vm351, %v306, 0.0
        %v354 = vsel %vm351, %v308, 0.0
        %v355 = vsel %vm351, %v310, 0.0
        %v356 = vsel %vm351, %v312, 0.0
        %v357 = vsel %vm351, %v314, 0.0
        %v358 = vsel %vm351, %v316, 0.0
        %v359 = vsel %vm351, %v318, 0.0
        %v360 = vsel %vm351, %v320, 0.0
        %v361 = vsel %vm351, %v322, 0.0
        %v362 = vsel %vm351, %v324, 0.0
        %v363 = vsel %vm351, %v326, 0.0
        %v364 = vsel %vm351, %v328, 0.0
        %v365 = vsel %vm351, %v330, 0.0
        %v366 = vsel %vm351, %v332, 0.0
        %v367 = vsel %vm351, %v334, 0.0
        %s368 = sld [smem:[#allocation7]]
        %v369 = vstv %s368
        %v370 = vmul.f32 %v287, %v369
        %v371 = vmul.f32 %v288, %v369
        %v372 = vmul.f32 %v289, %v369
        %v373 = vmul.f32 %v290, %v369
        %v374 = vmul.f32 %v291, %v369
        %v375 = vmul.f32 %v292, %v369
        %v376 = vmul.f32 %v293, %v369
        %v377 = vmul.f32 %v294, %v369
        %v378 = vmul.f32 %v295, %v369
        %v379 = vmul.f32 %v296, %v369
        %v380 = vmul.f32 %v297, %v369
        %v381 = vmul.f32 %v298, %v369
        %v382 = vmul.f32 %v299, %v369
        %v383 = vmul.f32 %v300, %v369
        %v384 = vmul.f32 %v301, %v369
        %v385 = vmul.f32 %v302, %v369
        %v386 = vadd.f32 %v370, 0.0
        %v387 = vadd.f32 %v371, 0.0
        %v388 = vadd.f32 %v372, 0.0
        %v389 = vadd.f32 %v373, 0.0
        %v390 = vadd.f32 %v374, 0.0
        %v391 = vadd.f32 %v375, 0.0
        %v392 = vadd.f32 %v376, 0.0
        %v393 = vadd.f32 %v377, 0.0
        %v394 = vadd.f32 %v378, 0.0
        %v395 = vadd.f32 %v379, 0.0
        %v396 = vadd.f32 %v380, 0.0
        %v397 = vadd.f32 %v381, 0.0
        %v398 = vadd.f32 %v382, 0.0
        %v399 = vadd.f32 %v383, 0.0
        %v400 = vadd.f32 %v384, 0.0
        %v401 = vadd.f32 %v385, 0.0
        %s402 = sld [smem:[#allocation7 + $0x1]]
        %v403 = vstv %s402
        %v404 = vmul.f32 %v206, %v403
        %v405 = vmul.f32 %v207, %v403
        %v406 = vmul.f32 %v208, %v403
        %v407 = vmul.f32 %v209, %v403
        %v408 = vmul.f32 %v210, %v403
        %v409 = vmul.f32 %v211, %v403
        %v410 = vmul.f32 %v212, %v403
        %v411 = vmul.f32 %v213, %v403
        %v412 = vmul.f32 %v214, %v403
        %v413 = vmul.f32 %v215, %v403
        %v414 = vmul.f32 %v216, %v403
        %v415 = vmul.f32 %v217, %v403
        %v416 = vmul.f32 %v218, %v403
        %v417 = vmul.f32 %v219, %v403
        %v418 = vmul.f32 %v220, %v403
        %v419 = vmul.f32 %v221, %v403
        %v420 = vadd.f32 %v386, %v404
        %v421 = vadd.f32 %v387, %v405
        %v422 = vadd.f32 %v388, %v406
        %v423 = vadd.f32 %v389, %v407
        %v424 = vadd.f32 %v390, %v408
        %v425 = vadd.f32 %v391, %v409
        %v426 = vadd.f32 %v392, %v410
        %v427 = vadd.f32 %v393, %v411
        %v428 = vadd.f32 %v394, %v412
        %v429 = vadd.f32 %v395, %v413
        %v430 = vadd.f32 %v396, %v414
        %v431 = vadd.f32 %v397, %v415
        %v432 = vadd.f32 %v398, %v416
        %v433 = vadd.f32 %v399, %v417
        %v434 = vadd.f32 %v400, %v418
        %v435 = vadd.f32 %v401, %v419
        %s436 = sld [smem:[#allocation7 + $0x2]]
        %v437 = vstv %s436
        %v438 = vmul.f32 %v352, %v437
        %v439 = vmul.f32 %v353, %v437
        %v440 = vmul.f32 %v354, %v437
        %v441 = vmul.f32 %v355, %v437
        %v442 = vmul.f32 %v356, %v437
        %v443 = vmul.f32 %v357, %v437
        %v444 = vmul.f32 %v358, %v437
        %v445 = vmul.f32 %v359, %v437
        %v446 = vmul.f32 %v360, %v437
        %v447 = vmul.f32 %v361, %v437
        %v448 = vmul.f32 %v362, %v437
        %v449 = vmul.f32 %v363, %v437
        %v450 = vmul.f32 %v364, %v437
        %v451 = vmul.f32 %v365, %v437
        %v452 = vmul.f32 %v366, %v437
        %v453 = vmul.f32 %v367, %v437
        %v454 = vadd.f32 %v420, %v438
        %v455 = vadd.f32 %v421, %v439
        %v456 = vadd.f32 %v422, %v440
        %v457 = vadd.f32 %v423, %v441
        %v458 = vadd.f32 %v424, %v442
        %v459 = vadd.f32 %v425, %v443
        %v460 = vadd.f32 %v426, %v444
        %v461 = vadd.f32 %v427, %v445
        %v462 = vadd.f32 %v428, %v446
        %v463 = vadd.f32 %v429, %v447
        %v464 = vadd.f32 %v430, %v448
        %v465 = vadd.f32 %v431, %v449
        %v466 = vadd.f32 %v432, %v450
        %v467 = vadd.f32 %v433, %v451
        %v468 = vadd.f32 %v434, %v452
        %v469 = vadd.f32 %v435, %v453
        %s470 = sld [smem:[#allocation7 + $0x3]]
        %v471 = vstv %s470
        %v472 = vmul.f32 %v287, %v471
        %v473 = vmul.f32 %v288, %v471
        %v474 = vmul.f32 %v289, %v471
        %v475 = vmul.f32 %v290, %v471
        %v476 = vmul.f32 %v291, %v471
        %v477 = vmul.f32 %v292, %v471
        %v478 = vmul.f32 %v293, %v471
        %v479 = vmul.f32 %v294, %v471
        %v480 = vmul.f32 %v295, %v471
        %v481 = vmul.f32 %v296, %v471
        %v482 = vmul.f32 %v297, %v471
        %v483 = vmul.f32 %v298, %v471
        %v484 = vmul.f32 %v299, %v471
        %v485 = vmul.f32 %v300, %v471
        %v486 = vmul.f32 %v301, %v471
        %v487 = vmul.f32 %v302, %v471
        %v488 = vadd.f32 %v472, 0.0
        %v489 = vadd.f32 %v473, 0.0
        %v490 = vadd.f32 %v474, 0.0
        %v491 = vadd.f32 %v475, 0.0
        %v492 = vadd.f32 %v476, 0.0
        %v493 = vadd.f32 %v477, 0.0
        %v494 = vadd.f32 %v478, 0.0
        %v495 = vadd.f32 %v479, 0.0
        %v496 = vadd.f32 %v480, 0.0
        %v497 = vadd.f32 %v481, 0.0
        %v498 = vadd.f32 %v482, 0.0
        %v499 = vadd.f32 %v483, 0.0
        %v500 = vadd.f32 %v484, 0.0
        %v501 = vadd.f32 %v485, 0.0
        %v502 = vadd.f32 %v486, 0.0
        %v503 = vadd.f32 %v487, 0.0
        %s504 = sld [smem:[#allocation7 + $0x4]]
        %v505 = vstv %s504
        %v506 = vmul.f32 %v206, %v505
        %v507 = vmul.f32 %v207, %v505
        %v508 = vmul.f32 %v208, %v505
        %v509 = vmul.f32 %v209, %v505
        %v510 = vmul.f32 %v210, %v505
        %v511 = vmul.f32 %v211, %v505
        %v512 = vmul.f32 %v212, %v505
        %v513 = vmul.f32 %v213, %v505
        %v514 = vmul.f32 %v214, %v505
        %v515 = vmul.f32 %v215, %v505
        %v516 = vmul.f32 %v216, %v505
        %v517 = vmul.f32 %v217, %v505
        %v518 = vmul.f32 %v218, %v505
        %v519 = vmul.f32 %v219, %v505
        %v520 = vmul.f32 %v220, %v505
        %v521 = vmul.f32 %v221, %v505
        %v522 = vadd.f32 %v488, %v506
        %v523 = vadd.f32 %v489, %v507
        %v524 = vadd.f32 %v490, %v508
        %v525 = vadd.f32 %v491, %v509
        %v526 = vadd.f32 %v492, %v510
        %v527 = vadd.f32 %v493, %v511
        %v528 = vadd.f32 %v494, %v512
        %v529 = vadd.f32 %v495, %v513
        %v530 = vadd.f32 %v496, %v514
        %v531 = vadd.f32 %v497, %v515
        %v532 = vadd.f32 %v498, %v516
        %v533 = vadd.f32 %v499, %v517
        %v534 = vadd.f32 %v500, %v518
        %v535 = vadd.f32 %v501, %v519
        %v536 = vadd.f32 %v502, %v520
        %v537 = vadd.f32 %v503, %v521
        %s538 = sld [smem:[#allocation7 + $0x5]]
        %v539 = vstv %s538
        %v540 = vmul.f32 %v352, %v539
        %v541 = vmul.f32 %v353, %v539
        %v542 = vmul.f32 %v354, %v539
        %v543 = vmul.f32 %v355, %v539
        %v544 = vmul.f32 %v356, %v539
        %v545 = vmul.f32 %v357, %v539
        %v546 = vmul.f32 %v358, %v539
        %v547 = vmul.f32 %v359, %v539
        %v548 = vmul.f32 %v360, %v539
        %v549 = vmul.f32 %v361, %v539
        %v550 = vmul.f32 %v362, %v539
        %v551 = vmul.f32 %v363, %v539
        %v552 = vmul.f32 %v364, %v539
        %v553 = vmul.f32 %v365, %v539
        %v554 = vmul.f32 %v366, %v539
        %v555 = vmul.f32 %v367, %v539
        %v556 = vadd.f32 %v522, %v540
        %v557 = vadd.f32 %v523, %v541
        %v558 = vadd.f32 %v524, %v542
        %v559 = vadd.f32 %v525, %v543
        %v560 = vadd.f32 %v526, %v544
        %v561 = vadd.f32 %v527, %v545
        %v562 = vadd.f32 %v528, %v546
        %v563 = vadd.f32 %v529, %v547
        %v564 = vadd.f32 %v530, %v548
        %v565 = vadd.f32 %v531, %v549
        %v566 = vadd.f32 %v532, %v550
        %v567 = vadd.f32 %v533, %v551
        %v568 = vadd.f32 %v534, %v552
        %v569 = vadd.f32 %v535, %v553
        %v570 = vadd.f32 %v536, %v554
        %v571 = vadd.f32 %v537, %v555
        %s572 = sld [smem:[#allocation7 + $0x6]]
        %v573 = vstv %s572
        %v574 = vmul.f32 %v287, %v573
        %v575 = vmul.f32 %v288, %v573
        %v576 = vmul.f32 %v289, %v573
        %v577 = vmul.f32 %v290, %v573
        %v578 = vmul.f32 %v291, %v573
        %v579 = vmul.f32 %v292, %v573
        %v580 = vmul.f32 %v293, %v573
        %v581 = vmul.f32 %v294, %v573
        %v582 = vmul.f32 %v295, %v573
        %v583 = vmul.f32 %v296, %v573
        %v584 = vmul.f32 %v297, %v573
        %v585 = vmul.f32 %v298, %v573
        %v586 = vmul.f32 %v299, %v573
        %v587 = vmul.f32 %v300, %v573
        %v588 = vmul.f32 %v301, %v573
        %v589 = vmul.f32 %v302, %v573
        %v590 = vadd.f32 %v574, 0.0
        %v591 = vadd.f32 %v575, 0.0
        %v592 = vadd.f32 %v576, 0.0
        %v593 = vadd.f32 %v577, 0.0
        %v594 = vadd.f32 %v578, 0.0
        %v595 = vadd.f32 %v579, 0.0
        %v596 = vadd.f32 %v580, 0.0
        %v597 = vadd.f32 %v581, 0.0
        %v598 = vadd.f32 %v582, 0.0
        %v599 = vadd.f32 %v583, 0.0
        %v600 = vadd.f32 %v584, 0.0
        %v601 = vadd.f32 %v585, 0.0
        %v602 = vadd.f32 %v586, 0.0
        %v603 = vadd.f32 %v587, 0.0
        %v604 = vadd.f32 %v588, 0.0
        %v605 = vadd.f32 %v589, 0.0
        %s606 = sld [smem:[#allocation7 + $0x7]]
        %v607 = vstv %s606
        %v608 = vmul.f32 %v206, %v607
        %v609 = vmul.f32 %v207, %v607
        %v610 = vmul.f32 %v208, %v607
        %v611 = vmul.f32 %v209, %v607
        %v612 = vmul.f32 %v210, %v607
        %v613 = vmul.f32 %v211, %v607
        %v614 = vmul.f32 %v212, %v607
        %v615 = vmul.f32 %v213, %v607
        %v616 = vmul.f32 %v214, %v607
        %v617 = vmul.f32 %v215, %v607
        %v618 = vmul.f32 %v216, %v607
        %v619 = vmul.f32 %v217, %v607
        %v620 = vmul.f32 %v218, %v607
        %v621 = vmul.f32 %v219, %v607
        %v622 = vmul.f32 %v220, %v607
        %v623 = vmul.f32 %v221, %v607
        %v624 = vadd.f32 %v590, %v608
        %v625 = vadd.f32 %v591, %v609
        %v626 = vadd.f32 %v592, %v610
        %v627 = vadd.f32 %v593, %v611
        %v628 = vadd.f32 %v594, %v612
        %v629 = vadd.f32 %v595, %v613
        %v630 = vadd.f32 %v596, %v614
        %v631 = vadd.f32 %v597, %v615
        %v632 = vadd.f32 %v598, %v616
        %v633 = vadd.f32 %v599, %v617
        %v634 = vadd.f32 %v600, %v618
        %v635 = vadd.f32 %v601, %v619
        %v636 = vadd.f32 %v602, %v620
        %v637 = vadd.f32 %v603, %v621
        %v638 = vadd.f32 %v604, %v622
        %v639 = vadd.f32 %v605, %v623
        %s640 = sld [smem:[#allocation7 + $0x8]]
        %v641 = vstv %s640
        %v642 = vmul.f32 %v352, %v641
        %v643 = vmul.f32 %v353, %v641
        %v644 = vmul.f32 %v354, %v641
        %v645 = vmul.f32 %v355, %v641
        %v646 = vmul.f32 %v356, %v641
        %v647 = vmul.f32 %v357, %v641
        %v648 = vmul.f32 %v358, %v641
        %v649 = vmul.f32 %v359, %v641
        %v650 = vmul.f32 %v360, %v641
        %v651 = vmul.f32 %v361, %v641
        %v652 = vmul.f32 %v362, %v641
        %v653 = vmul.f32 %v363, %v641
        %v654 = vmul.f32 %v364, %v641
        %v655 = vmul.f32 %v365, %v641
        %v656 = vmul.f32 %v366, %v641
        %v657 = vmul.f32 %v367, %v641
        %v658 = vadd.f32 %v624, %v642
        %v659 = vadd.f32 %v625, %v643
        %v660 = vadd.f32 %v626, %v644
        %v661 = vadd.f32 %v627, %v645
        %v662 = vadd.f32 %v628, %v646
        %v663 = vadd.f32 %v629, %v647
        %v664 = vadd.f32 %v630, %v648
        %v665 = vadd.f32 %v631, %v649
        %v666 = vadd.f32 %v632, %v650
        %v667 = vadd.f32 %v633, %v651
        %v668 = vadd.f32 %v634, %v652
        %v669 = vadd.f32 %v635, %v653
        %v670 = vadd.f32 %v636, %v654
        %v671 = vadd.f32 %v637, %v655
        %v672 = vadd.f32 %v638, %v656
        %v673 = vadd.f32 %v639, %v657
        %s674 = scalar_lea.vmem %s173, 128 [#allocation4]
        %v675 = vld [vmem:[%s674] sm:$0xff]
        %v676 = vld [vmem:[%s674 + $0x8] sm:$0xff]
        %v677 = vld [vmem:[%s674 + $0x10] sm:$0xff]
        %v678 = vld [vmem:[%s674 + $0x18] sm:$0xff]
        %v679 = vld [vmem:[%s674 + $0x20] sm:$0xff]
        %v680 = vld [vmem:[%s674 + $0x28] sm:$0xff]
        %v681 = vld [vmem:[%s674 + $0x30] sm:$0xff]
        %v682 = vld [vmem:[%s674 + $0x38] sm:$0xff]
        %v683 = vld [vmem:[%s674 + $0x40] sm:$0xff]
        %v684 = vld [vmem:[%s674 + $0x48] sm:$0xff]
        %v685 = vld [vmem:[%s674 + $0x50] sm:$0xff]
        %v686 = vld [vmem:[%s674 + $0x58] sm:$0xff]
        %v687 = vld [vmem:[%s674 + $0x60] sm:$0xff]
        %v688 = vld [vmem:[%s674 + $0x68] sm:$0xff]
        %v689 = vld [vmem:[%s674 + $0x70] sm:$0xff]
        %v690 = vld [vmem:[%s674 + $0x78] sm:$0xff]
        %707 = vrot.lane.b32.xlu0 %v675, 1
        %v708 = vpop.permute.xlu0 %707
        %709 = vrot.lane.b32.xlu0 %v676, 1
        %v710 = vpop.permute.xlu0 %709
        %711 = vrot.lane.b32.xlu0 %v677, 1
        %v712 = vpop.permute.xlu0 %711
        %713 = vrot.lane.b32.xlu0 %v678, 1
        %v714 = vpop.permute.xlu0 %713
        %715 = vrot.lane.b32.xlu0 %v679, 1
        %v716 = vpop.permute.xlu0 %715
        %717 = vrot.lane.b32.xlu0 %v680, 1
        %v718 = vpop.permute.xlu0 %717
        %719 = vrot.lane.b32.xlu0 %v681, 1
        %v720 = vpop.permute.xlu0 %719
        %721 = vrot.lane.b32.xlu0 %v682, 1
        %v722 = vpop.permute.xlu0 %721
        %723 = vrot.lane.b32.xlu0 %v683, 1
        %v724 = vpop.permute.xlu0 %723
        %725 = vrot.lane.b32.xlu0 %v684, 1
        %v726 = vpop.permute.xlu0 %725
        %727 = vrot.lane.b32.xlu0 %v685, 1
        %v728 = vpop.permute.xlu0 %727
        %729 = vrot.lane.b32.xlu0 %v686, 1
        %v730 = vpop.permute.xlu0 %729
        %731 = vrot.lane.b32.xlu0 %v687, 1
        %v732 = vpop.permute.xlu0 %731
        %733 = vrot.lane.b32.xlu0 %v688, 1
        %v734 = vpop.permute.xlu0 %733
        %735 = vrot.lane.b32.xlu0 %v689, 1
        %v736 = vpop.permute.xlu0 %735
        %737 = vrot.lane.b32.xlu0 %v690, 1
        %v738 = vpop.permute.xlu0 %737
        %v755 = vsel %vm286, 0.0, %v708
        %v756 = vsel %vm286, 0.0, %v710
        %v757 = vsel %vm286, 0.0, %v712
        %v758 = vsel %vm286, 0.0, %v714
        %v759 = vsel %vm286, 0.0, %v716
        %v760 = vsel %vm286, 0.0, %v718
        %v761 = vsel %vm286, 0.0, %v720
        %v762 = vsel %vm286, 0.0, %v722
        %v763 = vsel %vm286, 0.0, %v724
        %v764 = vsel %vm286, 0.0, %v726
        %v765 = vsel %vm286, 0.0, %v728
        %v766 = vsel %vm286, 0.0, %v730
        %v767 = vsel %vm286, 0.0, %v732
        %v768 = vsel %vm286, 0.0, %v734
        %v769 = vsel %vm286, 0.0, %v736
        %v770 = vsel %vm286, 0.0, %v738
        %771 = vrot.lane.b32.xlu0 %v675, 127
        %v772 = vpop.permute.xlu0 %771
        %773 = vrot.lane.b32.xlu0 %v676, 127
        %v774 = vpop.permute.xlu0 %773
        %775 = vrot.lane.b32.xlu0 %v677, 127
        %v776 = vpop.permute.xlu0 %775
        %777 = vrot.lane.b32.xlu0 %v678, 127
        %v778 = vpop.permute.xlu0 %777
        %779 = vrot.lane.b32.xlu0 %v679, 127
        %v780 = vpop.permute.xlu0 %779
        %781 = vrot.lane.b32.xlu0 %v680, 127
        %v782 = vpop.permute.xlu0 %781
        %783 = vrot.lane.b32.xlu0 %v681, 127
        %v784 = vpop.permute.xlu0 %783
        %785 = vrot.lane.b32.xlu0 %v682, 127
        %v786 = vpop.permute.xlu0 %785
        %787 = vrot.lane.b32.xlu0 %v683, 127
        %v788 = vpop.permute.xlu0 %787
        %789 = vrot.lane.b32.xlu0 %v684, 127
        %v790 = vpop.permute.xlu0 %789
        %791 = vrot.lane.b32.xlu0 %v685, 127
        %v792 = vpop.permute.xlu0 %791
        %793 = vrot.lane.b32.xlu0 %v686, 127
        %v794 = vpop.permute.xlu0 %793
        %795 = vrot.lane.b32.xlu0 %v687, 127
        %v796 = vpop.permute.xlu0 %795
        %797 = vrot.lane.b32.xlu0 %v688, 127
        %v798 = vpop.permute.xlu0 %797
        %799 = vrot.lane.b32.xlu0 %v689, 127
        %v800 = vpop.permute.xlu0 %799
        %801 = vrot.lane.b32.xlu0 %v690, 127
        %v802 = vpop.permute.xlu0 %801
        %v819 = vsel %vm351, %v772, 0.0
        %v820 = vsel %vm351, %v774, 0.0
        %v821 = vsel %vm351, %v776, 0.0
        %v822 = vsel %vm351, %v778, 0.0
        %v823 = vsel %vm351, %v780, 0.0
        %v824 = vsel %vm351, %v782, 0.0
        %v825 = vsel %vm351, %v784, 0.0
        %v826 = vsel %vm351, %v786, 0.0
        %v827 = vsel %vm351, %v788, 0.0
        %v828 = vsel %vm351, %v790, 0.0
        %v829 = vsel %vm351, %v792, 0.0
        %v830 = vsel %vm351, %v794, 0.0
        %v831 = vsel %vm351, %v796, 0.0
        %v832 = vsel %vm351, %v798, 0.0
        %v833 = vsel %vm351, %v800, 0.0
        %v834 = vsel %vm351, %v802, 0.0
        %s835 = sld [smem:[#allocation7 + $0x9]]
        %v836 = vstv %s835
        %v837 = vmul.f32 %v755, %v836
        %v838 = vmul.f32 %v756, %v836
        %v839 = vmul.f32 %v757, %v836
        %v840 = vmul.f32 %v758, %v836
        %v841 = vmul.f32 %v759, %v836
        %v842 = vmul.f32 %v760, %v836
        %v843 = vmul.f32 %v761, %v836
        %v844 = vmul.f32 %v762, %v836
        %v845 = vmul.f32 %v763, %v836
        %v846 = vmul.f32 %v764, %v836
        %v847 = vmul.f32 %v765, %v836
        %v848 = vmul.f32 %v766, %v836
        %v849 = vmul.f32 %v767, %v836
        %v850 = vmul.f32 %v768, %v836
        %v851 = vmul.f32 %v769, %v836
        %v852 = vmul.f32 %v770, %v836
        %v853 = vadd.f32 %v454, %v837
        %v854 = vadd.f32 %v455, %v838
        %v855 = vadd.f32 %v456, %v839
        %v856 = vadd.f32 %v457, %v840
        %v857 = vadd.f32 %v458, %v841
        %v858 = vadd.f32 %v459, %v842
        %v859 = vadd.f32 %v460, %v843
        %v860 = vadd.f32 %v461, %v844
        %v861 = vadd.f32 %v462, %v845
        %v862 = vadd.f32 %v463, %v846
        %v863 = vadd.f32 %v464, %v847
        %v864 = vadd.f32 %v465, %v848
        %v865 = vadd.f32 %v466, %v849
        %v866 = vadd.f32 %v467, %v850
        %v867 = vadd.f32 %v468, %v851
        %v868 = vadd.f32 %v469, %v852
        %s869 = sld [smem:[#allocation7 + $0xa]]
        %v870 = vstv %s869
        %v871 = vmul.f32 %v675, %v870
        %v872 = vmul.f32 %v676, %v870
        %v873 = vmul.f32 %v677, %v870
        %v874 = vmul.f32 %v678, %v870
        %v875 = vmul.f32 %v679, %v870
        %v876 = vmul.f32 %v680, %v870
        %v877 = vmul.f32 %v681, %v870
        %v878 = vmul.f32 %v682, %v870
        %v879 = vmul.f32 %v683, %v870
        %v880 = vmul.f32 %v684, %v870
        %v881 = vmul.f32 %v685, %v870
        %v882 = vmul.f32 %v686, %v870
        %v883 = vmul.f32 %v687, %v870
        %v884 = vmul.f32 %v688, %v870
        %v885 = vmul.f32 %v689, %v870
        %v886 = vmul.f32 %v690, %v870
        %v887 = vadd.f32 %v853, %v871
        %v888 = vadd.f32 %v854, %v872
        %v889 = vadd.f32 %v855, %v873
        %v890 = vadd.f32 %v856, %v874
        %v891 = vadd.f32 %v857, %v875
        %v892 = vadd.f32 %v858, %v876
        %v893 = vadd.f32 %v859, %v877
        %v894 = vadd.f32 %v860, %v878
        %v895 = vadd.f32 %v861, %v879
        %v896 = vadd.f32 %v862, %v880
        %v897 = vadd.f32 %v863, %v881
        %v898 = vadd.f32 %v864, %v882
        %v899 = vadd.f32 %v865, %v883
        %v900 = vadd.f32 %v866, %v884
        %v901 = vadd.f32 %v867, %v885
        %v902 = vadd.f32 %v868, %v886
        %s903 = sld [smem:[#allocation7 + $0xb]]
        %v904 = vstv %s903
        %v905 = vmul.f32 %v819, %v904
        %v906 = vmul.f32 %v820, %v904
        %v907 = vmul.f32 %v821, %v904
        %v908 = vmul.f32 %v822, %v904
        %v909 = vmul.f32 %v823, %v904
        %v910 = vmul.f32 %v824, %v904
        %v911 = vmul.f32 %v825, %v904
        %v912 = vmul.f32 %v826, %v904
        %v913 = vmul.f32 %v827, %v904
        %v914 = vmul.f32 %v828, %v904
        %v915 = vmul.f32 %v829, %v904
        %v916 = vmul.f32 %v830, %v904
        %v917 = vmul.f32 %v831, %v904
        %v918 = vmul.f32 %v832, %v904
        %v919 = vmul.f32 %v833, %v904
        %v920 = vmul.f32 %v834, %v904
        %v921 = vadd.f32 %v887, %v905
        %v922 = vadd.f32 %v888, %v906
        %v923 = vadd.f32 %v889, %v907
        %v924 = vadd.f32 %v890, %v908
        %v925 = vadd.f32 %v891, %v909
        %v926 = vadd.f32 %v892, %v910
        %v927 = vadd.f32 %v893, %v911
        %v928 = vadd.f32 %v894, %v912
        %v929 = vadd.f32 %v895, %v913
        %v930 = vadd.f32 %v896, %v914
        %v931 = vadd.f32 %v897, %v915
        %v932 = vadd.f32 %v898, %v916
        %v933 = vadd.f32 %v899, %v917
        %v934 = vadd.f32 %v900, %v918
        %v935 = vadd.f32 %v901, %v919
        %v936 = vadd.f32 %v902, %v920
        %s937 = sld [smem:[#allocation7 + $0xc]]
        %v938 = vstv %s937
        %v939 = vmul.f32 %v755, %v938
        %v940 = vmul.f32 %v756, %v938
        %v941 = vmul.f32 %v757, %v938
        %v942 = vmul.f32 %v758, %v938
        %v943 = vmul.f32 %v759, %v938
        %v944 = vmul.f32 %v760, %v938
        %v945 = vmul.f32 %v761, %v938
        %v946 = vmul.f32 %v762, %v938
        %v947 = vmul.f32 %v763, %v938
        %v948 = vmul.f32 %v764, %v938
        %v949 = vmul.f32 %v765, %v938
        %v950 = vmul.f32 %v766, %v938
        %v951 = vmul.f32 %v767, %v938
        %v952 = vmul.f32 %v768, %v938
        %v953 = vmul.f32 %v769, %v938
        %v954 = vmul.f32 %v770, %v938
        %v955 = vadd.f32 %v556, %v939
        %v956 = vadd.f32 %v557, %v940
        %v957 = vadd.f32 %v558, %v941
        %v958 = vadd.f32 %v559, %v942
        %v959 = vadd.f32 %v560, %v943
        %v960 = vadd.f32 %v561, %v944
        %v961 = vadd.f32 %v562, %v945
        %v962 = vadd.f32 %v563, %v946
        %v963 = vadd.f32 %v564, %v947
        %v964 = vadd.f32 %v565, %v948
        %v965 = vadd.f32 %v566, %v949
        %v966 = vadd.f32 %v567, %v950
        %v967 = vadd.f32 %v568, %v951
        %v968 = vadd.f32 %v569, %v952
        %v969 = vadd.f32 %v570, %v953
        %v970 = vadd.f32 %v571, %v954
        %s971 = sld [smem:[#allocation7 + $0xd]]
        %v972 = vstv %s971
        %v973 = vmul.f32 %v675, %v972
        %v974 = vmul.f32 %v676, %v972
        %v975 = vmul.f32 %v677, %v972
        %v976 = vmul.f32 %v678, %v972
        %v977 = vmul.f32 %v679, %v972
        %v978 = vmul.f32 %v680, %v972
        %v979 = vmul.f32 %v681, %v972
        %v980 = vmul.f32 %v682, %v972
        %v981 = vmul.f32 %v683, %v972
        %v982 = vmul.f32 %v684, %v972
        %v983 = vmul.f32 %v685, %v972
        %v984 = vmul.f32 %v686, %v972
        %v985 = vmul.f32 %v687, %v972
        %v986 = vmul.f32 %v688, %v972
        %v987 = vmul.f32 %v689, %v972
        %v988 = vmul.f32 %v690, %v972
        %v989 = vadd.f32 %v955, %v973
        %v990 = vadd.f32 %v956, %v974
        %v991 = vadd.f32 %v957, %v975
        %v992 = vadd.f32 %v958, %v976
        %v993 = vadd.f32 %v959, %v977
        %v994 = vadd.f32 %v960, %v978
        %v995 = vadd.f32 %v961, %v979
        %v996 = vadd.f32 %v962, %v980
        %v997 = vadd.f32 %v963, %v981
        %v998 = vadd.f32 %v964, %v982
        %v999 = vadd.f32 %v965, %v983
        %v1000 = vadd.f32 %v966, %v984
        %v1001 = vadd.f32 %v967, %v985
        %v1002 = vadd.f32 %v968, %v986
        %v1003 = vadd.f32 %v969, %v987
        %v1004 = vadd.f32 %v970, %v988
        %s1005 = sld [smem:[#allocation7 + $0xe]]
        %v1006 = vstv %s1005
        %v1007 = vmul.f32 %v819, %v1006
        %v1008 = vmul.f32 %v820, %v1006
        %v1009 = vmul.f32 %v821, %v1006
        %v1010 = vmul.f32 %v822, %v1006
        %v1011 = vmul.f32 %v823, %v1006
        %v1012 = vmul.f32 %v824, %v1006
        %v1013 = vmul.f32 %v825, %v1006
        %v1014 = vmul.f32 %v826, %v1006
        %v1015 = vmul.f32 %v827, %v1006
        %v1016 = vmul.f32 %v828, %v1006
        %v1017 = vmul.f32 %v829, %v1006
        %v1018 = vmul.f32 %v830, %v1006
        %v1019 = vmul.f32 %v831, %v1006
        %v1020 = vmul.f32 %v832, %v1006
        %v1021 = vmul.f32 %v833, %v1006
        %v1022 = vmul.f32 %v834, %v1006
        %v1023 = vadd.f32 %v989, %v1007
        %v1024 = vadd.f32 %v990, %v1008
        %v1025 = vadd.f32 %v991, %v1009
        %v1026 = vadd.f32 %v992, %v1010
        %v1027 = vadd.f32 %v993, %v1011
        %v1028 = vadd.f32 %v994, %v1012
        %v1029 = vadd.f32 %v995, %v1013
        %v1030 = vadd.f32 %v996, %v1014
        %v1031 = vadd.f32 %v997, %v1015
        %v1032 = vadd.f32 %v998, %v1016
        %v1033 = vadd.f32 %v999, %v1017
        %v1034 = vadd.f32 %v1000, %v1018
        %v1035 = vadd.f32 %v1001, %v1019
        %v1036 = vadd.f32 %v1002, %v1020
        %v1037 = vadd.f32 %v1003, %v1021
        %v1038 = vadd.f32 %v1004, %v1022
        %s1039 = sld [smem:[#allocation7 + $0xf]]
        %v1040 = vstv %s1039
        %v1041 = vmul.f32 %v755, %v1040
        %v1042 = vmul.f32 %v756, %v1040
        %v1043 = vmul.f32 %v757, %v1040
        %v1044 = vmul.f32 %v758, %v1040
        %v1045 = vmul.f32 %v759, %v1040
        %v1046 = vmul.f32 %v760, %v1040
        %v1047 = vmul.f32 %v761, %v1040
        %v1048 = vmul.f32 %v762, %v1040
        %v1049 = vmul.f32 %v763, %v1040
        %v1050 = vmul.f32 %v764, %v1040
        %v1051 = vmul.f32 %v765, %v1040
        %v1052 = vmul.f32 %v766, %v1040
        %v1053 = vmul.f32 %v767, %v1040
        %v1054 = vmul.f32 %v768, %v1040
        %v1055 = vmul.f32 %v769, %v1040
        %v1056 = vmul.f32 %v770, %v1040
        %v1057 = vadd.f32 %v658, %v1041
        %v1058 = vadd.f32 %v659, %v1042
        %v1059 = vadd.f32 %v660, %v1043
        %v1060 = vadd.f32 %v661, %v1044
        %v1061 = vadd.f32 %v662, %v1045
        %v1062 = vadd.f32 %v663, %v1046
        %v1063 = vadd.f32 %v664, %v1047
        %v1064 = vadd.f32 %v665, %v1048
        %v1065 = vadd.f32 %v666, %v1049
        %v1066 = vadd.f32 %v667, %v1050
        %v1067 = vadd.f32 %v668, %v1051
        %v1068 = vadd.f32 %v669, %v1052
        %v1069 = vadd.f32 %v670, %v1053
        %v1070 = vadd.f32 %v671, %v1054
        %v1071 = vadd.f32 %v672, %v1055
        %v1072 = vadd.f32 %v673, %v1056
        %s1073 = sld [smem:[#allocation7 + $0x10]]
        %v1074 = vstv %s1073
        %v1075 = vmul.f32 %v675, %v1074
        %v1076 = vmul.f32 %v676, %v1074
        %v1077 = vmul.f32 %v677, %v1074
        %v1078 = vmul.f32 %v678, %v1074
        %v1079 = vmul.f32 %v679, %v1074
        %v1080 = vmul.f32 %v680, %v1074
        %v1081 = vmul.f32 %v681, %v1074
        %v1082 = vmul.f32 %v682, %v1074
        %v1083 = vmul.f32 %v683, %v1074
        %v1084 = vmul.f32 %v684, %v1074
        %v1085 = vmul.f32 %v685, %v1074
        %v1086 = vmul.f32 %v686, %v1074
        %v1087 = vmul.f32 %v687, %v1074
        %v1088 = vmul.f32 %v688, %v1074
        %v1089 = vmul.f32 %v689, %v1074
        %v1090 = vmul.f32 %v690, %v1074
        %v1091 = vadd.f32 %v1057, %v1075
        %v1092 = vadd.f32 %v1058, %v1076
        %v1093 = vadd.f32 %v1059, %v1077
        %v1094 = vadd.f32 %v1060, %v1078
        %v1095 = vadd.f32 %v1061, %v1079
        %v1096 = vadd.f32 %v1062, %v1080
        %v1097 = vadd.f32 %v1063, %v1081
        %v1098 = vadd.f32 %v1064, %v1082
        %v1099 = vadd.f32 %v1065, %v1083
        %v1100 = vadd.f32 %v1066, %v1084
        %v1101 = vadd.f32 %v1067, %v1085
        %v1102 = vadd.f32 %v1068, %v1086
        %v1103 = vadd.f32 %v1069, %v1087
        %v1104 = vadd.f32 %v1070, %v1088
        %v1105 = vadd.f32 %v1071, %v1089
        %v1106 = vadd.f32 %v1072, %v1090
        %s1107 = sld [smem:[#allocation7 + $0x11]]
        %v1108 = vstv %s1107
        %v1109 = vmul.f32 %v819, %v1108
        %v1110 = vmul.f32 %v820, %v1108
        %v1111 = vmul.f32 %v821, %v1108
        %v1112 = vmul.f32 %v822, %v1108
        %v1113 = vmul.f32 %v823, %v1108
        %v1114 = vmul.f32 %v824, %v1108
        %v1115 = vmul.f32 %v825, %v1108
        %v1116 = vmul.f32 %v826, %v1108
        %v1117 = vmul.f32 %v827, %v1108
        %v1118 = vmul.f32 %v828, %v1108
        %v1119 = vmul.f32 %v829, %v1108
        %v1120 = vmul.f32 %v830, %v1108
        %v1121 = vmul.f32 %v831, %v1108
        %v1122 = vmul.f32 %v832, %v1108
        %v1123 = vmul.f32 %v833, %v1108
        %v1124 = vmul.f32 %v834, %v1108
        %v1125 = vadd.f32 %v1091, %v1109
        %v1126 = vadd.f32 %v1092, %v1110
        %v1127 = vadd.f32 %v1093, %v1111
        %v1128 = vadd.f32 %v1094, %v1112
        %v1129 = vadd.f32 %v1095, %v1113
        %v1130 = vadd.f32 %v1096, %v1114
        %v1131 = vadd.f32 %v1097, %v1115
        %v1132 = vadd.f32 %v1098, %v1116
        %v1133 = vadd.f32 %v1099, %v1117
        %v1134 = vadd.f32 %v1100, %v1118
        %v1135 = vadd.f32 %v1101, %v1119
        %v1136 = vadd.f32 %v1102, %v1120
        %v1137 = vadd.f32 %v1103, %v1121
        %v1138 = vadd.f32 %v1104, %v1122
        %v1139 = vadd.f32 %v1105, %v1123
        %v1140 = vadd.f32 %v1106, %v1124
        %s1141 = scalar_lea.vmem %s173, 256 [#allocation4]
        %v1142 = vld [vmem:[%s1141] sm:$0xff]
        %v1143 = vld [vmem:[%s1141 + $0x8] sm:$0xff]
        %v1144 = vld [vmem:[%s1141 + $0x10] sm:$0xff]
        %v1145 = vld [vmem:[%s1141 + $0x18] sm:$0xff]
        %v1146 = vld [vmem:[%s1141 + $0x20] sm:$0xff]
        %v1147 = vld [vmem:[%s1141 + $0x28] sm:$0xff]
        %v1148 = vld [vmem:[%s1141 + $0x30] sm:$0xff]
        %v1149 = vld [vmem:[%s1141 + $0x38] sm:$0xff]
        %v1150 = vld [vmem:[%s1141 + $0x40] sm:$0xff]
        %v1151 = vld [vmem:[%s1141 + $0x48] sm:$0xff]
        %v1152 = vld [vmem:[%s1141 + $0x50] sm:$0xff]
        %v1153 = vld [vmem:[%s1141 + $0x58] sm:$0xff]
        %v1154 = vld [vmem:[%s1141 + $0x60] sm:$0xff]
        %v1155 = vld [vmem:[%s1141 + $0x68] sm:$0xff]
        %v1156 = vld [vmem:[%s1141 + $0x70] sm:$0xff]
        %v1157 = vld [vmem:[%s1141 + $0x78] sm:$0xff]
        %1174 = vrot.lane.b32.xlu0 %v1142, 1
        %v1175 = vpop.permute.xlu0 %1174
        %1176 = vrot.lane.b32.xlu0 %v1143, 1
        %v1177 = vpop.permute.xlu0 %1176
        %1178 = vrot.lane.b32.xlu0 %v1144, 1
        %v1179 = vpop.permute.xlu0 %1178
        %1180 = vrot.lane.b32.xlu0 %v1145, 1
        %v1181 = vpop.permute.xlu0 %1180
        %1182 = vrot.lane.b32.xlu0 %v1146, 1
        %v1183 = vpop.permute.xlu0 %1182
        %1184 = vrot.lane.b32.xlu0 %v1147, 1
        %v1185 = vpop.permute.xlu0 %1184
        %1186 = vrot.lane.b32.xlu0 %v1148, 1
        %v1187 = vpop.permute.xlu0 %1186
        %1188 = vrot.lane.b32.xlu0 %v1149, 1
        %v1189 = vpop.permute.xlu0 %1188
        %1190 = vrot.lane.b32.xlu0 %v1150, 1
        %v1191 = vpop.permute.xlu0 %1190
        %1192 = vrot.lane.b32.xlu0 %v1151, 1
        %v1193 = vpop.permute.xlu0 %1192
        %1194 = vrot.lane.b32.xlu0 %v1152, 1
        %v1195 = vpop.permute.xlu0 %1194
        %1196 = vrot.lane.b32.xlu0 %v1153, 1
        %v1197 = vpop.permute.xlu0 %1196
        %1198 = vrot.lane.b32.xlu0 %v1154, 1
        %v1199 = vpop.permute.xlu0 %1198
        %1200 = vrot.lane.b32.xlu0 %v1155, 1
        %v1201 = vpop.permute.xlu0 %1200
        %1202 = vrot.lane.b32.xlu0 %v1156, 1
        %v1203 = vpop.permute.xlu0 %1202
        %1204 = vrot.lane.b32.xlu0 %v1157, 1
        %v1205 = vpop.permute.xlu0 %1204
        %v1222 = vsel %vm286, 0.0, %v1175
        %v1223 = vsel %vm286, 0.0, %v1177
        %v1224 = vsel %vm286, 0.0, %v1179
        %v1225 = vsel %vm286, 0.0, %v1181
        %v1226 = vsel %vm286, 0.0, %v1183
        %v1227 = vsel %vm286, 0.0, %v1185
        %v1228 = vsel %vm286, 0.0, %v1187
        %v1229 = vsel %vm286, 0.0, %v1189
        %v1230 = vsel %vm286, 0.0, %v1191
        %v1231 = vsel %vm286, 0.0, %v1193
        %v1232 = vsel %vm286, 0.0, %v1195
        %v1233 = vsel %vm286, 0.0, %v1197
        %v1234 = vsel %vm286, 0.0, %v1199
        %v1235 = vsel %vm286, 0.0, %v1201
        %v1236 = vsel %vm286, 0.0, %v1203
        %v1237 = vsel %vm286, 0.0, %v1205
        %1238 = vrot.lane.b32.xlu0 %v1142, 127
        %v1239 = vpop.permute.xlu0 %1238
        %1240 = vrot.lane.b32.xlu0 %v1143, 127
        %v1241 = vpop.permute.xlu0 %1240
        %1242 = vrot.lane.b32.xlu0 %v1144, 127
        %v1243 = vpop.permute.xlu0 %1242
        %1244 = vrot.lane.b32.xlu0 %v1145, 127
        %v1245 = vpop.permute.xlu0 %1244
        %1246 = vrot.lane.b32.xlu0 %v1146, 127
        %v1247 = vpop.permute.xlu0 %1246
        %1248 = vrot.lane.b32.xlu0 %v1147, 127
        %v1249 = vpop.permute.xlu0 %1248
        %1250 = vrot.lane.b32.xlu0 %v1148, 127
        %v1251 = vpop.permute.xlu0 %1250
        %1252 = vrot.lane.b32.xlu0 %v1149, 127
        %v1253 = vpop.permute.xlu0 %1252
        %1254 = vrot.lane.b32.xlu0 %v1150, 127
        %v1255 = vpop.permute.xlu0 %1254
        %1256 = vrot.lane.b32.xlu0 %v1151, 127
        %v1257 = vpop.permute.xlu0 %1256
        %1258 = vrot.lane.b32.xlu0 %v1152, 127
        %v1259 = vpop.permute.xlu0 %1258
        %1260 = vrot.lane.b32.xlu0 %v1153, 127
        %v1261 = vpop.permute.xlu0 %1260
        %1262 = vrot.lane.b32.xlu0 %v1154, 127
        %v1263 = vpop.permute.xlu0 %1262
        %1264 = vrot.lane.b32.xlu0 %v1155, 127
        %v1265 = vpop.permute.xlu0 %1264
        %1266 = vrot.lane.b32.xlu0 %v1156, 127
        %v1267 = vpop.permute.xlu0 %1266
        %1268 = vrot.lane.b32.xlu0 %v1157, 127
        %v1269 = vpop.permute.xlu0 %1268
        %v1286 = vsel %vm351, %v1239, 0.0
        %v1287 = vsel %vm351, %v1241, 0.0
        %v1288 = vsel %vm351, %v1243, 0.0
        %v1289 = vsel %vm351, %v1245, 0.0
        %v1290 = vsel %vm351, %v1247, 0.0
        %v1291 = vsel %vm351, %v1249, 0.0
        %v1292 = vsel %vm351, %v1251, 0.0
        %v1293 = vsel %vm351, %v1253, 0.0
        %v1294 = vsel %vm351, %v1255, 0.0
        %v1295 = vsel %vm351, %v1257, 0.0
        %v1296 = vsel %vm351, %v1259, 0.0
        %v1297 = vsel %vm351, %v1261, 0.0
        %v1298 = vsel %vm351, %v1263, 0.0
        %v1299 = vsel %vm351, %v1265, 0.0
        %v1300 = vsel %vm351, %v1267, 0.0
        %v1301 = vsel %vm351, %v1269, 0.0
        %s1302 = sld [smem:[#allocation7 + $0x12]]
        %v1303 = vstv %s1302
        %v1304 = vmul.f32 %v1222, %v1303
        %v1305 = vmul.f32 %v1223, %v1303
        %v1306 = vmul.f32 %v1224, %v1303
        %v1307 = vmul.f32 %v1225, %v1303
        %v1308 = vmul.f32 %v1226, %v1303
        %v1309 = vmul.f32 %v1227, %v1303
        %v1310 = vmul.f32 %v1228, %v1303
        %v1311 = vmul.f32 %v1229, %v1303
        %v1312 = vmul.f32 %v1230, %v1303
        %v1313 = vmul.f32 %v1231, %v1303
        %v1314 = vmul.f32 %v1232, %v1303
        %v1315 = vmul.f32 %v1233, %v1303
        %v1316 = vmul.f32 %v1234, %v1303
        %v1317 = vmul.f32 %v1235, %v1303
        %v1318 = vmul.f32 %v1236, %v1303
        %v1319 = vmul.f32 %v1237, %v1303
        %v1320 = vadd.f32 %v921, %v1304
        %v1321 = vadd.f32 %v922, %v1305
        %v1322 = vadd.f32 %v923, %v1306
        %v1323 = vadd.f32 %v924, %v1307
        %v1324 = vadd.f32 %v925, %v1308
        %v1325 = vadd.f32 %v926, %v1309
        %v1326 = vadd.f32 %v927, %v1310
        %v1327 = vadd.f32 %v928, %v1311
        %v1328 = vadd.f32 %v929, %v1312
        %v1329 = vadd.f32 %v930, %v1313
        %v1330 = vadd.f32 %v931, %v1314
        %v1331 = vadd.f32 %v932, %v1315
        %v1332 = vadd.f32 %v933, %v1316
        %v1333 = vadd.f32 %v934, %v1317
        %v1334 = vadd.f32 %v935, %v1318
        %v1335 = vadd.f32 %v936, %v1319
        %s1336 = sld [smem:[#allocation7 + $0x13]]
        %v1337 = vstv %s1336
        %v1338 = vmul.f32 %v1142, %v1337
        %v1339 = vmul.f32 %v1143, %v1337
        %v1340 = vmul.f32 %v1144, %v1337
        %v1341 = vmul.f32 %v1145, %v1337
        %v1342 = vmul.f32 %v1146, %v1337
        %v1343 = vmul.f32 %v1147, %v1337
        %v1344 = vmul.f32 %v1148, %v1337
        %v1345 = vmul.f32 %v1149, %v1337
        %v1346 = vmul.f32 %v1150, %v1337
        %v1347 = vmul.f32 %v1151, %v1337
        %v1348 = vmul.f32 %v1152, %v1337
        %v1349 = vmul.f32 %v1153, %v1337
        %v1350 = vmul.f32 %v1154, %v1337
        %v1351 = vmul.f32 %v1155, %v1337
        %v1352 = vmul.f32 %v1156, %v1337
        %v1353 = vmul.f32 %v1157, %v1337
        %v1354 = vadd.f32 %v1320, %v1338
        %v1355 = vadd.f32 %v1321, %v1339
        %v1356 = vadd.f32 %v1322, %v1340
        %v1357 = vadd.f32 %v1323, %v1341
        %v1358 = vadd.f32 %v1324, %v1342
        %v1359 = vadd.f32 %v1325, %v1343
        %v1360 = vadd.f32 %v1326, %v1344
        %v1361 = vadd.f32 %v1327, %v1345
        %v1362 = vadd.f32 %v1328, %v1346
        %v1363 = vadd.f32 %v1329, %v1347
        %v1364 = vadd.f32 %v1330, %v1348
        %v1365 = vadd.f32 %v1331, %v1349
        %v1366 = vadd.f32 %v1332, %v1350
        %v1367 = vadd.f32 %v1333, %v1351
        %v1368 = vadd.f32 %v1334, %v1352
        %v1369 = vadd.f32 %v1335, %v1353
        %s1370 = sld [smem:[#allocation7 + $0x14]]
        %v1371 = vstv %s1370
        %v1372 = vmul.f32 %v1286, %v1371
        %v1373 = vmul.f32 %v1287, %v1371
        %v1374 = vmul.f32 %v1288, %v1371
        %v1375 = vmul.f32 %v1289, %v1371
        %v1376 = vmul.f32 %v1290, %v1371
        %v1377 = vmul.f32 %v1291, %v1371
        %v1378 = vmul.f32 %v1292, %v1371
        %v1379 = vmul.f32 %v1293, %v1371
        %v1380 = vmul.f32 %v1294, %v1371
        %v1381 = vmul.f32 %v1295, %v1371
        %v1382 = vmul.f32 %v1296, %v1371
        %v1383 = vmul.f32 %v1297, %v1371
        %v1384 = vmul.f32 %v1298, %v1371
        %v1385 = vmul.f32 %v1299, %v1371
        %v1386 = vmul.f32 %v1300, %v1371
        %v1387 = vmul.f32 %v1301, %v1371
        %v1388 = vadd.f32 %v1354, %v1372
        %v1389 = vadd.f32 %v1355, %v1373
        %v1390 = vadd.f32 %v1356, %v1374
        %v1391 = vadd.f32 %v1357, %v1375
        %v1392 = vadd.f32 %v1358, %v1376
        %v1393 = vadd.f32 %v1359, %v1377
        %v1394 = vadd.f32 %v1360, %v1378
        %v1395 = vadd.f32 %v1361, %v1379
        %v1396 = vadd.f32 %v1362, %v1380
        %v1397 = vadd.f32 %v1363, %v1381
        %v1398 = vadd.f32 %v1364, %v1382
        %v1399 = vadd.f32 %v1365, %v1383
        %v1400 = vadd.f32 %v1366, %v1384
        %v1401 = vadd.f32 %v1367, %v1385
        %v1402 = vadd.f32 %v1368, %v1386
        %v1403 = vadd.f32 %v1369, %v1387
        %s1404 = sld [smem:[#allocation7 + $0x15]]
        %v1405 = vstv %s1404
        %v1406 = vmul.f32 %v1222, %v1405
        %v1407 = vmul.f32 %v1223, %v1405
        %v1408 = vmul.f32 %v1224, %v1405
        %v1409 = vmul.f32 %v1225, %v1405
        %v1410 = vmul.f32 %v1226, %v1405
        %v1411 = vmul.f32 %v1227, %v1405
        %v1412 = vmul.f32 %v1228, %v1405
        %v1413 = vmul.f32 %v1229, %v1405
        %v1414 = vmul.f32 %v1230, %v1405
        %v1415 = vmul.f32 %v1231, %v1405
        %v1416 = vmul.f32 %v1232, %v1405
        %v1417 = vmul.f32 %v1233, %v1405
        %v1418 = vmul.f32 %v1234, %v1405
        %v1419 = vmul.f32 %v1235, %v1405
        %v1420 = vmul.f32 %v1236, %v1405
        %v1421 = vmul.f32 %v1237, %v1405
        %v1422 = vadd.f32 %v1023, %v1406
        %v1423 = vadd.f32 %v1024, %v1407
        %v1424 = vadd.f32 %v1025, %v1408
        %v1425 = vadd.f32 %v1026, %v1409
        %v1426 = vadd.f32 %v1027, %v1410
        %v1427 = vadd.f32 %v1028, %v1411
        %v1428 = vadd.f32 %v1029, %v1412
        %v1429 = vadd.f32 %v1030, %v1413
        %v1430 = vadd.f32 %v1031, %v1414
        %v1431 = vadd.f32 %v1032, %v1415
        %v1432 = vadd.f32 %v1033, %v1416
        %v1433 = vadd.f32 %v1034, %v1417
        %v1434 = vadd.f32 %v1035, %v1418
        %v1435 = vadd.f32 %v1036, %v1419
        %v1436 = vadd.f32 %v1037, %v1420
        %v1437 = vadd.f32 %v1038, %v1421
        %s1438 = sld [smem:[#allocation7 + $0x16]]
        %v1439 = vstv %s1438
        %v1440 = vmul.f32 %v1142, %v1439
        %v1441 = vmul.f32 %v1143, %v1439
        %v1442 = vmul.f32 %v1144, %v1439
        %v1443 = vmul.f32 %v1145, %v1439
        %v1444 = vmul.f32 %v1146, %v1439
        %v1445 = vmul.f32 %v1147, %v1439
        %v1446 = vmul.f32 %v1148, %v1439
        %v1447 = vmul.f32 %v1149, %v1439
        %v1448 = vmul.f32 %v1150, %v1439
        %v1449 = vmul.f32 %v1151, %v1439
        %v1450 = vmul.f32 %v1152, %v1439
        %v1451 = vmul.f32 %v1153, %v1439
        %v1452 = vmul.f32 %v1154, %v1439
        %v1453 = vmul.f32 %v1155, %v1439
        %v1454 = vmul.f32 %v1156, %v1439
        %v1455 = vmul.f32 %v1157, %v1439
        %v1456 = vadd.f32 %v1422, %v1440
        %v1457 = vadd.f32 %v1423, %v1441
        %v1458 = vadd.f32 %v1424, %v1442
        %v1459 = vadd.f32 %v1425, %v1443
        %v1460 = vadd.f32 %v1426, %v1444
        %v1461 = vadd.f32 %v1427, %v1445
        %v1462 = vadd.f32 %v1428, %v1446
        %v1463 = vadd.f32 %v1429, %v1447
        %v1464 = vadd.f32 %v1430, %v1448
        %v1465 = vadd.f32 %v1431, %v1449
        %v1466 = vadd.f32 %v1432, %v1450
        %v1467 = vadd.f32 %v1433, %v1451
        %v1468 = vadd.f32 %v1434, %v1452
        %v1469 = vadd.f32 %v1435, %v1453
        %v1470 = vadd.f32 %v1436, %v1454
        %v1471 = vadd.f32 %v1437, %v1455
        %s1472 = sld [smem:[#allocation7 + $0x17]]
        %v1473 = vstv %s1472
        %v1474 = vmul.f32 %v1286, %v1473
        %v1475 = vmul.f32 %v1287, %v1473
        %v1476 = vmul.f32 %v1288, %v1473
        %v1477 = vmul.f32 %v1289, %v1473
        %v1478 = vmul.f32 %v1290, %v1473
        %v1479 = vmul.f32 %v1291, %v1473
        %v1480 = vmul.f32 %v1292, %v1473
        %v1481 = vmul.f32 %v1293, %v1473
        %v1482 = vmul.f32 %v1294, %v1473
        %v1483 = vmul.f32 %v1295, %v1473
        %v1484 = vmul.f32 %v1296, %v1473
        %v1485 = vmul.f32 %v1297, %v1473
        %v1486 = vmul.f32 %v1298, %v1473
        %v1487 = vmul.f32 %v1299, %v1473
        %v1488 = vmul.f32 %v1300, %v1473
        %v1489 = vmul.f32 %v1301, %v1473
        %v1490 = vadd.f32 %v1456, %v1474
        %v1491 = vadd.f32 %v1457, %v1475
        %v1492 = vadd.f32 %v1458, %v1476
        %v1493 = vadd.f32 %v1459, %v1477
        %v1494 = vadd.f32 %v1460, %v1478
        %v1495 = vadd.f32 %v1461, %v1479
        %v1496 = vadd.f32 %v1462, %v1480
        %v1497 = vadd.f32 %v1463, %v1481
        %v1498 = vadd.f32 %v1464, %v1482
        %v1499 = vadd.f32 %v1465, %v1483
        %v1500 = vadd.f32 %v1466, %v1484
        %v1501 = vadd.f32 %v1467, %v1485
        %v1502 = vadd.f32 %v1468, %v1486
        %v1503 = vadd.f32 %v1469, %v1487
        %v1504 = vadd.f32 %v1470, %v1488
        %v1505 = vadd.f32 %v1471, %v1489
        %s1506 = sld [smem:[#allocation7 + $0x18]]
        %v1507 = vstv %s1506
        %v1508 = vmul.f32 %v1222, %v1507
        %v1509 = vmul.f32 %v1223, %v1507
        %v1510 = vmul.f32 %v1224, %v1507
        %v1511 = vmul.f32 %v1225, %v1507
        %v1512 = vmul.f32 %v1226, %v1507
        %v1513 = vmul.f32 %v1227, %v1507
        %v1514 = vmul.f32 %v1228, %v1507
        %v1515 = vmul.f32 %v1229, %v1507
        %v1516 = vmul.f32 %v1230, %v1507
        %v1517 = vmul.f32 %v1231, %v1507
        %v1518 = vmul.f32 %v1232, %v1507
        %v1519 = vmul.f32 %v1233, %v1507
        %v1520 = vmul.f32 %v1234, %v1507
        %v1521 = vmul.f32 %v1235, %v1507
        %v1522 = vmul.f32 %v1236, %v1507
        %v1523 = vmul.f32 %v1237, %v1507
        %v1524 = vadd.f32 %v1125, %v1508
        %v1525 = vadd.f32 %v1126, %v1509
        %v1526 = vadd.f32 %v1127, %v1510
        %v1527 = vadd.f32 %v1128, %v1511
        %v1528 = vadd.f32 %v1129, %v1512
        %v1529 = vadd.f32 %v1130, %v1513
        %v1530 = vadd.f32 %v1131, %v1514
        %v1531 = vadd.f32 %v1132, %v1515
        %v1532 = vadd.f32 %v1133, %v1516
        %v1533 = vadd.f32 %v1134, %v1517
        %v1534 = vadd.f32 %v1135, %v1518
        %v1535 = vadd.f32 %v1136, %v1519
        %v1536 = vadd.f32 %v1137, %v1520
        %v1537 = vadd.f32 %v1138, %v1521
        %v1538 = vadd.f32 %v1139, %v1522
        %v1539 = vadd.f32 %v1140, %v1523
        %s1540 = sld [smem:[#allocation7 + $0x19]]
        %v1541 = vstv %s1540
        %v1542 = vmul.f32 %v1142, %v1541
        %v1543 = vmul.f32 %v1143, %v1541
        %v1544 = vmul.f32 %v1144, %v1541
        %v1545 = vmul.f32 %v1145, %v1541
        %v1546 = vmul.f32 %v1146, %v1541
        %v1547 = vmul.f32 %v1147, %v1541
        %v1548 = vmul.f32 %v1148, %v1541
        %v1549 = vmul.f32 %v1149, %v1541
        %v1550 = vmul.f32 %v1150, %v1541
        %v1551 = vmul.f32 %v1151, %v1541
        %v1552 = vmul.f32 %v1152, %v1541
        %v1553 = vmul.f32 %v1153, %v1541
        %v1554 = vmul.f32 %v1154, %v1541
        %v1555 = vmul.f32 %v1155, %v1541
        %v1556 = vmul.f32 %v1156, %v1541
        %v1557 = vmul.f32 %v1157, %v1541
        %v1558 = vadd.f32 %v1524, %v1542
        %v1559 = vadd.f32 %v1525, %v1543
        %v1560 = vadd.f32 %v1526, %v1544
        %v1561 = vadd.f32 %v1527, %v1545
        %v1562 = vadd.f32 %v1528, %v1546
        %v1563 = vadd.f32 %v1529, %v1547
        %v1564 = vadd.f32 %v1530, %v1548
        %v1565 = vadd.f32 %v1531, %v1549
        %v1566 = vadd.f32 %v1532, %v1550
        %v1567 = vadd.f32 %v1533, %v1551
        %v1568 = vadd.f32 %v1534, %v1552
        %v1569 = vadd.f32 %v1535, %v1553
        %v1570 = vadd.f32 %v1536, %v1554
        %v1571 = vadd.f32 %v1537, %v1555
        %v1572 = vadd.f32 %v1538, %v1556
        %v1573 = vadd.f32 %v1539, %v1557
        %s1574 = sld [smem:[#allocation7 + $0x1a]]
        %v1575 = vstv %s1574
        %v1576 = vmul.f32 %v1286, %v1575
        %v1577 = vmul.f32 %v1287, %v1575
        %v1578 = vmul.f32 %v1288, %v1575
        %v1579 = vmul.f32 %v1289, %v1575
        %v1580 = vmul.f32 %v1290, %v1575
        %v1581 = vmul.f32 %v1291, %v1575
        %v1582 = vmul.f32 %v1292, %v1575
        %v1583 = vmul.f32 %v1293, %v1575
        %v1584 = vmul.f32 %v1294, %v1575
        %v1585 = vmul.f32 %v1295, %v1575
        %v1586 = vmul.f32 %v1296, %v1575
        %v1587 = vmul.f32 %v1297, %v1575
        %v1588 = vmul.f32 %v1298, %v1575
        %v1589 = vmul.f32 %v1299, %v1575
        %v1590 = vmul.f32 %v1300, %v1575
        %v1591 = vmul.f32 %v1301, %v1575
        %v1592 = vadd.f32 %v1558, %v1576
        %v1593 = vadd.f32 %v1559, %v1577
        %v1594 = vadd.f32 %v1560, %v1578
        %v1595 = vadd.f32 %v1561, %v1579
        %v1596 = vadd.f32 %v1562, %v1580
        %v1597 = vadd.f32 %v1563, %v1581
        %v1598 = vadd.f32 %v1564, %v1582
        %v1599 = vadd.f32 %v1565, %v1583
        %v1600 = vadd.f32 %v1566, %v1584
        %v1601 = vadd.f32 %v1567, %v1585
        %v1602 = vadd.f32 %v1568, %v1586
        %v1603 = vadd.f32 %v1569, %v1587
        %v1604 = vadd.f32 %v1570, %v1588
        %v1605 = vadd.f32 %v1571, %v1589
        %v1606 = vadd.f32 %v1572, %v1590
        %v1607 = vadd.f32 %v1573, %v1591
        %vm1624 = vcmask 1040384
        %v1625 = vrot.slane %v1388, 7
        %v1626 = vrot.slane %v1389, 7
        %v1627 = vsel %vm1624, %v1625, %v1626
        %v1628 = vrot.slane %v1390, 7
        %v1629 = vsel %vm1624, %v1626, %v1628
        %v1630 = vrot.slane %v1391, 7
        %v1631 = vsel %vm1624, %v1628, %v1630
        %v1632 = vrot.slane %v1392, 7
        %v1633 = vsel %vm1624, %v1630, %v1632
        %v1634 = vrot.slane %v1393, 7
        %v1635 = vsel %vm1624, %v1632, %v1634
        %v1636 = vrot.slane %v1394, 7
        %v1637 = vsel %vm1624, %v1634, %v1636
        %v1638 = vrot.slane %v1395, 7
        %v1639 = vsel %vm1624, %v1636, %v1638
        %v1640 = vrot.slane %v1396, 7
        %v1641 = vsel %vm1624, %v1638, %v1640
        %v1642 = vrot.slane %v1397, 7
        %v1643 = vsel %vm1624, %v1640, %v1642
        %v1644 = vrot.slane %v1398, 7
        %v1645 = vsel %vm1624, %v1642, %v1644
        %v1646 = vrot.slane %v1399, 7
        %v1647 = vsel %vm1624, %v1644, %v1646
        %v1648 = vrot.slane %v1400, 7
        %v1649 = vsel %vm1624, %v1646, %v1648
        %v1650 = vrot.slane %v1401, 7
        %v1651 = vsel %vm1624, %v1648, %v1650
        %v1652 = vrot.slane %v1402, 7
        %v1653 = vsel %vm1624, %v1650, %v1652
        %v1654 = vrot.slane %v1403, 7
        %v1655 = vsel %vm1624, %v1652, %v1654
        %v1672 = vsel %vm1624, 0.0, %v1625
        %v1673 = vadd.f32 %v1490, %v1672
        %v1674 = vadd.f32 %v1491, %v1627
        %v1675 = vadd.f32 %v1492, %v1629
        %v1676 = vadd.f32 %v1493, %v1631
        %v1677 = vadd.f32 %v1494, %v1633
        %v1678 = vadd.f32 %v1495, %v1635
        %v1679 = vadd.f32 %v1496, %v1637
        %v1680 = vadd.f32 %v1497, %v1639
        %v1681 = vadd.f32 %v1498, %v1641
        %v1682 = vadd.f32 %v1499, %v1643
        %v1683 = vadd.f32 %v1500, %v1645
        %v1684 = vadd.f32 %v1501, %v1647
        %v1685 = vadd.f32 %v1502, %v1649
        %v1686 = vadd.f32 %v1503, %v1651
        %v1687 = vadd.f32 %v1504, %v1653
        %v1688 = vadd.f32 %v1505, %v1655
        %vm1705 = vcmask 1046528
        %v1706 = vrot.slane %v1592, 1
        %v1707 = vrot.slane %v1593, 1
        %v1708 = vsel %vm1705, %v1706, %v1707
        %v1709 = vrot.slane %v1594, 1
        %v1710 = vsel %vm1705, %v1707, %v1709
        %v1711 = vrot.slane %v1595, 1
        %v1712 = vsel %vm1705, %v1709, %v1711
        %v1713 = vrot.slane %v1596, 1
        %v1714 = vsel %vm1705, %v1711, %v1713
        %v1715 = vrot.slane %v1597, 1
        %v1716 = vsel %vm1705, %v1713, %v1715
        %v1717 = vrot.slane %v1598, 1
        %v1718 = vsel %vm1705, %v1715, %v1717
        %v1719 = vrot.slane %v1599, 1
        %v1720 = vsel %vm1705, %v1717, %v1719
        %v1721 = vrot.slane %v1600, 1
        %v1722 = vsel %vm1705, %v1719, %v1721
        %v1723 = vrot.slane %v1601, 1
        %v1724 = vsel %vm1705, %v1721, %v1723
        %v1725 = vrot.slane %v1602, 1
        %v1726 = vsel %vm1705, %v1723, %v1725
        %v1727 = vrot.slane %v1603, 1
        %v1728 = vsel %vm1705, %v1725, %v1727
        %v1729 = vrot.slane %v1604, 1
        %v1730 = vsel %vm1705, %v1727, %v1729
        %v1731 = vrot.slane %v1605, 1
        %v1732 = vsel %vm1705, %v1729, %v1731
        %v1733 = vrot.slane %v1606, 1
        %v1734 = vsel %vm1705, %v1731, %v1733
        %v1735 = vrot.slane %v1607, 1
        %v1736 = vsel %vm1705, %v1733, %v1735
        %v1753 = vsel %vm1705, %v1735, 0.0
        %v1754 = vadd.f32 %v1673, %v1708
        %v1755 = vadd.f32 %v1674, %v1710
        %v1756 = vadd.f32 %v1675, %v1712
        %v1757 = vadd.f32 %v1676, %v1714
        %v1758 = vadd.f32 %v1677, %v1716
        %v1759 = vadd.f32 %v1678, %v1718
        %v1760 = vadd.f32 %v1679, %v1720
        %v1761 = vadd.f32 %v1680, %v1722
        %v1762 = vadd.f32 %v1681, %v1724
        %v1763 = vadd.f32 %v1682, %v1726
        %v1764 = vadd.f32 %v1683, %v1728
        %v1765 = vadd.f32 %v1684, %v1730
        %v1766 = vadd.f32 %v1685, %v1732
        %v1767 = vadd.f32 %v1686, %v1734
        %v1768 = vadd.f32 %v1687, %v1736
        %v1769 = vadd.f32 %v1688, %v1753
        %1770 = vst [vmem:[#allocation2] sm:$0xff] %v1754
        %1771 = vst [vmem:[#allocation2 + $0x8] sm:$0xff] %v1755
        %1772 = vst [vmem:[#allocation2 + $0x10] sm:$0xff] %v1756
        %1773 = vst [vmem:[#allocation2 + $0x18] sm:$0xff] %v1757
        %1774 = vst [vmem:[#allocation2 + $0x20] sm:$0xff] %v1758
        %1775 = vst [vmem:[#allocation2 + $0x28] sm:$0xff] %v1759
        %1776 = vst [vmem:[#allocation2 + $0x30] sm:$0xff] %v1760
        %1777 = vst [vmem:[#allocation2 + $0x38] sm:$0xff] %v1761
        %1778 = vst [vmem:[#allocation2 + $0x40] sm:$0xff] %v1762
        %1779 = vst [vmem:[#allocation2 + $0x48] sm:$0xff] %v1763
        %1780 = vst [vmem:[#allocation2 + $0x50] sm:$0xff] %v1764
        %1781 = vst [vmem:[#allocation2 + $0x58] sm:$0xff] %v1765
        %1782 = vst [vmem:[#allocation2 + $0x60] sm:$0xff] %v1766
        %1783 = vst [vmem:[#allocation2 + $0x68] sm:$0xff] %v1767
        %1784 = vst [vmem:[#allocation2 + $0x70] sm:$0xff] %v1768
        %1785 = vst [vmem:[#allocation2 + $0x78] sm:$0xff] %v1769
        %v1786 = vld [vmem:[#allocation2] ss:$4 sm:$0xff]
        %s1787 = scalar_lea.vmem [#allocation2], 32
        %v1788 = vld [vmem:[%s1787] ss:$4 sm:$0xff]
        %s1789 = scalar_lea.vmem [#allocation2], 64
        %v1790 = vld [vmem:[%s1789] ss:$4 sm:$0xff]
        %s1791 = scalar_lea.vmem [#allocation2], 96
        %v1792 = vld [vmem:[%s1791] ss:$4 sm:$0xff]
        %s1793 = scalar_lea.vmem [#allocation2], 1
        %v1794 = vld [vmem:[%s1793] ss:$4 sm:$0xff]
        %s1795 = scalar_lea.vmem [#allocation2], 33
        %v1796 = vld [vmem:[%s1795] ss:$4 sm:$0xff]
        %s1797 = scalar_lea.vmem [#allocation2], 65
        %v1798 = vld [vmem:[%s1797] ss:$4 sm:$0xff]
        %s1799 = scalar_lea.vmem [#allocation2], 97
        %v1800 = vld [vmem:[%s1799] ss:$4 sm:$0xff]
        %s1801 = scalar_lea.vmem [#allocation2], 2
        %v1802 = vld [vmem:[%s1801] ss:$4 sm:$0xff]
        %s1803 = scalar_lea.vmem [#allocation2], 34
        %v1804 = vld [vmem:[%s1803] ss:$4 sm:$0xff]
        %s1805 = scalar_lea.vmem [#allocation2], 66
        %v1806 = vld [vmem:[%s1805] ss:$4 sm:$0xff]
        %s1807 = scalar_lea.vmem [#allocation2], 98
        %v1808 = vld [vmem:[%s1807] ss:$4 sm:$0xff]
        %s1809 = scalar_lea.vmem [#allocation2], 3
        %v1810 = vld [vmem:[%s1809] ss:$4 sm:$0xff]
        %s1811 = scalar_lea.vmem [#allocation2], 35
        %v1812 = vld [vmem:[%s1811] ss:$4 sm:$0xff]
        %s1813 = scalar_lea.vmem [#allocation2], 67
        %v1814 = vld [vmem:[%s1813] ss:$4 sm:$0xff]
        %s1815 = scalar_lea.vmem [#allocation2], 99
        %v1816 = vld [vmem:[%s1815] ss:$4 sm:$0xff]
        %v1817 = vmax.f32 %v1786, %v1794
        %v1818 = vmax.f32 %v1788, %v1796
        %v1819 = vmax.f32 %v1790, %v1798
        %v1820 = vmax.f32 %v1792, %v1800
        %v1821 = vmax.f32 %v1802, %v1810
        %v1822 = vmax.f32 %v1804, %v1812
        %v1823 = vmax.f32 %v1806, %v1814
        %v1824 = vmax.f32 %v1808, %v1816
        %v1825 = vmax.f32 %v1817, %v1821
        %v1826 = vmax.f32 %v1818, %v1822
        %v1827 = vmax.f32 %v1819, %v1823
        %v1828 = vmax.f32 %v1820, %v1824
        %v1829 = vlaneseq
        %v1830 = vand.u32 %v1829, 127
        %1835 = vrot.lane.b32.xlu0 %v1825, 127
        %v1836 = vpop.permute.xlu0 %1835
        %1837 = vrot.lane.b32.xlu0 %v1826, 127
        %v1838 = vpop.permute.xlu0 %1837
        %1839 = vrot.lane.b32.xlu0 %v1827, 127
        %v1840 = vpop.permute.xlu0 %1839
        %1841 = vrot.lane.b32.xlu0 %v1828, 127
        %v1842 = vpop.permute.xlu0 %1841
        %v1847 = vsel %vm351, %v1836, 0.0
        %v1848 = vsel %vm351, %v1838, 0.0
        %v1849 = vsel %vm351, %v1840, 0.0
        %v1850 = vsel %vm351, %v1842, 0.0
        %1851 = vrot.lane.b32.xlu0 %v1825, 1
        %v1852 = vpop.permute.xlu0 %1851
        %1853 = vrot.lane.b32.xlu0 %v1826, 1
        %v1854 = vpop.permute.xlu0 %1853
        %1855 = vrot.lane.b32.xlu0 %v1827, 1
        %v1856 = vpop.permute.xlu0 %1855
        %1857 = vrot.lane.b32.xlu0 %v1828, 1
        %v1858 = vpop.permute.xlu0 %1857
        %v1863 = vsel %vm286, 0.0, %v1852
        %v1864 = vsel %vm286, 0.0, %v1854
        %v1865 = vsel %vm286, 0.0, %v1856
        %v1866 = vsel %vm286, 0.0, %v1858
        %v1867 = vand.u32 %v1830, 1
        %vm1868 = vcmp.eq.s32.totalorder %v1867, 0
        %v1869 = vsel %vm1868, %v1847, %v1863
        %v1870 = vsel %vm1868, %v1848, %v1864
        %v1871 = vsel %vm1868, %v1849, %v1865
        %v1872 = vsel %vm1868, %v1850, %v1866
        %v1873 = vmax.f32 %v1825, %v1869
        %v1874 = vmax.f32 %v1826, %v1870
        %v1875 = vmax.f32 %v1827, %v1871
        %v1876 = vmax.f32 %v1828, %v1872
        %1881 = vrot.lane.b32.xlu0 %v1873, 126
        %v1882 = vpop.permute.xlu0 %1881
        %1883 = vrot.lane.b32.xlu0 %v1874, 126
        %v1884 = vpop.permute.xlu0 %1883
        %1885 = vrot.lane.b32.xlu0 %v1875, 126
        %v1886 = vpop.permute.xlu0 %1885
        %1887 = vrot.lane.b32.xlu0 %v1876, 126
        %v1888 = vpop.permute.xlu0 %1887
        %vm1893 = vcmask 1031168
        %v1894 = vsel %vm1893, %v1882, 0.0
        %v1895 = vsel %vm1893, %v1884, 0.0
        %v1896 = vsel %vm1893, %v1886, 0.0
        %v1897 = vsel %vm1893, %v1888, 0.0
        %1898 = vrot.lane.b32.xlu0 %v1873, 2
        %v1899 = vpop.permute.xlu0 %1898
        %1900 = vrot.lane.b32.xlu0 %v1874, 2
        %v1901 = vpop.permute.xlu0 %1900
        %1902 = vrot.lane.b32.xlu0 %v1875, 2
        %v1903 = vpop.permute.xlu0 %1902
        %1904 = vrot.lane.b32.xlu0 %v1876, 2
        %v1905 = vpop.permute.xlu0 %1904
        %vm1910 = vcmask 15360
        %v1911 = vsel %vm1910, 0.0, %v1899
        %v1912 = vsel %vm1910, 0.0, %v1901
        %v1913 = vsel %vm1910, 0.0, %v1903
        %v1914 = vsel %vm1910, 0.0, %v1905
        %v1915 = vand.u32 %v1830, 3
        %vm1916 = vcmp.lt.s32.totalorder %v1915, 2
        %v1917 = vsel %vm1916, %v1894, %v1911
        %v1918 = vsel %vm1916, %v1895, %v1912
        %v1919 = vsel %vm1916, %v1896, %v1913
        %v1920 = vsel %vm1916, %v1897, %v1914
        %v1921 = vmax.f32 %v1873, %v1917
        %v1922 = vmax.f32 %v1874, %v1918
        %v1923 = vmax.f32 %v1875, %v1919
        %v1924 = vmax.f32 %v1876, %v1920
        %s1925 = sld [smem:[#allocation3]]
        %v1926 = vstv %s1925
        %v1927 = vadd.f32 %v1921, %v1926
        %v1928 = vadd.f32 %v1922, %v1926
        %v1929 = vadd.f32 %v1923, %v1926
        %v1930 = vadd.f32 %v1924, %v1926
        %v1931 = vmax.f32 %v1927, 0.0
        %v1932 = vmax.f32 %v1928, 0.0
        %v1933 = vmax.f32 %v1929, 0.0
        %v1934 = vmax.f32 %v1930, 0.0
        %1935 = vst [vmem:[%s205] sm:$0xff] %v1931
        %1936 = vst [vmem:[%s205 + $0x8] sm:$0xff] %v1932
        %1937 = vst [vmem:[%s205 + $0x10] sm:$0xff] %v1933
        %1938 = vst [vmem:[%s205 + $0x18] sm:$0xff] %v1934
        %p1939 = scmp.lt.s32.totalorder %s19, 1
        %s1940 = scalar_select %p1939, %s19, 1
        %s1941 = smul.addr %s1940, 4
        %s1942 = smul.addr %s1941, 8
        %s1943 = scalar_lea.vmem %s3, %s1942
        // Predicated region
        $region41: #{cae_forward.2} parent=31 // pred_check
          %p1944 = pneg %p105
        $region42: #{cae_forward.2} parent=31 // pred_check_branch
          %1946 = sbr.rel (%p1944) target = $region44
        $region43: #{cae_forward.2} parent=31 // pred_region
          _
        $region44: #{cae_forward.2} parent=31 // pred_fallthru
          _
      $region32: #{cae_forward.2} parent=5 // pred_fallthru
        _
      %p1947 = scmp.le.s32.totalorder 2, %s14
      // Predicated region
      $region45: #{cae_forward.2} parent=5 // pred_check
        %p1948 = pneg %p1947
      $region46: #{cae_forward.2} parent=5 // pred_check_branch
        %1950 = sbr.rel (%p1948) target = $region48
      $region47: #{cae_forward.2} parent=5 // pred_region
        %s1951 = ssub.s32 %s14, 2
        // Predicated region
        $region49: #{cae_forward.2} parent=47 // pred_check
          %p1952 = pneg %p111
        $region50: #{cae_forward.2} parent=47 // pred_check_branch
          %1954 = sbr.rel (%p1952) target = $region52
        $region51: #{cae_forward.2} parent=47 // pred_region
          %p1955 = scmp.lt.s32.totalorder %s20, 1
          %s1956 = scalar_select %p1955, %s20, 1
          %s1957 = smul.addr %s1956, 4
          %s1958 = smul.addr %s1957, 8
          %s1959 = scalar_lea.vmem %s3, %s1958
        $region52: #{cae_forward.2} parent=47 // pred_fallthru
          _
      $region48: #{cae_forward.2} parent=5 // pred_fallthru
        _
    $region6: #{cae_forward.2} parent=1 // loop_footer
      %s18 = sadd.s32 1, %s14
    $region7: #{cae_forward.2} parent=1 // loop_footer_branch
      %13 = sbr.rel target = $region3
    $region8: #{cae_forward.2} parent=1 // loop_exit
      _
    %1960 = vsyncpa [#allocation5], 1
    %s1961 = scalar_lea.sflag [#allocation5], 1
    %1962 = vsyncpa %s1961, 1
    %1963 = vsyncpa [#allocation6], 1
    %s1964 = scalar_lea.sflag [#allocation6], 1
    %1965 = vsyncpa %s1964, 1

</llo_original>
